<compile_context>
chip_gen: v5e
topology: v5e:2x2
jax: 0.10.0
libtpu: 0.0.40
codegen_flags: <defaults>
</compile_context>

<pallas_src>
from functools import partial

import jax
import jax.numpy as jnp
from jax import lax
from jax.experimental import pallas as pl
from jax.experimental.pallas import tpu as pltpu


# --------------------------------- fused kernel -----------------------------------
def _sample_attn_kernel(xin_ref, wqkv_ref, bqkv_ref, wcoord_ref, bcoord_ref,
                        wproj_ref, bproj_ref, o_ref, wb_ref, acc_ref,
                        *, H, W, heads, P, D, Bt):
    """Fused SampleAttention forward for a block of Bt batch elements.

    xin_ref   : (Bt, N, Cpad) f32   tokens with [ref_x, ref_y, 0-pad] appended
    wqkv_ref  : (Cpad, 3*AHD) bf16  [q*scale | head-interleaved k|v]
    bqkv_ref  : (1, 3*AHD)    f32
    wcoord_ref: (Cpad, 2*heads*P) f32  pixel-coordinate projection (head-major,
                                       per head [x_p0..x_p{P-1}, y_p0..y_p{P-1}])
    bcoord_ref: (1, 2*heads*P) f32
    wproj_ref : (AHD, C) bf16,  bproj_ref: (1, C) f32
    o_ref     : (Bt, N, C) f32
    wb_ref    : (P*N, HW) bf16 scratch  (dense bilinear tent weights)
    acc_ref   : (Bt*N, AHD) f32 scratch (per-head attended values, head-major lanes)
    """
    N = H * W
    HW = H * W
    AHD = heads * D
    TP = 2 * P  # coordinate columns per head

    x_f32 = xin_ref[...].reshape(Bt * N, xin_ref.shape[2])          # (Bt*N, Cpad)
    x_bf = x_f32.astype(jnp.bfloat16)

    # (1) wide bf16 MXU matmul -> [pre-scaled q | head-interleaved k|v], f32 accum.
    qkv = (jnp.dot(x_bf, wqkv_ref[...], preferred_element_type=jnp.float32)
           + bqkv_ref[...])                                          # (Bt*N, 3*AHD)
    # (2) tiny f32 matmul -> sampling *pixel* coordinates (kept f32 for accuracy).
    coords = (jnp.dot(x_f32, wcoord_ref[...], preferred_element_type=jnp.float32)
              + bcoord_ref[...])                                     # (Bt*N, 2*heads*P)

    # Flattened pixel grid (j = y*W + x), hoisted out of all loops.
    jf = lax.broadcasted_iota(jnp.int32, (1, HW), 1).astype(jnp.float32)
    pyj = jnp.floor(jf / float(W))                                   # (1, HW) pixel row
    pxj = jf - pyj * float(W)                                        # (1, HW) pixel col

    for b in range(Bt):                                              # Bt is small: unroll
        r0 = b * N
        q_b = qkv[r0:r0 + N, :AHD]                                   # (N, AHD) f32, pre-scaled
        kv_b = qkv[r0:r0 + N, AHD:].astype(jnp.bfloat16)             # (HW, 2*AHD) [k_h|v_h]
        co_b = coords[r0:r0 + N, :]                                  # (N, 2*heads*P)
        # q replicated point-major once per batch element (sublane copy).
        q_t = jnp.concatenate([q_b] * P, axis=0)                     # (P*N, AHD)

        lg_cols, sv_list = [], []
        for h in range(heads):                                       # heads is tiny: unroll
            # Bilinear tent weights for all P points, written straight into scratch
            # (no concat materialization; stores are sublane-aligned).
            for p in range(P):
                xs = co_b[:, h * TP + p: h * TP + p + 1]             # (N, 1) pixel x
                ys = co_b[:, h * TP + P + p: h * TP + P + p + 1]     # (N, 1) pixel y
                wx = jnp.maximum(0.0, 1.0 - jnp.abs(xs - pxj))       # (N, HW)
                wy = jnp.maximum(0.0, 1.0 - jnp.abs(ys - pyj))
                wb_ref[p * N:(p + 1) * N, :] = (wx * wy).astype(jnp.bfloat16)

            # One bf16 MXU matmul samples k and v for all P points of this head.
            kv_h = kv_b[:, 2 * D * h: 2 * D * (h + 1)]               # (HW, 2D)
            skv = jnp.dot(wb_ref[...], kv_h,
                          preferred_element_type=jnp.float32)        # (P*N, 2D) f32
            # Logits for all P points of this head in one lane reduce.
            lg_cols.append(jnp.sum(q_t[:, h * D:(h + 1) * D] * skv[:, :D],
                                   axis=1, keepdims=True))           # (P*N, 1)
            sv_list.append(skv[:, D:])                               # (P*N, D)

        # Softmax over the P points, packed across heads: ONE max / exp / sum / recip.
        lg = jnp.concatenate(lg_cols, axis=1)                        # (P*N, heads)
        m = lg[0:N, :]
        for p in range(1, P):
            m = jnp.maximum(m, lg[p * N:(p + 1) * N, :])             # (N, heads)
        e = jnp.exp(lg - jnp.concatenate([m] * P, axis=0))           # (P*N, heads)
        den = e[0:N, :]
        for p in range(1, P):
            den = den + e[p * N:(p + 1) * N, :]
        inv = pl.reciprocal(den, approx=True)                        # (N, heads), den >= 1
        a = e * jnp.concatenate([inv] * P, axis=0)                   # (P*N, heads)

        # Weighted sum of sampled v; accumulate into the (Bt*N, AHD) scratch (no concat).
        for h in range(heads):
            t = a[:, h:h + 1] * sv_list[h]                           # (P*N, D)
            out_h = t[0:N, :]
            for p in range(1, P):
                out_h = out_h + t[p * N:(p + 1) * N, :]
            acc_ref[r0:r0 + N, h * D:(h + 1) * D] = out_h            # (N, D)

    # Fused output projection on all Bt*N rows at once (bf16 MXU, f32 accumulation).
    out = (jnp.dot(acc_ref[...].astype(jnp.bfloat16), wproj_ref[...],
                   preferred_element_type=jnp.float32) + bproj_ref[...])   # (Bt*N, C)
    o_ref[...] = out.reshape(Bt, N, o_ref.shape[2]).astype(o_ref.dtype)


# --------------------------- wrapper-side weight fusion ----------------------------
def _build_fused_weights(params, H, W, heads, P, D, scale, Cpad):
    """Fold qkv + sampling_offsets + the grid_sample(align_corners=False) coordinate
    transform into (a) one bf16 (Cpad, 3*AHD) matrix and (b) one f32 (Cpad, 2*heads*P)
    coordinate matrix, both applied to [x | ref_x | ref_y | 0-pad].  Param-sized work."""
    AHD = heads * D
    C = params["w_qkv"].shape[0]
    w_qkv = params["w_qkv"].astype(jnp.float32)           # (C, 3*AHD)
    b_qkv = params["b_qkv"].astype(jnp.float32)           # (3*AHD,)
    w_off = params["w_off"].astype(jnp.float32)           # (AHD, 2*heads*P)
    b_off = params["b_off"].astype(jnp.float32)           # (2*heads*P,)

    w_q, w_k, w_v = w_qkv[:, :AHD], w_qkv[:, AHD:2 * AHD], w_qkv[:, 2 * AHD:]
    b_q, b_k, b_v = b_qkv[:AHD], b_qkv[AHD:2 * AHD], b_qkv[2 * AHD:]

    # Head-interleaved [k_h | v_h] columns -> one contiguous (HW, 2D) RHS slice per head.
    w_kv = jnp.concatenate(
        [jnp.concatenate([w_k[:, h * D:(h + 1) * D], w_v[:, h * D:(h + 1) * D]], axis=1)
         for h in range(heads)], axis=1)                  # (C, 2*AHD)
    b_kv = jnp.concatenate(
        [jnp.concatenate([b_k[h * D:(h + 1) * D], b_v[h * D:(h + 1) * D]])
         for h in range(heads)])                          # (2*AHD,)

    # --- bf16 main projection: [q*scale | kv]; ref / pad rows are zero ---
    w_main = jnp.concatenate([w_q * scale, w_kv], axis=1)                       # (C, 3*AHD)
    w_main = jnp.concatenate(
        [w_main, jnp.zeros((Cpad - C, 3 * AHD), jnp.float32)], axis=0)          # (Cpad, 3*AHD)
    b_main = jnp.concatenate([b_q * scale, b_kv]).reshape(1, -1)                # (1, 3*AHD)

    # --- f32 coordinate projection (pixel coords, grid_sample transform folded) ---
    # sampling_offsets uses the UNSCALED q (matches PyTorch); offsets normalized by
    # [W, H]; align_corners=False:  pix_x = ref_x*W + off_x - 0.5 (y analogously).
    n_co = 2 * heads * P
    w_pix = w_q @ w_off                                   # (C, n_co), columns = (h, p, xy)
    b_pix = b_q @ w_off + b_off - 0.5                     # (n_co,)
    # Reorder columns to (h, xy, p): per-head contiguous [x_p0..x_p{P-1}, y_p0..y_p{P-1}].
    perm = [(h * P + p) * 2 + g for h in range(heads) for g in (0, 1) for p in range(P)]
    w_pix = w_pix[:, perm]
    b_pix = b_pix[jnp.array(perm, dtype=jnp.int32)]
    is_x = (jnp.arange(n_co) % (2 * P)) < P               # within each head block: first P are x
    ref_rows = jnp.stack([jnp.where(is_x, float(W), 0.0),
                          jnp.where(is_x, 0.0, float(H))], axis=0)              # (2, n_co)
    w_coord = jnp.concatenate(
        [w_pix, ref_rows, jnp.zeros((Cpad - C - 2, n_co), jnp.float32)], axis=0)  # (Cpad, n_co)
    b_coord = b_pix.reshape(1, -1)

    return w_main.astype(jnp.bfloat16), b_main, w_coord, b_coord


def _pick_block_batch(B, N, max_rows=2048):
    """Batch elements per grid step: amortize per-step overhead while keeping >= 2
    'parallel' grid steps (v7x megacore) and a bounded row count."""
    if B <= 2:
        return 1
    best = 1
    for bt in range(1, B + 1):
        if B % bt == 0 and (B // bt) >= 2 and bt * N <= max_rows:
            best = bt
    return best


# ------------------------------------ forward --------------------------------------
@partial(jax.jit, static_argnums=(2, 3, 5, 6))
def sample_attention_forward(x, reference_points, H, W, params, num_heads, n_points):
    """Mirrors SampleAttention.forward (dropouts are p=0.0 -> identity)."""
    B, N, C = x.shape
    AHD = params["w_qkv"].shape[1] // 3
    D = AHD // num_heads
    scale = D ** (-0.5)
    assert N == H * W, "token count must equal H*W (flattened feature map)"
    Cpad = ((C + 2 + 7) // 8) * 8                         # pad contraction dim to mult. of 8
    Bt = _pick_block_batch(B, N)
    n_co = 2 * num_heads * n_points

    w_main, b_main, w_coord, b_coord = _build_fused_weights(
        params, H, W, num_heads, n_points, D, scale, Cpad)
    w_proj = params["w_proj"].astype(jnp.bfloat16)        # (AHD, C)
    b_proj = params["b_proj"].astype(jnp.float32).reshape(1, C)

    # Reference points ride along as two extra lane-dense feature columns of x.
    pad = Cpad - C - 2
    xin = jnp.concatenate([x.astype(jnp.float32),
                           reference_points.astype(jnp.float32),
                           jnp.zeros((B, N, pad), jnp.float32)], axis=-1)       # (B, N, Cpad)

    kernel = partial(_sample_attn_kernel, H=H, W=W, heads=num_heads, P=n_points,
                     D=D, Bt=Bt)
    return pl.pallas_call(
        kernel,
        out_shape=jax.ShapeDtypeStruct((B, N, C), jnp.float32),
        grid_spec=pltpu.PrefetchScalarGridSpec(
            num_scalar_prefetch=0,
            grid=(B // Bt,),
            in_specs=[
                pl.BlockSpec((Bt, N, Cpad), lambda g: (g, 0, 0)),
                pl.BlockSpec((Cpad, 3 * AHD), lambda g: (0, 0)),
                pl.BlockSpec((1, 3 * AHD), lambda g: (0, 0)),
                pl.BlockSpec((Cpad, n_co), lambda g: (0, 0)),
                pl.BlockSpec((1, n_co), lambda g: (0, 0)),
                pl.BlockSpec((AHD, C), lambda g: (0, 0)),
                pl.BlockSpec((1, C), lambda g: (0, 0)),
            ],
            out_specs=pl.BlockSpec((Bt, N, C), lambda g: (g, 0, 0)),
            scratch_shapes=[pltpu.VMEM((n_points * N, H * W), jnp.bfloat16),
                            pltpu.VMEM((Bt * N, AHD), jnp.float32)],
        ),
        compiler_params=pltpu.CompilerParams(
            dimension_semantics=("parallel",),
            vmem_limit_bytes=32 * 1024 * 1024),
    )(xin, w_main, b_main, w_coord, b_coord, w_proj, b_proj)


# ----------------------------- pure-JAX reference (check) ---------------------------
def _reference_forward(x, reference_points, H, W, params, num_heads, n_points):
    B, N, C = x.shape
    AHD = params["w_qkv"].shape[1] // 3
    D = AHD // num_heads
    scale = D ** (-0.5)
    HW = H * W
    qkv = x @ params["w_qkv"] + params["b_qkv"]
    q, k, v = qkv[..., :AHD], qkv[..., AHD:2 * AHD], qkv[..., 2 * AHD:]
    off = (q @ params["w_off"] + params["b_off"]).reshape(B, N, num_heads, n_points, 2)
    loc = reference_points[:, :, None, None, :] + off / jnp.array([W, H], jnp.float32)
    pix = loc * jnp.array([W, H], jnp.float32) - 0.5                     # (..., (x, y))
    j = jnp.arange(HW, dtype=jnp.float32)
    pyj = jnp.floor(j / W)
    pxj = j - pyj * W
    wx = jnp.maximum(0.0, 1.0 - jnp.abs(pix[..., 0:1] - pxj))
    wy = jnp.maximum(0.0, 1.0 - jnp.abs(pix[..., 1:2] - pyj))
    wgt = wx * wy                                                        # (B,N,h,P,HW)
    kh = k.reshape(B, HW, num_heads, D)
    vh = v.reshape(B, HW, num_heads, D)
    sk = jnp.einsum('bnhpj,bjhd->bnhpd', wgt, kh)
    sv = jnp.einsum('bnhpj,bjhd->bnhpd', wgt, vh)
    qh = q.reshape(B, N, num_heads, D)
    attn = jax.nn.softmax(jnp.einsum('bnhd,bnhpd->bnhp', qh, sk) * scale, axis=-1)
    out = jnp.einsum('bnhp,bnhpd->bnhd', attn, sv).reshape(B, N, AHD)
    return out @ params["w_proj"] + params["b_proj"]


# -------------------------------------- main ----------------------------------------
if __name__ == "__main__":
    B, dim, num_heads, n_points = 2, 32, 4, 4
    H = W = 8
    N = H * W
    head_dim = dim // num_heads
    all_head_dim = head_dim * num_heads

    key = jax.random.PRNGKey(0)
    kx, k1, k2, k3, k4, k5 = jax.random.split(key, 6)

    x = jax.random.normal(kx, (B, N, dim), dtype=jnp.float32)
    params = dict(
        w_qkv=0.05 * jax.random.normal(k1, (dim, 3 * all_head_dim), jnp.float32),
        b_qkv=jnp.zeros((3 * all_head_dim,), jnp.float32),          # qkv_bias=False
        w_off=0.05 * jax.random.normal(k2, (all_head_dim, num_heads * n_points * 2),
                                       jnp.float32),
        b_off=0.10 * jax.random.normal(k3, (num_heads * n_points * 2,), jnp.float32),
        w_proj=0.05 * jax.random.normal(k4, (all_head_dim, dim), jnp.float32),
        b_proj=0.01 * jax.random.normal(k5, (dim,), jnp.float32),
    )

    # deform_inputs: reference points = normalized token centers (x, y) in [0, 1];
    # input_spatial_shapes = [H, W] (static Python ints folded into the weights).
    ys = (jnp.arange(H, dtype=jnp.float32) + 0.5) / H
    xs = (jnp.arange(W, dtype=jnp.float32) + 0.5) / W
    gy, gx = jnp.meshgrid(ys, xs, indexing="ij")
    ref = jnp.stack([gx.reshape(-1), gy.reshape(-1)], axis=-1)       # (N, 2) as (x, y)
    reference_points = jnp.broadcast_to(ref[None], (B, N, 2))

    out = sample_attention_forward(x, reference_points, H, W, params,
                                   num_heads, n_points)
    out = jax.block_until_ready(out)

    ref_out = _reference_forward(x, reference_points, H, W, params, num_heads, n_points)
    assert out.shape == (B, N, dim)
    assert bool(jnp.all(jnp.isfinite(out)))
    max_err = float(jnp.max(jnp.abs(out - ref_out)))
    assert max_err < 5e-2, f"mismatch vs reference: max abs err = {max_err}"
    print("KERNEL_OK")
</pallas_src>

<mosaic_0001>
module attributes {stable_mosaic.version = 11 : i64} {
  func.func @_sample_attn_kernel(%arg0: i32, %arg1: memref<1x64x40xf32, #tpu.memory_space<vmem>>, %arg2: memref<40x96xbf16, #tpu.memory_space<vmem>>, %arg3: memref<1x96xf32, #tpu.memory_space<vmem>>, %arg4: memref<40x32xf32, #tpu.memory_space<vmem>>, %arg5: memref<1x32xf32, #tpu.memory_space<vmem>>, %arg6: memref<32x32xbf16, #tpu.memory_space<vmem>>, %arg7: memref<1x32xf32, #tpu.memory_space<vmem>>, %arg8: memref<1x64x32xf32, #tpu.memory_space<vmem>>, %arg9: memref<256x64xbf16, #tpu.memory_space<vmem>>, %arg10: memref<64x32xf32, #tpu.memory_space<vmem>>) attributes {dimension_semantics = [#tpu.dimension_semantics<parallel>], iteration_bounds = array<i64: 2>, scalar_prefetch = 0 : i64, scratch_operands = 2 : i64, tpu.core_type = #tpu.core_type<tc>, window_params = [{transform_indices = @transform_0, window_bounds = array<i64: 1, 64, 40>}, {pipeline_mode = #tpu.pipeline_mode<synchronous>, transform_indices = @transform_1, window_bounds = array<i64: 40, 96>}, {pipeline_mode = #tpu.pipeline_mode<synchronous>, transform_indices = @transform_2, window_bounds = array<i64: 1, 96>}, {pipeline_mode = #tpu.pipeline_mode<synchronous>, transform_indices = @transform_3, window_bounds = array<i64: 40, 32>}, {pipeline_mode = #tpu.pipeline_mode<synchronous>, transform_indices = @transform_4, window_bounds = array<i64: 1, 32>}, {pipeline_mode = #tpu.pipeline_mode<synchronous>, transform_indices = @transform_5, window_bounds = array<i64: 32, 32>}, {pipeline_mode = #tpu.pipeline_mode<synchronous>, transform_indices = @transform_6, window_bounds = array<i64: 1, 32>}, {transform_indices = @transform_7, window_bounds = array<i64: 1, 64, 32>}]} {
    %c0 = arith.constant 0 : index
    %c0_0 = arith.constant 0 : index
    %c0_1 = arith.constant 0 : index
    %0 = vector.load %arg1[%c0, %c0_0, %c0_1] : memref<1x64x40xf32, #tpu.memory_space<vmem>>, vector<1x64x40xf32>
    %1 = vector.shape_cast %0 : vector<1x64x40xf32> to vector<64x40xf32>
    %2 = arith.truncf %1 : vector<64x40xf32> to vector<64x40xbf16>
    %c0_2 = arith.constant 0 : index
    %c0_3 = arith.constant 0 : index
    %3 = vector.load %arg2[%c0_2, %c0_3] : memref<40x96xbf16, #tpu.memory_space<vmem>>, vector<40x96xbf16>
    %cst = arith.constant dense<0.000000e+00> : vector<64x96xf32>
    %4 = tpu.matmul %2, %3, %cst {dimension_numbers = #tpu.dot_dimension_numbers<[1], [0], [0], [1], [0, 0, 1, 1], [], []>} : vector<64x40xbf16>, vector<40x96xbf16>, vector<64x96xf32> -> vector<64x96xf32>
    %c0_4 = arith.constant 0 : index
    %c0_5 = arith.constant 0 : index
    %5 = vector.load %arg3[%c0_4, %c0_5] : memref<1x96xf32, #tpu.memory_space<vmem>>, vector<1x96xf32>
    %6 = vector.broadcast %5 : vector<1x96xf32> to vector<64x96xf32>
    %7 = arith.addf %4, %6 : vector<64x96xf32>
    %c0_6 = arith.constant 0 : index
    %c0_7 = arith.constant 0 : index
    %8 = vector.load %arg4[%c0_6, %c0_7] : memref<40x32xf32, #tpu.memory_space<vmem>>, vector<40x32xf32>
    %cst_8 = arith.constant dense<0.000000e+00> : vector<64x32xf32>
    %9 = tpu.matmul %1, %8, %cst_8 {dimension_numbers = #tpu.dot_dimension_numbers<[1], [0], [0], [1], [0, 0, 1, 1], [], []>} : vector<64x40xf32>, vector<40x32xf32>, vector<64x32xf32> -> vector<64x32xf32>
    %c0_9 = arith.constant 0 : index
    %c0_10 = arith.constant 0 : index
    %10 = vector.load %arg5[%c0_9, %c0_10] : memref<1x32xf32, #tpu.memory_space<vmem>>, vector<1x32xf32>
    %11 = vector.broadcast %10 : vector<1x32xf32> to vector<64x32xf32>
    %12 = arith.addf %9, %11 : vector<64x32xf32>
    %13 = tpu.iota {dimensions = array<i32: 1>} : vector<1x64xi32>
    %14 = arith.sitofp %13 : vector<1x64xi32> to vector<1x64xf32>
    %cst_11 = arith.constant 8.000000e+00 : f32
    %15 = vector.broadcast %cst_11 : f32 to vector<1x64xf32>
    %16 = arith.divf %14, %15 : vector<1x64xf32>
    %17 = math.floor %16 : vector<1x64xf32>
    %cst_12 = arith.constant 8.000000e+00 : f32
    %18 = vector.broadcast %cst_12 : f32 to vector<1x64xf32>
    %19 = arith.mulf %17, %18 : vector<1x64xf32>
    %20 = arith.subf %14, %19 : vector<1x64xf32>
    %21 = vector.extract_strided_slice %7 {offsets = [0, 0], sizes = [64, 32], strides = [1, 1]} : vector<64x96xf32> to vector<64x32xf32>
    %22 = vector.extract_strided_slice %7 {offsets = [0, 32], sizes = [64, 64], strides = [1, 1]} : vector<64x96xf32> to vector<64x64xf32>
    %23 = arith.truncf %22 : vector<64x64xf32> to vector<64x64xbf16>
    %24 = tpu.concatenate %21, %21, %21, %21 in 0 : vector<64x32xf32>, vector<64x32xf32>, vector<64x32xf32>, vector<64x32xf32> -> vector<256x32xf32>
    %25 = vector.extract_strided_slice %12 {offsets = [0, 0], sizes = [64, 1], strides = [1, 1]} : vector<64x32xf32> to vector<64x1xf32>
    %26 = vector.extract_strided_slice %12 {offsets = [0, 4], sizes = [64, 1], strides = [1, 1]} : vector<64x32xf32> to vector<64x1xf32>
    %27 = vector.broadcast %25 : vector<64x1xf32> to vector<64x64xf32>
    %28 = vector.broadcast %20 : vector<1x64xf32> to vector<64x64xf32>
    %29 = arith.subf %27, %28 : vector<64x64xf32>
    %30 = math.absf %29 : vector<64x64xf32>
    %cst_13 = arith.constant 1.000000e+00 : f32
    %31 = vector.broadcast %cst_13 : f32 to vector<64x64xf32>
    %32 = arith.subf %31, %30 : vector<64x64xf32>
    %cst_14 = arith.constant 0.000000e+00 : f32
    %33 = vector.broadcast %cst_14 : f32 to vector<64x64xf32>
    %34 = arith.maximumf %33, %32 : vector<64x64xf32>
    %35 = vector.broadcast %26 : vector<64x1xf32> to vector<64x64xf32>
    %36 = vector.broadcast %17 : vector<1x64xf32> to vector<64x64xf32>
    %37 = arith.subf %35, %36 : vector<64x64xf32>
    %38 = math.absf %37 : vector<64x64xf32>
    %cst_15 = arith.constant 1.000000e+00 : f32
    %39 = vector.broadcast %cst_15 : f32 to vector<64x64xf32>
    %40 = arith.subf %39, %38 : vector<64x64xf32>
    %cst_16 = arith.constant 0.000000e+00 : f32
    %41 = vector.broadcast %cst_16 : f32 to vector<64x64xf32>
    %42 = arith.maximumf %41, %40 : vector<64x64xf32>
    %43 = arith.mulf %34, %42 : vector<64x64xf32>
    %44 = arith.truncf %43 : vector<64x64xf32> to vector<64x64xbf16>
    %c0_17 = arith.constant 0 : index
    %c0_18 = arith.constant 0 : index
    %45 = vector.load %arg9[%c0_17, %c0_18] : memref<256x64xbf16, #tpu.memory_space<vmem>>, vector<64x64xbf16>
    tpu.vector_store %arg9[%c0_17, %c0_18], %44 {strides = array<i32>} : memref<256x64xbf16, #tpu.memory_space<vmem>>, vector<64x64xbf16>,
    %46 = vector.extract_strided_slice %12 {offsets = [0, 1], sizes = [64, 1], strides = [1, 1]} : vector<64x32xf32> to vector<64x1xf32>
    %47 = vector.extract_strided_slice %12 {offsets = [0, 5], sizes = [64, 1], strides = [1, 1]} : vector<64x32xf32> to vector<64x1xf32>
    %48 = vector.broadcast %46 : vector<64x1xf32> to vector<64x64xf32>
    %49 = vector.broadcast %20 : vector<1x64xf32> to vector<64x64xf32>
    %50 = arith.subf %48, %49 : vector<64x64xf32>
    %51 = math.absf %50 : vector<64x64xf32>
    %cst_19 = arith.constant 1.000000e+00 : f32
    %52 = vector.broadcast %cst_19 : f32 to vector<64x64xf32>
    %53 = arith.subf %52, %51 : vector<64x64xf32>
    %cst_20 = arith.constant 0.000000e+00 : f32
    %54 = vector.broadcast %cst_20 : f32 to vector<64x64xf32>
    %55 = arith.maximumf %54, %53 : vector<64x64xf32>
    %56 = vector.broadcast %47 : vector<64x1xf32> to vector<64x64xf32>
    %57 = vector.broadcast %17 : vector<1x64xf32> to vector<64x64xf32>
    %58 = arith.subf %56, %57 : vector<64x64xf32>
    %59 = math.absf %58 : vector<64x64xf32>
    %cst_21 = arith.constant 1.000000e+00 : f32
    %60 = vector.broadcast %cst_21 : f32 to vector<64x64xf32>
    %61 = arith.subf %60, %59 : vector<64x64xf32>
    %cst_22 = arith.constant 0.000000e+00 : f32
    %62 = vector.broadcast %cst_22 : f32 to vector<64x64xf32>
    %63 = arith.maximumf %62, %61 : vector<64x64xf32>
    %64 = arith.mulf %55, %63 : vector<64x64xf32>
    %65 = arith.truncf %64 : vector<64x64xf32> to vector<64x64xbf16>
    %c64 = arith.constant 64 : index
    %c0_23 = arith.constant 0 : index
    %66 = vector.load %arg9[%c64, %c0_23] : memref<256x64xbf16, #tpu.memory_space<vmem>>, vector<64x64xbf16>
    tpu.vector_store %arg9[%c64, %c0_23], %65 {strides = array<i32>} : memref<256x64xbf16, #tpu.memory_space<vmem>>, vector<64x64xbf16>,
    %67 = vector.extract_strided_slice %12 {offsets = [0, 2], sizes = [64, 1], strides = [1, 1]} : vector<64x32xf32> to vector<64x1xf32>
    %68 = vector.extract_strided_slice %12 {offsets = [0, 6], sizes = [64, 1], strides = [1, 1]} : vector<64x32xf32> to vector<64x1xf32>
    %69 = vector.broadcast %67 : vector<64x1xf32> to vector<64x64xf32>
    %70 = vector.broadcast %20 : vector<1x64xf32> to vector<64x64xf32>
    %71 = arith.subf %69, %70 : vector<64x64xf32>
    %72 = math.absf %71 : vector<64x64xf32>
    %cst_24 = arith.constant 1.000000e+00 : f32
    %73 = vector.broadcast %cst_24 : f32 to vector<64x64xf32>
    %74 = arith.subf %73, %72 : vector<64x64xf32>
    %cst_25 = arith.constant 0.000000e+00 : f32
    %75 = vector.broadcast %cst_25 : f32 to vector<64x64xf32>
    %76 = arith.maximumf %75, %74 : vector<64x64xf32>
    %77 = vector.broadcast %68 : vector<64x1xf32> to vector<64x64xf32>
    %78 = vector.broadcast %17 : vector<1x64xf32> to vector<64x64xf32>
    %79 = arith.subf %77, %78 : vector<64x64xf32>
    %80 = math.absf %79 : vector<64x64xf32>
    %cst_26 = arith.constant 1.000000e+00 : f32
    %81 = vector.broadcast %cst_26 : f32 to vector<64x64xf32>
    %82 = arith.subf %81, %80 : vector<64x64xf32>
    %cst_27 = arith.constant 0.000000e+00 : f32
    %83 = vector.broadcast %cst_27 : f32 to vector<64x64xf32>
    %84 = arith.maximumf %83, %82 : vector<64x64xf32>
    %85 = arith.mulf %76, %84 : vector<64x64xf32>
    %86 = arith.truncf %85 : vector<64x64xf32> to vector<64x64xbf16>
    %c128 = arith.constant 128 : index
    %c0_28 = arith.constant 0 : index
    %87 = vector.load %arg9[%c128, %c0_28] : memref<256x64xbf16, #tpu.memory_space<vmem>>, vector<64x64xbf16>
    tpu.vector_store %arg9[%c128, %c0_28], %86 {strides = array<i32>} : memref<256x64xbf16, #tpu.memory_space<vmem>>, vector<64x64xbf16>,
    %88 = vector.extract_strided_slice %12 {offsets = [0, 3], sizes = [64, 1], strides = [1, 1]} : vector<64x32xf32> to vector<64x1xf32>
    %89 = vector.extract_strided_slice %12 {offsets = [0, 7], sizes = [64, 1], strides = [1, 1]} : vector<64x32xf32> to vector<64x1xf32>
    %90 = vector.broadcast %88 : vector<64x1xf32> to vector<64x64xf32>
    %91 = vector.broadcast %20 : vector<1x64xf32> to vector<64x64xf32>
    %92 = arith.subf %90, %91 : vector<64x64xf32>
    %93 = math.absf %92 : vector<64x64xf32>
    %cst_29 = arith.constant 1.000000e+00 : f32
    %94 = vector.broadcast %cst_29 : f32 to vector<64x64xf32>
    %95 = arith.subf %94, %93 : vector<64x64xf32>
    %cst_30 = arith.constant 0.000000e+00 : f32
    %96 = vector.broadcast %cst_30 : f32 to vector<64x64xf32>
    %97 = arith.maximumf %96, %95 : vector<64x64xf32>
    %98 = vector.broadcast %89 : vector<64x1xf32> to vector<64x64xf32>
    %99 = vector.broadcast %17 : vector<1x64xf32> to vector<64x64xf32>
    %100 = arith.subf %98, %99 : vector<64x64xf32>
    %101 = math.absf %100 : vector<64x64xf32>
    %cst_31 = arith.constant 1.000000e+00 : f32
    %102 = vector.broadcast %cst_31 : f32 to vector<64x64xf32>
    %103 = arith.subf %102, %101 : vector<64x64xf32>
    %cst_32 = arith.constant 0.000000e+00 : f32
    %104 = vector.broadcast %cst_32 : f32 to vector<64x64xf32>
    %105 = arith.maximumf %104, %103 : vector<64x64xf32>
    %106 = arith.mulf %97, %105 : vector<64x64xf32>
    %107 = arith.truncf %106 : vector<64x64xf32> to vector<64x64xbf16>
    %c192 = arith.constant 192 : index
    %c0_33 = arith.constant 0 : index
    %108 = vector.load %arg9[%c192, %c0_33] : memref<256x64xbf16, #tpu.memory_space<vmem>>, vector<64x64xbf16>
    tpu.vector_store %arg9[%c192, %c0_33], %107 {strides = array<i32>} : memref<256x64xbf16, #tpu.memory_space<vmem>>, vector<64x64xbf16>,
    %109 = vector.extract_strided_slice %23 {offsets = [0, 0], sizes = [64, 16], strides = [1, 1]} : vector<64x64xbf16> to vector<64x16xbf16>
    %c0_34 = arith.constant 0 : index
    %c0_35 = arith.constant 0 : index
    %110 = vector.load %arg9[%c0_34, %c0_35] : memref<256x64xbf16, #tpu.memory_space<vmem>>, vector<256x64xbf16>
    %cst_36 = arith.constant dense<0.000000e+00> : vector<256x16xf32>
    %111 = tpu.matmul %110, %109, %cst_36 {dimension_numbers = #tpu.dot_dimension_numbers<[1], [0], [0], [1], [0, 0, 1, 1], [], []>} : vector<256x64xbf16>, vector<64x16xbf16>, vector<256x16xf32> -> vector<256x16xf32>
    %112 = vector.extract_strided_slice %24 {offsets = [0, 0], sizes = [256, 8], strides = [1, 1]} : vector<256x32xf32> to vector<256x8xf32>
    %113 = vector.extract_strided_slice %111 {offsets = [0, 0], sizes = [256, 8], strides = [1, 1]} : vector<256x16xf32> to vector<256x8xf32>
    %114 = arith.mulf %112, %113 : vector<256x8xf32>
    %cst_37 = arith.constant dense<0.000000e+00> : vector<256xf32>
    %115 = vector.multi_reduction <add>, %114, %cst_37 [1] : vector<256x8xf32> to vector<256xf32>
    %116 = vector.shape_cast %115 : vector<256xf32> to vector<256x1xf32>
    %117 = vector.extract_strided_slice %111 {offsets = [0, 8], sizes = [256, 8], strides = [1, 1]} : vector<256x16xf32> to vector<256x8xf32>
    %118 = vector.extract_strided_slice %12 {offsets = [0, 8], sizes = [64, 1], strides = [1, 1]} : vector<64x32xf32> to vector<64x1xf32>
    %119 = vector.extract_strided_slice %12 {offsets = [0, 12], sizes = [64, 1], strides = [1, 1]} : vector<64x32xf32> to vector<64x1xf32>
    %120 = vector.broadcast %118 : vector<64x1xf32> to vector<64x64xf32>
    %121 = vector.broadcast %20 : vector<1x64xf32> to vector<64x64xf32>
    %122 = arith.subf %120, %121 : vector<64x64xf32>
    %123 = math.absf %122 : vector<64x64xf32>
    %cst_38 = arith.constant 1.000000e+00 : f32
    %124 = vector.broadcast %cst_38 : f32 to vector<64x64xf32>
    %125 = arith.subf %124, %123 : vector<64x64xf32>
    %cst_39 = arith.constant 0.000000e+00 : f32
    %126 = vector.broadcast %cst_39 : f32 to vector<64x64xf32>
    %127 = arith.maximumf %126, %125 : vector<64x64xf32>
    %128 = vector.broadcast %119 : vector<64x1xf32> to vector<64x64xf32>
    %129 = vector.broadcast %17 : vector<1x64xf32> to vector<64x64xf32>
    %130 = arith.subf %128, %129 : vector<64x64xf32>
    %131 = math.absf %130 : vector<64x64xf32>
    %cst_40 = arith.constant 1.000000e+00 : f32
    %132 = vector.broadcast %cst_40 : f32 to vector<64x64xf32>
    %133 = arith.subf %132, %131 : vector<64x64xf32>
    %cst_41 = arith.constant 0.000000e+00 : f32
    %134 = vector.broadcast %cst_41 : f32 to vector<64x64xf32>
    %135 = arith.maximumf %134, %133 : vector<64x64xf32>
    %136 = arith.mulf %127, %135 : vector<64x64xf32>
    %137 = arith.truncf %136 : vector<64x64xf32> to vector<64x64xbf16>
    %c0_42 = arith.constant 0 : index
    %c0_43 = arith.constant 0 : index
    %138 = vector.load %arg9[%c0_42, %c0_43] : memref<256x64xbf16, #tpu.memory_space<vmem>>, vector<64x64xbf16>
    tpu.vector_store %arg9[%c0_42, %c0_43], %137 {strides = array<i32>} : memref<256x64xbf16, #tpu.memory_space<vmem>>, vector<64x64xbf16>,
    %139 = vector.extract_strided_slice %12 {offsets = [0, 9], sizes = [64, 1], strides = [1, 1]} : vector<64x32xf32> to vector<64x1xf32>
    %140 = vector.extract_strided_slice %12 {offsets = [0, 13], sizes = [64, 1], strides = [1, 1]} : vector<64x32xf32> to vector<64x1xf32>
    %141 = vector.broadcast %139 : vector<64x1xf32> to vector<64x64xf32>
    %142 = vector.broadcast %20 : vector<1x64xf32> to vector<64x64xf32>
    %143 = arith.subf %141, %142 : vector<64x64xf32>
    %144 = math.absf %143 : vector<64x64xf32>
    %cst_44 = arith.constant 1.000000e+00 : f32
    %145 = vector.broadcast %cst_44 : f32 to vector<64x64xf32>
    %146 = arith.subf %145, %144 : vector<64x64xf32>
    %cst_45 = arith.constant 0.000000e+00 : f32
    %147 = vector.broadcast %cst_45 : f32 to vector<64x64xf32>
    %148 = arith.maximumf %147, %146 : vector<64x64xf32>
    %149 = vector.broadcast %140 : vector<64x1xf32> to vector<64x64xf32>
    %150 = vector.broadcast %17 : vector<1x64xf32> to vector<64x64xf32>
    %151 = arith.subf %149, %150 : vector<64x64xf32>
    %152 = math.absf %151 : vector<64x64xf32>
    %cst_46 = arith.constant 1.000000e+00 : f32
    %153 = vector.broadcast %cst_46 : f32 to vector<64x64xf32>
    %154 = arith.subf %153, %152 : vector<64x64xf32>
    %cst_47 = arith.constant 0.000000e+00 : f32
    %155 = vector.broadcast %cst_47 : f32 to vector<64x64xf32>
    %156 = arith.maximumf %155, %154 : vector<64x64xf32>
    %157 = arith.mulf %148, %156 : vector<64x64xf32>
    %158 = arith.truncf %157 : vector<64x64xf32> to vector<64x64xbf16>
    %c64_48 = arith.constant 64 : index
    %c0_49 = arith.constant 0 : index
    %159 = vector.load %arg9[%c64_48, %c0_49] : memref<256x64xbf16, #tpu.memory_space<vmem>>, vector<64x64xbf16>
    tpu.vector_store %arg9[%c64_48, %c0_49], %158 {strides = array<i32>} : memref<256x64xbf16, #tpu.memory_space<vmem>>, vector<64x64xbf16>,
    %160 = vector.extract_strided_slice %12 {offsets = [0, 10], sizes = [64, 1], strides = [1, 1]} : vector<64x32xf32> to vector<64x1xf32>
    %161 = vector.extract_strided_slice %12 {offsets = [0, 14], sizes = [64, 1], strides = [1, 1]} : vector<64x32xf32> to vector<64x1xf32>
    %162 = vector.broadcast %160 : vector<64x1xf32> to vector<64x64xf32>
    %163 = vector.broadcast %20 : vector<1x64xf32> to vector<64x64xf32>
    %164 = arith.subf %162, %163 : vector<64x64xf32>
    %165 = math.absf %164 : vector<64x64xf32>
    %cst_50 = arith.constant 1.000000e+00 : f32
    %166 = vector.broadcast %cst_50 : f32 to vector<64x64xf32>
    %167 = arith.subf %166, %165 : vector<64x64xf32>
    %cst_51 = arith.constant 0.000000e+00 : f32
    %168 = vector.broadcast %cst_51 : f32 to vector<64x64xf32>
    %169 = arith.maximumf %168, %167 : vector<64x64xf32>
    %170 = vector.broadcast %161 : vector<64x1xf32> to vector<64x64xf32>
    %171 = vector.broadcast %17 : vector<1x64xf32> to vector<64x64xf32>
    %172 = arith.subf %170, %171 : vector<64x64xf32>
    %173 = math.absf %172 : vector<64x64xf32>
    %cst_52 = arith.constant 1.000000e+00 : f32
    %174 = vector.broadcast %cst_52 : f32 to vector<64x64xf32>
    %175 = arith.subf %174, %173 : vector<64x64xf32>
    %cst_53 = arith.constant 0.000000e+00 : f32
    %176 = vector.broadcast %cst_53 : f32 to vector<64x64xf32>
    %177 = arith.maximumf %176, %175 : vector<64x64xf32>
    %178 = arith.mulf %169, %177 : vector<64x64xf32>
    %179 = arith.truncf %178 : vector<64x64xf32> to vector<64x64xbf16>
    %c128_54 = arith.constant 128 : index
    %c0_55 = arith.constant 0 : index
    %180 = vector.load %arg9[%c128_54, %c0_55] : memref<256x64xbf16, #tpu.memory_space<vmem>>, vector<64x64xbf16>
    tpu.vector_store %arg9[%c128_54, %c0_55], %179 {strides = array<i32>} : memref<256x64xbf16, #tpu.memory_space<vmem>>, vector<64x64xbf16>,
    %181 = vector.extract_strided_slice %12 {offsets = [0, 11], sizes = [64, 1], strides = [1, 1]} : vector<64x32xf32> to vector<64x1xf32>
    %182 = vector.extract_strided_slice %12 {offsets = [0, 15], sizes = [64, 1], strides = [1, 1]} : vector<64x32xf32> to vector<64x1xf32>
    %183 = vector.broadcast %181 : vector<64x1xf32> to vector<64x64xf32>
    %184 = vector.broadcast %20 : vector<1x64xf32> to vector<64x64xf32>
    %185 = arith.subf %183, %184 : vector<64x64xf32>
    %186 = math.absf %185 : vector<64x64xf32>
    %cst_56 = arith.constant 1.000000e+00 : f32
    %187 = vector.broadcast %cst_56 : f32 to vector<64x64xf32>
    %188 = arith.subf %187, %186 : vector<64x64xf32>
    %cst_57 = arith.constant 0.000000e+00 : f32
    %189 = vector.broadcast %cst_57 : f32 to vector<64x64xf32>
    %190 = arith.maximumf %189, %188 : vector<64x64xf32>
    %191 = vector.broadcast %182 : vector<64x1xf32> to vector<64x64xf32>
    %192 = vector.broadcast %17 : vector<1x64xf32> to vector<64x64xf32>
    %193 = arith.subf %191, %192 : vector<64x64xf32>
    %194 = math.absf %193 : vector<64x64xf32>
    %cst_58 = arith.constant 1.000000e+00 : f32
    %195 = vector.broadcast %cst_58 : f32 to vector<64x64xf32>
    %196 = arith.subf %195, %194 : vector<64x64xf32>
    %cst_59 = arith.constant 0.000000e+00 : f32
    %197 = vector.broadcast %cst_59 : f32 to vector<64x64xf32>
    %198 = arith.maximumf %197, %196 : vector<64x64xf32>
    %199 = arith.mulf %190, %198 : vector<64x64xf32>
    %200 = arith.truncf %199 : vector<64x64xf32> to vector<64x64xbf16>
    %c192_60 = arith.constant 192 : index
    %c0_61 = arith.constant 0 : index
    %201 = vector.load %arg9[%c192_60, %c0_61] : memref<256x64xbf16, #tpu.memory_space<vmem>>, vector<64x64xbf16>
    tpu.vector_store %arg9[%c192_60, %c0_61], %200 {strides = array<i32>} : memref<256x64xbf16, #tpu.memory_space<vmem>>, vector<64x64xbf16>,
    %202 = vector.extract_strided_slice %23 {offsets = [0, 16], sizes = [64, 16], strides = [1, 1]} : vector<64x64xbf16> to vector<64x16xbf16>
    %c0_62 = arith.constant 0 : index
    %c0_63 = arith.constant 0 : index
    %203 = vector.load %arg9[%c0_62, %c0_63] : memref<256x64xbf16, #tpu.memory_space<vmem>>, vector<256x64xbf16>
    %cst_64 = arith.constant dense<0.000000e+00> : vector<256x16xf32>
    %204 = tpu.matmul %203, %202, %cst_64 {dimension_numbers = #tpu.dot_dimension_numbers<[1], [0], [0], [1], [0, 0, 1, 1], [], []>} : vector<256x64xbf16>, vector<64x16xbf16>, vector<256x16xf32> -> vector<256x16xf32>
    %205 = vector.extract_strided_slice %24 {offsets = [0, 8], sizes = [256, 8], strides = [1, 1]} : vector<256x32xf32> to vector<256x8xf32>
    %206 = vector.extract_strided_slice %204 {offsets = [0, 0], sizes = [256, 8], strides = [1, 1]} : vector<256x16xf32> to vector<256x8xf32>
    %207 = arith.mulf %205, %206 : vector<256x8xf32>
    %cst_65 = arith.constant dense<0.000000e+00> : vector<256xf32>
    %208 = vector.multi_reduction <add>, %207, %cst_65 [1] : vector<256x8xf32> to vector<256xf32>
    %209 = vector.shape_cast %208 : vector<256xf32> to vector<256x1xf32>
    %210 = vector.extract_strided_slice %204 {offsets = [0, 8], sizes = [256, 8], strides = [1, 1]} : vector<256x16xf32> to vector<256x8xf32>
    %211 = vector.extract_strided_slice %12 {offsets = [0, 16], sizes = [64, 1], strides = [1, 1]} : vector<64x32xf32> to vector<64x1xf32>
    %212 = vector.extract_strided_slice %12 {offsets = [0, 20], sizes = [64, 1], strides = [1, 1]} : vector<64x32xf32> to vector<64x1xf32>
    %213 = vector.broadcast %211 : vector<64x1xf32> to vector<64x64xf32>
    %214 = vector.broadcast %20 : vector<1x64xf32> to vector<64x64xf32>
    %215 = arith.subf %213, %214 : vector<64x64xf32>
    %216 = math.absf %215 : vector<64x64xf32>
    %cst_66 = arith.constant 1.000000e+00 : f32
    %217 = vector.broadcast %cst_66 : f32 to vector<64x64xf32>
    %218 = arith.subf %217, %216 : vector<64x64xf32>
    %cst_67 = arith.constant 0.000000e+00 : f32
    %219 = vector.broadcast %cst_67 : f32 to vector<64x64xf32>
    %220 = arith.maximumf %219, %218 : vector<64x64xf32>
    %221 = vector.broadcast %212 : vector<64x1xf32> to vector<64x64xf32>
    %222 = vector.broadcast %17 : vector<1x64xf32> to vector<64x64xf32>
    %223 = arith.subf %221, %222 : vector<64x64xf32>
    %224 = math.absf %223 : vector<64x64xf32>
    %cst_68 = arith.constant 1.000000e+00 : f32
    %225 = vector.broadcast %cst_68 : f32 to vector<64x64xf32>
    %226 = arith.subf %225, %224 : vector<64x64xf32>
    %cst_69 = arith.constant 0.000000e+00 : f32
    %227 = vector.broadcast %cst_69 : f32 to vector<64x64xf32>
    %228 = arith.maximumf %227, %226 : vector<64x64xf32>
    %229 = arith.mulf %220, %228 : vector<64x64xf32>
    %230 = arith.truncf %229 : vector<64x64xf32> to vector<64x64xbf16>
    %c0_70 = arith.constant 0 : index
    %c0_71 = arith.constant 0 : index
    %231 = vector.load %arg9[%c0_70, %c0_71] : memref<256x64xbf16, #tpu.memory_space<vmem>>, vector<64x64xbf16>
    tpu.vector_store %arg9[%c0_70, %c0_71], %230 {strides = array<i32>} : memref<256x64xbf16, #tpu.memory_space<vmem>>, vector<64x64xbf16>,
    %232 = vector.extract_strided_slice %12 {offsets = [0, 17], sizes = [64, 1], strides = [1, 1]} : vector<64x32xf32> to vector<64x1xf32>
    %233 = vector.extract_strided_slice %12 {offsets = [0, 21], sizes = [64, 1], strides = [1, 1]} : vector<64x32xf32> to vector<64x1xf32>
    %234 = vector.broadcast %232 : vector<64x1xf32> to vector<64x64xf32>
    %235 = vector.broadcast %20 : vector<1x64xf32> to vector<64x64xf32>
    %236 = arith.subf %234, %235 : vector<64x64xf32>
    %237 = math.absf %236 : vector<64x64xf32>
    %cst_72 = arith.constant 1.000000e+00 : f32
    %238 = vector.broadcast %cst_72 : f32 to vector<64x64xf32>
    %239 = arith.subf %238, %237 : vector<64x64xf32>
    %cst_73 = arith.constant 0.000000e+00 : f32
    %240 = vector.broadcast %cst_73 : f32 to vector<64x64xf32>
    %241 = arith.maximumf %240, %239 : vector<64x64xf32>
    %242 = vector.broadcast %233 : vector<64x1xf32> to vector<64x64xf32>
    %243 = vector.broadcast %17 : vector<1x64xf32> to vector<64x64xf32>
    %244 = arith.subf %242, %243 : vector<64x64xf32>
    %245 = math.absf %244 : vector<64x64xf32>
    %cst_74 = arith.constant 1.000000e+00 : f32
    %246 = vector.broadcast %cst_74 : f32 to vector<64x64xf32>
    %247 = arith.subf %246, %245 : vector<64x64xf32>
    %cst_75 = arith.constant 0.000000e+00 : f32
    %248 = vector.broadcast %cst_75 : f32 to vector<64x64xf32>
    %249 = arith.maximumf %248, %247 : vector<64x64xf32>
    %250 = arith.mulf %241, %249 : vector<64x64xf32>
    %251 = arith.truncf %250 : vector<64x64xf32> to vector<64x64xbf16>
    %c64_76 = arith.constant 64 : index
    %c0_77 = arith.constant 0 : index
    %252 = vector.load %arg9[%c64_76, %c0_77] : memref<256x64xbf16, #tpu.memory_space<vmem>>, vector<64x64xbf16>
    tpu.vector_store %arg9[%c64_76, %c0_77], %251 {strides = array<i32>} : memref<256x64xbf16, #tpu.memory_space<vmem>>, vector<64x64xbf16>,
    %253 = vector.extract_strided_slice %12 {offsets = [0, 18], sizes = [64, 1], strides = [1, 1]} : vector<64x32xf32> to vector<64x1xf32>
    %254 = vector.extract_strided_slice %12 {offsets = [0, 22], sizes = [64, 1], strides = [1, 1]} : vector<64x32xf32> to vector<64x1xf32>
    %255 = vector.broadcast %253 : vector<64x1xf32> to vector<64x64xf32>
    %256 = vector.broadcast %20 : vector<1x64xf32> to vector<64x64xf32>
    %257 = arith.subf %255, %256 : vector<64x64xf32>
    %258 = math.absf %257 : vector<64x64xf32>
    %cst_78 = arith.constant 1.000000e+00 : f32
    %259 = vector.broadcast %cst_78 : f32 to vector<64x64xf32>
    %260 = arith.subf %259, %258 : vector<64x64xf32>
    %cst_79 = arith.constant 0.000000e+00 : f32
    %261 = vector.broadcast %cst_79 : f32 to vector<64x64xf32>
    %262 = arith.maximumf %261, %260 : vector<64x64xf32>
    %263 = vector.broadcast %254 : vector<64x1xf32> to vector<64x64xf32>
    %264 = vector.broadcast %17 : vector<1x64xf32> to vector<64x64xf32>
    %265 = arith.subf %263, %264 : vector<64x64xf32>
    %266 = math.absf %265 : vector<64x64xf32>
    %cst_80 = arith.constant 1.000000e+00 : f32
    %267 = vector.broadcast %cst_80 : f32 to vector<64x64xf32>
    %268 = arith.subf %267, %266 : vector<64x64xf32>
    %cst_81 = arith.constant 0.000000e+00 : f32
    %269 = vector.broadcast %cst_81 : f32 to vector<64x64xf32>
    %270 = arith.maximumf %269, %268 : vector<64x64xf32>
    %271 = arith.mulf %262, %270 : vector<64x64xf32>
    %272 = arith.truncf %271 : vector<64x64xf32> to vector<64x64xbf16>
    %c128_82 = arith.constant 128 : index
    %c0_83 = arith.constant 0 : index
    %273 = vector.load %arg9[%c128_82, %c0_83] : memref<256x64xbf16, #tpu.memory_space<vmem>>, vector<64x64xbf16>
    tpu.vector_store %arg9[%c128_82, %c0_83], %272 {strides = array<i32>} : memref<256x64xbf16, #tpu.memory_space<vmem>>, vector<64x64xbf16>,
    %274 = vector.extract_strided_slice %12 {offsets = [0, 19], sizes = [64, 1], strides = [1, 1]} : vector<64x32xf32> to vector<64x1xf32>
    %275 = vector.extract_strided_slice %12 {offsets = [0, 23], sizes = [64, 1], strides = [1, 1]} : vector<64x32xf32> to vector<64x1xf32>
    %276 = vector.broadcast %274 : vector<64x1xf32> to vector<64x64xf32>
    %277 = vector.broadcast %20 : vector<1x64xf32> to vector<64x64xf32>
    %278 = arith.subf %276, %277 : vector<64x64xf32>
    %279 = math.absf %278 : vector<64x64xf32>
    %cst_84 = arith.constant 1.000000e+00 : f32
    %280 = vector.broadcast %cst_84 : f32 to vector<64x64xf32>
    %281 = arith.subf %280, %279 : vector<64x64xf32>
    %cst_85 = arith.constant 0.000000e+00 : f32
    %282 = vector.broadcast %cst_85 : f32 to vector<64x64xf32>
    %283 = arith.maximumf %282, %281 : vector<64x64xf32>
    %284 = vector.broadcast %275 : vector<64x1xf32> to vector<64x64xf32>
    %285 = vector.broadcast %17 : vector<1x64xf32> to vector<64x64xf32>
    %286 = arith.subf %284, %285 : vector<64x64xf32>
    %287 = math.absf %286 : vector<64x64xf32>
    %cst_86 = arith.constant 1.000000e+00 : f32
    %288 = vector.broadcast %cst_86 : f32 to vector<64x64xf32>
    %289 = arith.subf %288, %287 : vector<64x64xf32>
    %cst_87 = arith.constant 0.000000e+00 : f32
    %290 = vector.broadcast %cst_87 : f32 to vector<64x64xf32>
    %291 = arith.maximumf %290, %289 : vector<64x64xf32>
    %292 = arith.mulf %283, %291 : vector<64x64xf32>
    %293 = arith.truncf %292 : vector<64x64xf32> to vector<64x64xbf16>
    %c192_88 = arith.constant 192 : index
    %c0_89 = arith.constant 0 : index
    %294 = vector.load %arg9[%c192_88, %c0_89] : memref<256x64xbf16, #tpu.memory_space<vmem>>, vector<64x64xbf16>
    tpu.vector_store %arg9[%c192_88, %c0_89], %293 {strides = array<i32>} : memref<256x64xbf16, #tpu.memory_space<vmem>>, vector<64x64xbf16>,
    %295 = vector.extract_strided_slice %23 {offsets = [0, 32], sizes = [64, 16], strides = [1, 1]} : vector<64x64xbf16> to vector<64x16xbf16>
    %c0_90 = arith.constant 0 : index
    %c0_91 = arith.constant 0 : index
    %296 = vector.load %arg9[%c0_90, %c0_91] : memref<256x64xbf16, #tpu.memory_space<vmem>>, vector<256x64xbf16>
    %cst_92 = arith.constant dense<0.000000e+00> : vector<256x16xf32>
    %297 = tpu.matmul %296, %295, %cst_92 {dimension_numbers = #tpu.dot_dimension_numbers<[1], [0], [0], [1], [0, 0, 1, 1], [], []>} : vector<256x64xbf16>, vector<64x16xbf16>, vector<256x16xf32> -> vector<256x16xf32>
    %298 = vector.extract_strided_slice %24 {offsets = [0, 16], sizes = [256, 8], strides = [1, 1]} : vector<256x32xf32> to vector<256x8xf32>
    %299 = vector.extract_strided_slice %297 {offsets = [0, 0], sizes = [256, 8], strides = [1, 1]} : vector<256x16xf32> to vector<256x8xf32>
    %300 = arith.mulf %298, %299 : vector<256x8xf32>
    %cst_93 = arith.constant dense<0.000000e+00> : vector<256xf32>
    %301 = vector.multi_reduction <add>, %300, %cst_93 [1] : vector<256x8xf32> to vector<256xf32>
    %302 = vector.shape_cast %301 : vector<256xf32> to vector<256x1xf32>
    %303 = vector.extract_strided_slice %297 {offsets = [0, 8], sizes = [256, 8], strides = [1, 1]} : vector<256x16xf32> to vector<256x8xf32>
    %304 = vector.extract_strided_slice %12 {offsets = [0, 24], sizes = [64, 1], strides = [1, 1]} : vector<64x32xf32> to vector<64x1xf32>
    %305 = vector.extract_strided_slice %12 {offsets = [0, 28], sizes = [64, 1], strides = [1, 1]} : vector<64x32xf32> to vector<64x1xf32>
    %306 = vector.broadcast %304 : vector<64x1xf32> to vector<64x64xf32>
    %307 = vector.broadcast %20 : vector<1x64xf32> to vector<64x64xf32>
    %308 = arith.subf %306, %307 : vector<64x64xf32>
    %309 = math.absf %308 : vector<64x64xf32>
    %cst_94 = arith.constant 1.000000e+00 : f32
    %310 = vector.broadcast %cst_94 : f32 to vector<64x64xf32>
    %311 = arith.subf %310, %309 : vector<64x64xf32>
    %cst_95 = arith.constant 0.000000e+00 : f32
    %312 = vector.broadcast %cst_95 : f32 to vector<64x64xf32>
    %313 = arith.maximumf %312, %311 : vector<64x64xf32>
    %314 = vector.broadcast %305 : vector<64x1xf32> to vector<64x64xf32>
    %315 = vector.broadcast %17 : vector<1x64xf32> to vector<64x64xf32>
    %316 = arith.subf %314, %315 : vector<64x64xf32>
    %317 = math.absf %316 : vector<64x64xf32>
    %cst_96 = arith.constant 1.000000e+00 : f32
    %318 = vector.broadcast %cst_96 : f32 to vector<64x64xf32>
    %319 = arith.subf %318, %317 : vector<64x64xf32>
    %cst_97 = arith.constant 0.000000e+00 : f32
    %320 = vector.broadcast %cst_97 : f32 to vector<64x64xf32>
    %321 = arith.maximumf %320, %319 : vector<64x64xf32>
    %322 = arith.mulf %313, %321 : vector<64x64xf32>
    %323 = arith.truncf %322 : vector<64x64xf32> to vector<64x64xbf16>
    %c0_98 = arith.constant 0 : index
    %c0_99 = arith.constant 0 : index
    %324 = vector.load %arg9[%c0_98, %c0_99] : memref<256x64xbf16, #tpu.memory_space<vmem>>, vector<64x64xbf16>
    tpu.vector_store %arg9[%c0_98, %c0_99], %323 {strides = array<i32>} : memref<256x64xbf16, #tpu.memory_space<vmem>>, vector<64x64xbf16>,
    %325 = vector.extract_strided_slice %12 {offsets = [0, 25], sizes = [64, 1], strides = [1, 1]} : vector<64x32xf32> to vector<64x1xf32>
    %326 = vector.extract_strided_slice %12 {offsets = [0, 29], sizes = [64, 1], strides = [1, 1]} : vector<64x32xf32> to vector<64x1xf32>
    %327 = vector.broadcast %325 : vector<64x1xf32> to vector<64x64xf32>
    %328 = vector.broadcast %20 : vector<1x64xf32> to vector<64x64xf32>
    %329 = arith.subf %327, %328 : vector<64x64xf32>
    %330 = math.absf %329 : vector<64x64xf32>
    %cst_100 = arith.constant 1.000000e+00 : f32
    %331 = vector.broadcast %cst_100 : f32 to vector<64x64xf32>
    %332 = arith.subf %331, %330 : vector<64x64xf32>
    %cst_101 = arith.constant 0.000000e+00 : f32
    %333 = vector.broadcast %cst_101 : f32 to vector<64x64xf32>
    %334 = arith.maximumf %333, %332 : vector<64x64xf32>
    %335 = vector.broadcast %326 : vector<64x1xf32> to vector<64x64xf32>
    %336 = vector.broadcast %17 : vector<1x64xf32> to vector<64x64xf32>
    %337 = arith.subf %335, %336 : vector<64x64xf32>
    %338 = math.absf %337 : vector<64x64xf32>
    %cst_102 = arith.constant 1.000000e+00 : f32
    %339 = vector.broadcast %cst_102 : f32 to vector<64x64xf32>
    %340 = arith.subf %339, %338 : vector<64x64xf32>
    %cst_103 = arith.constant 0.000000e+00 : f32
    %341 = vector.broadcast %cst_103 : f32 to vector<64x64xf32>
    %342 = arith.maximumf %341, %340 : vector<64x64xf32>
    %343 = arith.mulf %334, %342 : vector<64x64xf32>
    %344 = arith.truncf %343 : vector<64x64xf32> to vector<64x64xbf16>
    %c64_104 = arith.constant 64 : index
    %c0_105 = arith.constant 0 : index
    %345 = vector.load %arg9[%c64_104, %c0_105] : memref<256x64xbf16, #tpu.memory_space<vmem>>, vector<64x64xbf16>
    tpu.vector_store %arg9[%c64_104, %c0_105], %344 {strides = array<i32>} : memref<256x64xbf16, #tpu.memory_space<vmem>>, vector<64x64xbf16>,
    %346 = vector.extract_strided_slice %12 {offsets = [0, 26], sizes = [64, 1], strides = [1, 1]} : vector<64x32xf32> to vector<64x1xf32>
    %347 = vector.extract_strided_slice %12 {offsets = [0, 30], sizes = [64, 1], strides = [1, 1]} : vector<64x32xf32> to vector<64x1xf32>
    %348 = vector.broadcast %346 : vector<64x1xf32> to vector<64x64xf32>
    %349 = vector.broadcast %20 : vector<1x64xf32> to vector<64x64xf32>
    %350 = arith.subf %348, %349 : vector<64x64xf32>
    %351 = math.absf %350 : vector<64x64xf32>
    %cst_106 = arith.constant 1.000000e+00 : f32
    %352 = vector.broadcast %cst_106 : f32 to vector<64x64xf32>
    %353 = arith.subf %352, %351 : vector<64x64xf32>
    %cst_107 = arith.constant 0.000000e+00 : f32
    %354 = vector.broadcast %cst_107 : f32 to vector<64x64xf32>
    %355 = arith.maximumf %354, %353 : vector<64x64xf32>
    %356 = vector.broadcast %347 : vector<64x1xf32> to vector<64x64xf32>
    %357 = vector.broadcast %17 : vector<1x64xf32> to vector<64x64xf32>
    %358 = arith.subf %356, %357 : vector<64x64xf32>
    %359 = math.absf %358 : vector<64x64xf32>
    %cst_108 = arith.constant 1.000000e+00 : f32
    %360 = vector.broadcast %cst_108 : f32 to vector<64x64xf32>
    %361 = arith.subf %360, %359 : vector<64x64xf32>
    %cst_109 = arith.constant 0.000000e+00 : f32
    %362 = vector.broadcast %cst_109 : f32 to vector<64x64xf32>
    %363 = arith.maximumf %362, %361 : vector<64x64xf32>
    %364 = arith.mulf %355, %363 : vector<64x64xf32>
    %365 = arith.truncf %364 : vector<64x64xf32> to vector<64x64xbf16>
    %c128_110 = arith.constant 128 : index
    %c0_111 = arith.constant 0 : index
    %366 = vector.load %arg9[%c128_110, %c0_111] : memref<256x64xbf16, #tpu.memory_space<vmem>>, vector<64x64xbf16>
    tpu.vector_store %arg9[%c128_110, %c0_111], %365 {strides = array<i32>} : memref<256x64xbf16, #tpu.memory_space<vmem>>, vector<64x64xbf16>,
    %367 = vector.extract_strided_slice %12 {offsets = [0, 27], sizes = [64, 1], strides = [1, 1]} : vector<64x32xf32> to vector<64x1xf32>
    %368 = vector.extract_strided_slice %12 {offsets = [0, 31], sizes = [64, 1], strides = [1, 1]} : vector<64x32xf32> to vector<64x1xf32>
    %369 = vector.broadcast %367 : vector<64x1xf32> to vector<64x64xf32>
    %370 = vector.broadcast %20 : vector<1x64xf32> to vector<64x64xf32>
    %371 = arith.subf %369, %370 : vector<64x64xf32>
    %372 = math.absf %371 : vector<64x64xf32>
    %cst_112 = arith.constant 1.000000e+00 : f32
    %373 = vector.broadcast %cst_112 : f32 to vector<64x64xf32>
    %374 = arith.subf %373, %372 : vector<64x64xf32>
    %cst_113 = arith.constant 0.000000e+00 : f32
    %375 = vector.broadcast %cst_113 : f32 to vector<64x64xf32>
    %376 = arith.maximumf %375, %374 : vector<64x64xf32>
    %377 = vector.broadcast %368 : vector<64x1xf32> to vector<64x64xf32>
    %378 = vector.broadcast %17 : vector<1x64xf32> to vector<64x64xf32>
    %379 = arith.subf %377, %378 : vector<64x64xf32>
    %380 = math.absf %379 : vector<64x64xf32>
    %cst_114 = arith.constant 1.000000e+00 : f32
    %381 = vector.broadcast %cst_114 : f32 to vector<64x64xf32>
    %382 = arith.subf %381, %380 : vector<64x64xf32>
    %cst_115 = arith.constant 0.000000e+00 : f32
    %383 = vector.broadcast %cst_115 : f32 to vector<64x64xf32>
    %384 = arith.maximumf %383, %382 : vector<64x64xf32>
    %385 = arith.mulf %376, %384 : vector<64x64xf32>
    %386 = arith.truncf %385 : vector<64x64xf32> to vector<64x64xbf16>
    %c192_116 = arith.constant 192 : index
    %c0_117 = arith.constant 0 : index
    %387 = vector.load %arg9[%c192_116, %c0_117] : memref<256x64xbf16, #tpu.memory_space<vmem>>, vector<64x64xbf16>
    tpu.vector_store %arg9[%c192_116, %c0_117], %386 {strides = array<i32>} : memref<256x64xbf16, #tpu.memory_space<vmem>>, vector<64x64xbf16>,
    %388 = vector.extract_strided_slice %23 {offsets = [0, 48], sizes = [64, 16], strides = [1, 1]} : vector<64x64xbf16> to vector<64x16xbf16>
    %c0_118 = arith.constant 0 : index
    %c0_119 = arith.constant 0 : index
    %389 = vector.load %arg9[%c0_118, %c0_119] : memref<256x64xbf16, #tpu.memory_space<vmem>>, vector<256x64xbf16>
    %cst_120 = arith.constant dense<0.000000e+00> : vector<256x16xf32>
    %390 = tpu.matmul %389, %388, %cst_120 {dimension_numbers = #tpu.dot_dimension_numbers<[1], [0], [0], [1], [0, 0, 1, 1], [], []>} : vector<256x64xbf16>, vector<64x16xbf16>, vector<256x16xf32> -> vector<256x16xf32>
    %391 = vector.extract_strided_slice %24 {offsets = [0, 24], sizes = [256, 8], strides = [1, 1]} : vector<256x32xf32> to vector<256x8xf32>
    %392 = vector.extract_strided_slice %390 {offsets = [0, 0], sizes = [256, 8], strides = [1, 1]} : vector<256x16xf32> to vector<256x8xf32>
    %393 = arith.mulf %391, %392 : vector<256x8xf32>
    %cst_121 = arith.constant dense<0.000000e+00> : vector<256xf32>
    %394 = vector.multi_reduction <add>, %393, %cst_121 [1] : vector<256x8xf32> to vector<256xf32>
    %395 = vector.shape_cast %394 : vector<256xf32> to vector<256x1xf32>
    %396 = vector.extract_strided_slice %390 {offsets = [0, 8], sizes = [256, 8], strides = [1, 1]} : vector<256x16xf32> to vector<256x8xf32>
    %397 = tpu.concatenate %116, %209, %302, %395 in 1 : vector<256x1xf32>, vector<256x1xf32>, vector<256x1xf32>, vector<256x1xf32> -> vector<256x4xf32>
    %398 = vector.extract_strided_slice %397 {offsets = [0, 0], sizes = [64, 4], strides = [1, 1]} : vector<256x4xf32> to vector<64x4xf32>
    %399 = vector.extract_strided_slice %397 {offsets = [64, 0], sizes = [64, 4], strides = [1, 1]} : vector<256x4xf32> to vector<64x4xf32>
    %400 = arith.maximumf %398, %399 : vector<64x4xf32>
    %401 = vector.extract_strided_slice %397 {offsets = [128, 0], sizes = [64, 4], strides = [1, 1]} : vector<256x4xf32> to vector<64x4xf32>
    %402 = arith.maximumf %400, %401 : vector<64x4xf32>
    %403 = vector.extract_strided_slice %397 {offsets = [192, 0], sizes = [64, 4], strides = [1, 1]} : vector<256x4xf32> to vector<64x4xf32>
    %404 = arith.maximumf %402, %403 : vector<64x4xf32>
    %405 = tpu.concatenate %404, %404, %404, %404 in 0 : vector<64x4xf32>, vector<64x4xf32>, vector<64x4xf32>, vector<64x4xf32> -> vector<256x4xf32>
    %406 = arith.subf %397, %405 : vector<256x4xf32>
    %407 = math.exp %406 : vector<256x4xf32>
    %408 = vector.extract_strided_slice %407 {offsets = [0, 0], sizes = [64, 4], strides = [1, 1]} : vector<256x4xf32> to vector<64x4xf32>
    %409 = vector.extract_strided_slice %407 {offsets = [64, 0], sizes = [64, 4], strides = [1, 1]} : vector<256x4xf32> to vector<64x4xf32>
    %410 = arith.addf %408, %409 : vector<64x4xf32>
    %411 = vector.extract_strided_slice %407 {offsets = [128, 0], sizes = [64, 4], strides = [1, 1]} : vector<256x4xf32> to vector<64x4xf32>
    %412 = arith.addf %410, %411 : vector<64x4xf32>
    %413 = vector.extract_strided_slice %407 {offsets = [192, 0], sizes = [64, 4], strides = [1, 1]} : vector<256x4xf32> to vector<64x4xf32>
    %414 = arith.addf %412, %413 : vector<64x4xf32>
    %415 = tpu.reciprocal %414 {approx = true} : vector<64x4xf32> -> vector<64x4xf32>
    %416 = tpu.concatenate %415, %415, %415, %415 in 0 : vector<64x4xf32>, vector<64x4xf32>, vector<64x4xf32>, vector<64x4xf32> -> vector<256x4xf32>
    %417 = arith.mulf %407, %416 : vector<256x4xf32>
    %418 = vector.extract_strided_slice %417 {offsets = [0, 0], sizes = [256, 1], strides = [1, 1]} : vector<256x4xf32> to vector<256x1xf32>
    %419 = vector.broadcast %418 : vector<256x1xf32> to vector<256x8xf32>
    %420 = arith.mulf %419, %117 : vector<256x8xf32>
    %421 = vector.extract_strided_slice %420 {offsets = [0, 0], sizes = [64, 8], strides = [1, 1]} : vector<256x8xf32> to vector<64x8xf32>
    %422 = vector.extract_strided_slice %420 {offsets = [64, 0], sizes = [64, 8], strides = [1, 1]} : vector<256x8xf32> to vector<64x8xf32>
    %423 = arith.addf %421, %422 : vector<64x8xf32>
    %424 = vector.extract_strided_slice %420 {offsets = [128, 0], sizes = [64, 8], strides = [1, 1]} : vector<256x8xf32> to vector<64x8xf32>
    %425 = arith.addf %423, %424 : vector<64x8xf32>
    %426 = vector.extract_strided_slice %420 {offsets = [192, 0], sizes = [64, 8], strides = [1, 1]} : vector<256x8xf32> to vector<64x8xf32>
    %427 = arith.addf %425, %426 : vector<64x8xf32>
    %c0_122 = arith.constant 0 : index
    %c0_123 = arith.constant 0 : index
    %428 = vector.load %arg10[%c0_122, %c0_123] : memref<64x32xf32, #tpu.memory_space<vmem>>, vector<64x8xf32>
    tpu.vector_store %arg10[%c0_122, %c0_123], %427 {strides = array<i32>} : memref<64x32xf32, #tpu.memory_space<vmem>>, vector<64x8xf32>,
    %429 = vector.extract_strided_slice %417 {offsets = [0, 1], sizes = [256, 1], strides = [1, 1]} : vector<256x4xf32> to vector<256x1xf32>
    %430 = vector.broadcast %429 : vector<256x1xf32> to vector<256x8xf32>
    %431 = arith.mulf %430, %210 : vector<256x8xf32>
    %432 = vector.extract_strided_slice %431 {offsets = [0, 0], sizes = [64, 8], strides = [1, 1]} : vector<256x8xf32> to vector<64x8xf32>
    %433 = vector.extract_strided_slice %431 {offsets = [64, 0], sizes = [64, 8], strides = [1, 1]} : vector<256x8xf32> to vector<64x8xf32>
    %434 = arith.addf %432, %433 : vector<64x8xf32>
    %435 = vector.extract_strided_slice %431 {offsets = [128, 0], sizes = [64, 8], strides = [1, 1]} : vector<256x8xf32> to vector<64x8xf32>
    %436 = arith.addf %434, %435 : vector<64x8xf32>
    %437 = vector.extract_strided_slice %431 {offsets = [192, 0], sizes = [64, 8], strides = [1, 1]} : vector<256x8xf32> to vector<64x8xf32>
    %438 = arith.addf %436, %437 : vector<64x8xf32>
    %c0_124 = arith.constant 0 : index
    %c8 = arith.constant 8 : index
    %439 = vector.load %arg10[%c0_124, %c8] : memref<64x32xf32, #tpu.memory_space<vmem>>, vector<64x8xf32>
    tpu.vector_store %arg10[%c0_124, %c8], %438 {strides = array<i32>} : memref<64x32xf32, #tpu.memory_space<vmem>>, vector<64x8xf32>,
    %440 = vector.extract_strided_slice %417 {offsets = [0, 2], sizes = [256, 1], strides = [1, 1]} : vector<256x4xf32> to vector<256x1xf32>
    %441 = vector.broadcast %440 : vector<256x1xf32> to vector<256x8xf32>
    %442 = arith.mulf %441, %303 : vector<256x8xf32>
    %443 = vector.extract_strided_slice %442 {offsets = [0, 0], sizes = [64, 8], strides = [1, 1]} : vector<256x8xf32> to vector<64x8xf32>
    %444 = vector.extract_strided_slice %442 {offsets = [64, 0], sizes = [64, 8], strides = [1, 1]} : vector<256x8xf32> to vector<64x8xf32>
    %445 = arith.addf %443, %444 : vector<64x8xf32>
    %446 = vector.extract_strided_slice %442 {offsets = [128, 0], sizes = [64, 8], strides = [1, 1]} : vector<256x8xf32> to vector<64x8xf32>
    %447 = arith.addf %445, %446 : vector<64x8xf32>
    %448 = vector.extract_strided_slice %442 {offsets = [192, 0], sizes = [64, 8], strides = [1, 1]} : vector<256x8xf32> to vector<64x8xf32>
    %449 = arith.addf %447, %448 : vector<64x8xf32>
    %c0_125 = arith.constant 0 : index
    %c16 = arith.constant 16 : index
    %450 = vector.load %arg10[%c0_125, %c16] : memref<64x32xf32, #tpu.memory_space<vmem>>, vector<64x8xf32>
    tpu.vector_store %arg10[%c0_125, %c16], %449 {strides = array<i32>} : memref<64x32xf32, #tpu.memory_space<vmem>>, vector<64x8xf32>,
    %451 = vector.extract_strided_slice %417 {offsets = [0, 3], sizes = [256, 1], strides = [1, 1]} : vector<256x4xf32> to vector<256x1xf32>
    %452 = vector.broadcast %451 : vector<256x1xf32> to vector<256x8xf32>
    %453 = arith.mulf %452, %396 : vector<256x8xf32>
    %454 = vector.extract_strided_slice %453 {offsets = [0, 0], sizes = [64, 8], strides = [1, 1]} : vector<256x8xf32> to vector<64x8xf32>
    %455 = vector.extract_strided_slice %453 {offsets = [64, 0], sizes = [64, 8], strides = [1, 1]} : vector<256x8xf32> to vector<64x8xf32>
    %456 = arith.addf %454, %455 : vector<64x8xf32>
    %457 = vector.extract_strided_slice %453 {offsets = [128, 0], sizes = [64, 8], strides = [1, 1]} : vector<256x8xf32> to vector<64x8xf32>
    %458 = arith.addf %456, %457 : vector<64x8xf32>
    %459 = vector.extract_strided_slice %453 {offsets = [192, 0], sizes = [64, 8], strides = [1, 1]} : vector<256x8xf32> to vector<64x8xf32>
    %460 = arith.addf %458, %459 : vector<64x8xf32>
    %c0_126 = arith.constant 0 : index
    %c24 = arith.constant 24 : index
    %461 = vector.load %arg10[%c0_126, %c24] : memref<64x32xf32, #tpu.memory_space<vmem>>, vector<64x8xf32>
    tpu.vector_store %arg10[%c0_126, %c24], %460 {strides = array<i32>} : memref<64x32xf32, #tpu.memory_space<vmem>>, vector<64x8xf32>,
    %c0_127 = arith.constant 0 : index
    %c0_128 = arith.constant 0 : index
    %462 = vector.load %arg10[%c0_127, %c0_128] : memref<64x32xf32, #tpu.memory_space<vmem>>, vector<64x32xf32>
    %463 = arith.truncf %462 : vector<64x32xf32> to vector<64x32xbf16>
    %c0_129 = arith.constant 0 : index
    %c0_130 = arith.constant 0 : index
    %464 = vector.load %arg6[%c0_129, %c0_130] : memref<32x32xbf16, #tpu.memory_space<vmem>>, vector<32x32xbf16>
    %cst_131 = arith.constant dense<0.000000e+00> : vector<64x32xf32>
    %465 = tpu.matmul %463, %464, %cst_131 {dimension_numbers = #tpu.dot_dimension_numbers<[1], [0], [0], [1], [0, 0, 1, 1], [], []>} : vector<64x32xbf16>, vector<32x32xbf16>, vector<64x32xf32> -> vector<64x32xf32>
    %c0_132 = arith.constant 0 : index
    %c0_133 = arith.constant 0 : index
    %466 = vector.load %arg7[%c0_132, %c0_133] : memref<1x32xf32, #tpu.memory_space<vmem>>, vector<1x32xf32>
    %467 = vector.broadcast %466 : vector<1x32xf32> to vector<64x32xf32>
    %468 = arith.addf %465, %467 : vector<64x32xf32>
    %469 = vector.shape_cast %468 : vector<64x32xf32> to vector<1x64x32xf32>
    %c0_134 = arith.constant 0 : index
    %c0_135 = arith.constant 0 : index
    %c0_136 = arith.constant 0 : index
    %470 = vector.load %arg8[%c0_134, %c0_135, %c0_136] : memref<1x64x32xf32, #tpu.memory_space<vmem>>, vector<1x64x32xf32>
    tpu.vector_store %arg8[%c0_134, %c0_135, %c0_136], %469 {strides = array<i32>} : memref<1x64x32xf32, #tpu.memory_space<vmem>>, vector<1x64x32xf32>,
    return
  }
  func.func @transform_0(%arg0: i32) -> (i32, i32, i32) {
    %c0_i32 = arith.constant 0 : i32
    %c0_i32_0 = arith.constant 0 : i32
    %c0_i32_1 = arith.constant 0 : i32
    return %arg0, %c0_i32, %c0_i32_0 : i32, i32, i32
  }
  func.func @transform_1(%arg0: i32) -> (i32, i32) {
    %c0_i32 = arith.constant 0 : i32
    %c0_i32_0 = arith.constant 0 : i32
    %c0_i32_1 = arith.constant 0 : i32
    return %c0_i32, %c0_i32_0 : i32, i32
  }
  func.func @transform_2(%arg0: i32) -> (i32, i32) {
    %c0_i32 = arith.constant 0 : i32
    %c0_i32_0 = arith.constant 0 : i32
    %c0_i32_1 = arith.constant 0 : i32
    return %c0_i32, %c0_i32_0 : i32, i32
  }
  func.func @transform_3(%arg0: i32) -> (i32, i32) {
    %c0_i32 = arith.constant 0 : i32
    %c0_i32_0 = arith.constant 0 : i32
    %c0_i32_1 = arith.constant 0 : i32
    return %c0_i32, %c0_i32_0 : i32, i32
  }
  func.func @transform_4(%arg0: i32) -> (i32, i32) {
    %c0_i32 = arith.constant 0 : i32
    %c0_i32_0 = arith.constant 0 : i32
    %c0_i32_1 = arith.constant 0 : i32
    return %c0_i32, %c0_i32_0 : i32, i32
  }
  func.func @transform_5(%arg0: i32) -> (i32, i32) {
    %c0_i32 = arith.constant 0 : i32
    %c0_i32_0 = arith.constant 0 : i32
    %c0_i32_1 = arith.constant 0 : i32
    return %c0_i32, %c0_i32_0 : i32, i32
  }
  func.func @transform_6(%arg0: i32) -> (i32, i32) {
    %c0_i32 = arith.constant 0 : i32
    %c0_i32_0 = arith.constant 0 : i32
    %c0_i32_1 = arith.constant 0 : i32
    return %c0_i32, %c0_i32_0 : i32, i32
  }
  func.func @transform_7(%arg0: i32) -> (i32, i32, i32) {
    %c0_i32 = arith.constant 0 : i32
    %c0_i32_0 = arith.constant 0 : i32
    %c0_i32_1 = arith.constant 0 : i32
    return %arg0, %c0_i32, %c0_i32_0 : i32, i32, i32
  }
}

</mosaic_0001>

<llo_original>
// kernel: sample_attention_forward.1
$region0: #{sample_attention_forward.1}
  #allocation0 [shape = 'u32[]', space=smem, size = 0x4, offset = 0x4, fixed_abs, tag = 'smem constant byte address 0x4 - core index']
  #allocation1 [shape = 'u32[72,128]{1,0:T(1,128)}', space=vmem, size = 0x9000, scoped, tag = 'internal scratch']
  #allocation2 [shape = 'bf16[256,64]{1,0:T(8,128)(2,1)}', space=vmem, size = 0x10000, scoped, tag = 'scratch operand']
  #allocation3 [shape = 'f32[64,32]{1,0:T(8,128)}', space=vmem, size = 0x8000, scoped, tag = 'scratch operand']
  %s0 = inlined_call_operand.vmem [shape: f32[2,64,40], index: 0, kind: input, shape index: {}]
  %s1 = inlined_call_operand.vmem [shape: bf16[40,96], index: 1, kind: input, shape index: {}]
  %s2 = inlined_call_operand.vmem [shape: f32[1,96], index: 2, kind: input, shape index: {}]
  %s3 = inlined_call_operand.vmem [shape: f32[40,32], index: 3, kind: input, shape index: {}]
  %s4 = inlined_call_operand.vmem [shape: f32[1,32], index: 4, kind: input, shape index: {}]
  %s5 = inlined_call_operand.vmem [shape: bf16[32,32], index: 5, kind: input, shape index: {}]
  %s6 = inlined_call_operand.vmem [shape: f32[1,32], index: 6, kind: input, shape index: {}]
  %s7 = inlined_call_operand.vmem [shape: f32[2,64,32], index: 7, kind: output, shape index: {}]
  %s8 = sld [smem:[#allocation0]]
  $region61: #{sample_attention_forward.1} parent=0
    _
  %s10 = ssub.s32 1, %s8
  %s11 = scalar_select 0, %s10, %s8
  loop: start=0, step=1, limit=4
  $region2: #{sample_attention_forward.1} parent=0 // loop_pre_header
    _
  $region3: #{sample_attention_forward.1} parent=0 // loop_header
    %s13 = sphi 0, %s17
    %p14 = scmp.ge.s32.totalorder %s13, 4
    %s23 = sphi 0, %s25
    %s26 = sphi 0, %s23
    %s27 = sphi 0, %s26
    %s43 = sphi 0, %s27
    %s47 = sphi 0, %s47
    %s49 = sphi 0, %s47
    %s50 = sphi 0, %s49
    %s64 = sphi 0, %s50
    %s68 = sphi 0, %s68
    %s70 = sphi 0, %s68
    %s71 = sphi 0, %s70
    %s85 = sphi 0, %s71
    %s89 = sphi 0, %s89
    %s91 = sphi 0, %s89
    %s92 = sphi 0, %s91
    %s106 = sphi 0, %s92
    %s110 = sphi 0, %s110
    %s112 = sphi 0, %s110
    %s113 = sphi 0, %s112
    %s127 = sphi 0, %s113
    %s131 = sphi 0, %s131
    %s133 = sphi 0, %s131
    %s134 = sphi 0, %s133
    %s148 = sphi 0, %s134
    %s152 = sphi 0, %s152
    %s154 = sphi 0, %s152
    %s155 = sphi 0, %s154
    %s169 = sphi 0, %s155
    %s175 = sphi 0, %s177
    %s178 = sphi 0, %s175
    %s179 = sphi 0, %s178
    %s195 = sphi 0, %s179
  $region4: #{sample_attention_forward.1} parent=0 // loop_header_branch
    %16 = sbr.rel (%p14) target = $region8
  $region5: #{sample_attention_forward.1} parent=0 // loop_body
    %s18 = ssub.s32 %s13, 1
    %s19 = ssub.s32 %s13, 2
    %s20 = sadd.s32 %s13, 1
    %s21 = ssub.s32 %s13, %s20
    %p22 = scmp.eq.s32.totalorder %s21, 0
    %s24 = sadd.s32 %s23, 1
    %s25 = scalar_select %p22, %s23, %s24
    %p28 = pneg %p22
    %p29 = scmp.eq.s32.totalorder %s13, 1
    %p30 = por %p28, %p29
    %p31 = scmp.ne.s32.totalorder %s23, %s26
    %p32 = scmp.eq.s32.totalorder %s13, 0
    %p33 = por %p31, %p32
    %p34 = scmp.ne.s32.totalorder %s23, %s26
    %p35 = scmp.eq.s32.totalorder %s18, 1
    %p36 = por %p34, %p35
    %p37 = scmp.ne.s32.totalorder %s26, %s27
    %p38 = scmp.eq.s32.totalorder %s18, 0
    %p39 = por %p37, %p38
    %p40 = scmp.ne.s32.totalorder %s26, %s27
    %p41 = scmp.eq.s32.totalorder %s19, 1
    %p42 = por %p40, %p41
    %p44 = scmp.ne.s32.totalorder %s27, %s43
    %p45 = scmp.eq.s32.totalorder %s19, 0
    %p46 = por %p44, %p45
    %s48 = sadd.s32 %s47, 1
    %p51 = scmp.eq.s32.totalorder %s13, 1
    %p52 = scmp.ne.s32.totalorder %s47, %s49
    %p53 = scmp.eq.s32.totalorder %s13, 0
    %p54 = por %p52, %p53
    %p55 = scmp.ne.s32.totalorder %s47, %s49
    %p56 = scmp.eq.s32.totalorder %s18, 1
    %p57 = por %p55, %p56
    %p58 = scmp.ne.s32.totalorder %s49, %s50
    %p59 = scmp.eq.s32.totalorder %s18, 0
    %p60 = por %p58, %p59
    %p61 = scmp.ne.s32.totalorder %s49, %s50
    %p62 = scmp.eq.s32.totalorder %s19, 1
    %p63 = por %p61, %p62
    %p65 = scmp.ne.s32.totalorder %s50, %s64
    %p66 = scmp.eq.s32.totalorder %s19, 0
    %p67 = por %p65, %p66
    %s69 = sadd.s32 %s68, 1
    %p72 = scmp.eq.s32.totalorder %s13, 1
    %p73 = scmp.ne.s32.totalorder %s68, %s70
    %p74 = scmp.eq.s32.totalorder %s13, 0
    %p75 = por %p73, %p74
    %p76 = scmp.ne.s32.totalorder %s68, %s70
    %p77 = scmp.eq.s32.totalorder %s18, 1
    %p78 = por %p76, %p77
    %p79 = scmp.ne.s32.totalorder %s70, %s71
    %p80 = scmp.eq.s32.totalorder %s18, 0
    %p81 = por %p79, %p80
    %p82 = scmp.ne.s32.totalorder %s70, %s71
    %p83 = scmp.eq.s32.totalorder %s19, 1
    %p84 = por %p82, %p83
    %p86 = scmp.ne.s32.totalorder %s71, %s85
    %p87 = scmp.eq.s32.totalorder %s19, 0
    %p88 = por %p86, %p87
    %s90 = sadd.s32 %s89, 1
    %p93 = scmp.eq.s32.totalorder %s13, 1
    %p94 = scmp.ne.s32.totalorder %s89, %s91
    %p95 = scmp.eq.s32.totalorder %s13, 0
    %p96 = por %p94, %p95
    %p97 = scmp.ne.s32.totalorder %s89, %s91
    %p98 = scmp.eq.s32.totalorder %s18, 1
    %p99 = por %p97, %p98
    %p100 = scmp.ne.s32.totalorder %s91, %s92
    %p101 = scmp.eq.s32.totalorder %s18, 0
    %p102 = por %p100, %p101
    %p103 = scmp.ne.s32.totalorder %s91, %s92
    %p104 = scmp.eq.s32.totalorder %s19, 1
    %p105 = por %p103, %p104
    %p107 = scmp.ne.s32.totalorder %s92, %s106
    %p108 = scmp.eq.s32.totalorder %s19, 0
    %p109 = por %p107, %p108
    %s111 = sadd.s32 %s110, 1
    %p114 = scmp.eq.s32.totalorder %s13, 1
    %p115 = scmp.ne.s32.totalorder %s110, %s112
    %p116 = scmp.eq.s32.totalorder %s13, 0
    %p117 = por %p115, %p116
    %p118 = scmp.ne.s32.totalorder %s110, %s112
    %p119 = scmp.eq.s32.totalorder %s18, 1
    %p120 = por %p118, %p119
    %p121 = scmp.ne.s32.totalorder %s112, %s113
    %p122 = scmp.eq.s32.totalorder %s18, 0
    %p123 = por %p121, %p122
    %p124 = scmp.ne.s32.totalorder %s112, %s113
    %p125 = scmp.eq.s32.totalorder %s19, 1
    %p126 = por %p124, %p125
    %p128 = scmp.ne.s32.totalorder %s113, %s127
    %p129 = scmp.eq.s32.totalorder %s19, 0
    %p130 = por %p128, %p129
    %s132 = sadd.s32 %s131, 1
    %p135 = scmp.eq.s32.totalorder %s13, 1
    %p136 = scmp.ne.s32.totalorder %s131, %s133
    %p137 = scmp.eq.s32.totalorder %s13, 0
    %p138 = por %p136, %p137
    %p139 = scmp.ne.s32.totalorder %s131, %s133
    %p140 = scmp.eq.s32.totalorder %s18, 1
    %p141 = por %p139, %p140
    %p142 = scmp.ne.s32.totalorder %s133, %s134
    %p143 = scmp.eq.s32.totalorder %s18, 0
    %p144 = por %p142, %p143
    %p145 = scmp.ne.s32.totalorder %s133, %s134
    %p146 = scmp.eq.s32.totalorder %s19, 1
    %p147 = por %p145, %p146
    %p149 = scmp.ne.s32.totalorder %s134, %s148
    %p150 = scmp.eq.s32.totalorder %s19, 0
    %p151 = por %p149, %p150
    %s153 = sadd.s32 %s152, 1
    %p156 = scmp.eq.s32.totalorder %s13, 1
    %p157 = scmp.ne.s32.totalorder %s152, %s154
    %p158 = scmp.eq.s32.totalorder %s13, 0
    %p159 = por %p157, %p158
    %p160 = scmp.ne.s32.totalorder %s152, %s154
    %p161 = scmp.eq.s32.totalorder %s18, 1
    %p162 = por %p160, %p161
    %p163 = scmp.ne.s32.totalorder %s154, %s155
    %p164 = scmp.eq.s32.totalorder %s18, 0
    %p165 = por %p163, %p164
    %p166 = scmp.ne.s32.totalorder %s154, %s155
    %p167 = scmp.eq.s32.totalorder %s19, 1
    %p168 = por %p166, %p167
    %p170 = scmp.ne.s32.totalorder %s155, %s169
    %p171 = scmp.eq.s32.totalorder %s19, 0
    %p172 = por %p170, %p171
    %s173 = ssub.s32 %s13, %s20
    %p174 = scmp.eq.s32.totalorder %s173, 0
    %s176 = sadd.s32 %s175, 1
    %s177 = scalar_select %p174, %s175, %s176
    %p180 = pneg %p174
    %p181 = scmp.eq.s32.totalorder %s13, 1
    %p182 = por %p180, %p181
    %p183 = scmp.ne.s32.totalorder %s175, %s178
    %p184 = scmp.eq.s32.totalorder %s13, 0
    %p185 = por %p183, %p184
    %p186 = scmp.ne.s32.totalorder %s175, %s178
    %p187 = scmp.eq.s32.totalorder %s18, 1
    %p188 = por %p186, %p187
    %p189 = scmp.ne.s32.totalorder %s178, %s179
    %p190 = scmp.eq.s32.totalorder %s18, 0
    %p191 = por %p189, %p190
    %p192 = scmp.ne.s32.totalorder %s178, %s179
    %p193 = scmp.eq.s32.totalorder %s19, 1
    %p194 = por %p192, %p193
    %p196 = scmp.ne.s32.totalorder %s179, %s195
    %p197 = scmp.eq.s32.totalorder %s19, 0
    %p198 = por %p196, %p197
    %p199 = scmp.le.s32.totalorder 1, %s13
    %p200 = scmp.lt.s32.totalorder %s13, 3
    %p201 = pnand %p199, %p200
    %p202 = pneg %p201
    // Predicated region
    $region9: #{sample_attention_forward.1} parent=5 // pred_check
      _
    $region10: #{sample_attention_forward.1} parent=5 // pred_check_branch
      %204 = sbr.rel (%p201) target = $region12
    $region11: #{sample_attention_forward.1} parent=5 // pred_region
      %s205 = ssub.s32 %s13, 1
      // Predicated region
      $region13: #{sample_attention_forward.1} parent=11 // pred_check
        %p206 = pneg %p60
      $region14: #{sample_attention_forward.1} parent=11 // pred_check_branch
        %208 = sbr.rel (%p206) target = $region16
      $region15: #{sample_attention_forward.1} parent=11 // pred_region
        _
      $region16: #{sample_attention_forward.1} parent=11 // pred_fallthru
        _
      // Predicated region
      $region17: #{sample_attention_forward.1} parent=11 // pred_check
        %p209 = pneg %p81
      $region18: #{sample_attention_forward.1} parent=11 // pred_check_branch
        %211 = sbr.rel (%p209) target = $region20
      $region19: #{sample_attention_forward.1} parent=11 // pred_region
        _
      $region20: #{sample_attention_forward.1} parent=11 // pred_fallthru
        _
      // Predicated region
      $region21: #{sample_attention_forward.1} parent=11 // pred_check
        %p212 = pneg %p102
      $region22: #{sample_attention_forward.1} parent=11 // pred_check_branch
        %214 = sbr.rel (%p212) target = $region24
      $region23: #{sample_attention_forward.1} parent=11 // pred_region
        _
      $region24: #{sample_attention_forward.1} parent=11 // pred_fallthru
        _
      // Predicated region
      $region25: #{sample_attention_forward.1} parent=11 // pred_check
        %p215 = pneg %p123
      $region26: #{sample_attention_forward.1} parent=11 // pred_check_branch
        %217 = sbr.rel (%p215) target = $region28
      $region27: #{sample_attention_forward.1} parent=11 // pred_region
        _
      $region28: #{sample_attention_forward.1} parent=11 // pred_fallthru
        _
      // Predicated region
      $region29: #{sample_attention_forward.1} parent=11 // pred_check
        %p218 = pneg %p144
      $region30: #{sample_attention_forward.1} parent=11 // pred_check_branch
        %220 = sbr.rel (%p218) target = $region32
      $region31: #{sample_attention_forward.1} parent=11 // pred_region
        _
      $region32: #{sample_attention_forward.1} parent=11 // pred_fallthru
        _
      // Predicated region
      $region33: #{sample_attention_forward.1} parent=11 // pred_check
        %p221 = pneg %p165
      $region34: #{sample_attention_forward.1} parent=11 // pred_check_branch
        %223 = sbr.rel (%p221) target = $region36
      $region35: #{sample_attention_forward.1} parent=11 // pred_region
        _
      $region36: #{sample_attention_forward.1} parent=11 // pred_fallthru
        _
    $region12: #{sample_attention_forward.1} parent=5 // pred_fallthru
      _
    %p224 = scmp.lt.s32.totalorder %s13, 2
    // Predicated region
    $region37: #{sample_attention_forward.1} parent=5 // pred_check
      %p225 = pneg %p224
    $region38: #{sample_attention_forward.1} parent=5 // pred_check_branch
      %227 = sbr.rel (%p225) target = $region40
    $region39: #{sample_attention_forward.1} parent=5 // pred_region
      // Predicated region
      $region41: #{sample_attention_forward.1} parent=39 // pred_check
        %p228 = pneg %p33
      $region42: #{sample_attention_forward.1} parent=39 // pred_check_branch
        %230 = sbr.rel (%p228) target = $region44
      $region43: #{sample_attention_forward.1} parent=39 // pred_region
        %p231 = scmp.lt.s32.totalorder %s13, 1
        %s232 = scalar_select %p231, %s13, 1
        %s233 = smul.addr %s232, 8
        %s234 = smul.addr %s233, 8
        %s235 = scalar_lea.vmem %s0, %s234
      $region44: #{sample_attention_forward.1} parent=39 // pred_fallthru
        _
    $region40: #{sample_attention_forward.1} parent=5 // pred_fallthru
      _
    %p236 = scmp.le.s32.totalorder 1, %s13
    %p237 = scmp.lt.s32.totalorder %s13, 3
    %p238 = pnand %p236, %p237
    %p239 = pneg %p238
    // Predicated region
    $region45: #{sample_attention_forward.1} parent=5 // pred_check
      _
    $region46: #{sample_attention_forward.1} parent=5 // pred_check_branch
      %241 = sbr.rel (%p238) target = $region48
    $region47: #{sample_attention_forward.1} parent=5 // pred_region
      %s242 = ssub.s32 %s13, 1
      %p243 = scmp.lt.s32.totalorder %s18, 1
      %s244 = scalar_select %p243, %s18, 1
      %s245 = smul.addr %s244, 8
      %s246 = smul.addr %s245, 8
      %s247 = scalar_lea.vmem %s0, %s246
      %p248 = pneg %p39
      %p249 = pneg %p36
      %p250 = pneg %p60
      %p251 = pneg %p57
      %p252 = pneg %p81
      %p253 = pneg %p78
      %p254 = pneg %p102
      %p255 = pneg %p99
      %p256 = pneg %p123
      %p257 = pneg %p120
      %p258 = pneg %p144
      %p259 = pneg %p141
      %p260 = pneg %p165
      %p261 = pneg %p162
      %p262 = pneg %p191
      %p263 = pneg %p188
      %p264 = scmp.lt.s32.totalorder %s18, 1
      %s265 = scalar_select %p264, %s18, 1
      %s266 = smul.addr %s265, 8
      %s267 = smul.addr %s266, 8
      %s268 = scalar_lea.vmem %s7, %s267
      %p269 = scmp.lt.s32.totalorder %s18, 1
      %s270 = scalar_select %p269, %s18, 1
      %s271 = smul.addr %s270, 8
      %s272 = smul.addr %s271, 8
      %s273 = scalar_lea.vmem %s0, %s272
      %p274 = scmp.lt.s32.totalorder %s18, 1
      %s275 = scalar_select %p274, %s18, 1
      %s276 = smul.addr %s275, 8
      %s277 = smul.addr %s276, 8
      %s278 = scalar_lea.vmem %s7, %s277
      %v280 = vld [vmem:[%s273] sm:$0xff]
      %v281 = vld [vmem:[%s273 + $0x8] sm:$0xff]
      %v282 = vld [vmem:[%s273 + $0x10] sm:$0xff]
      %v283 = vld [vmem:[%s273 + $0x18] sm:$0xff]
      %v284 = vld [vmem:[%s273 + $0x20] sm:$0xff]
      %v285 = vld [vmem:[%s273 + $0x28] sm:$0xff]
      %v286 = vld [vmem:[%s273 + $0x30] sm:$0xff]
      %v287 = vld [vmem:[%s273 + $0x38] sm:$0xff]
      %v288 = vpack.c.bf16 %v281, %v280
      %v289 = vpack.c.bf16 %v283, %v282
      %v290 = vpack.c.bf16 %v285, %v284
      %v291 = vpack.c.bf16 %v287, %v286
      %v292 = vld [vmem:[%s1] sm:$0xf]
      %v293 = vld [vmem:[%s1 + $0x4] sm:$0xf]
      %v294 = vld [vmem:[%s1 + $0x8] sm:$0xf]
      %v295 = vld [vmem:[%s1 + $0xc] sm:$0xf]
      %v296 = vld [vmem:[%s1 + $0x10] sm:$0xf]
      %v297 = vld [vmem:[%s2] sm:$0x1]
      %v299 = vperm.slane %v297, 0
      %v306 = vunpack.c.l.b16 %v292
      %v307 = vunpack.c.l.b16 %v293
      %v308 = vunpack.c.l.b16 %v294
      %v309 = vunpack.c.l.b16 %v295
      %v310 = vunpack.c.l.b16 %v296
      %v311 = vpack.c.b16 %v307, %v306
      %v312 = vpack.c.b16 %v309, %v308
      %v313 = vpack.c.b16 %v310, %v310
      %vm316 = vcmask 326656
      %v318 = vsel %vm316, %v288, 0
      %v321 = vsel %vm316, %v289, 0
      %v324 = vsel %vm316, %v290, 0
      %v327 = vsel %vm316, %v291, 0
      %vm329 = vcmask 1043456
      %v331 = vsel %vm329, %v313, 0
      %333 = vmatpush.bf16.msra.mxu0 0
      %334 = vmatpush.bf16.msra.mxu0 0
      %335 = vmatpush.bf16.msra.mxu0 0
      %336 = vmatpush.bf16.msra.mxu0 0
      %337 = vmatpush.bf16.msra.mxu0 0
      %338 = vmatpush.bf16.msra.mxu0 %v331
      %339 = vmatpush.bf16.msra.mxu0 %v312
      %340 = vmatpush.bf16.msra.mxu0 %v311
      %341 = vmatmul.bf16.gmra.mxu0 %v318
      %v342 = vpop.f32.mrf.mxu0
      %v343 = vadd.f32 %v299, %v342
      %v344 = vpop.f32.mrf.mxu0
      %v345 = vadd.f32 %v299, %v344
      %346 = vmatmul.bf16.gmra.mxu0 %v321
      %v347 = vpop.f32.mrf.mxu0
      %v348 = vadd.f32 %v299, %v347
      %v349 = vpop.f32.mrf.mxu0
      %v350 = vadd.f32 %v299, %v349
      %351 = vmatmul.bf16.gmra.mxu0 %v324
      %v352 = vpop.f32.mrf.mxu0
      %v353 = vadd.f32 %v299, %v352
      %v354 = vpop.f32.mrf.mxu0
      %v355 = vadd.f32 %v299, %v354
      %356 = vmatmul.bf16.gmra.mxu0 %v327
      %v357 = vpop.f32.mrf.mxu0
      %v358 = vadd.f32 %v299, %v357
      %v359 = vpop.f32.mrf.mxu0
      %v360 = vadd.f32 %v299, %v359
      %361 = vdwg.mxu0
      %v362 = vld [vmem:[%s3] sm:$0xff]
      %v363 = vld [vmem:[%s3 + $0x8] sm:$0xff]
      %v364 = vld [vmem:[%s3 + $0x10] sm:$0xff]
      %v365 = vld [vmem:[%s3 + $0x18] sm:$0xff]
      %v366 = vld [vmem:[%s3 + $0x20] sm:$0xff]
      %v367 = vld [vmem:[%s4] sm:$0x1]
      %v369 = vperm.slane %v367, 0
      %v372 = vsel %vm316, %v280, 0
      %v375 = vsel %vm316, %v281, 0
      %v378 = vsel %vm316, %v282, 0
      %v381 = vsel %vm316, %v283, 0
      %v384 = vsel %vm316, %v284, 0
      %v387 = vsel %vm316, %v285, 0
      %v390 = vsel %vm316, %v286, 0
      %v393 = vsel %vm316, %v287, 0
      %395 = vmatpush.msra.mxu0 0.0
      %396 = vmatpush.msra.mxu0 0.0
      %397 = vmatpush.msra.mxu0 0.0
      %398 = vmatpush.msra.mxu0 0.0
      %399 = vmatpush.msra.mxu0 0.0
      %400 = vmatpush.msra.mxu0 0.0
      %401 = vmatpush.msra.mxu0 0.0
      %402 = vmatpush.msra.mxu0 0.0
      %403 = vmatpush.msra.mxu0 0.0
      %404 = vmatpush.msra.mxu0 0.0
      %405 = vmatpush.msra.mxu0 0.0
      %406 = vmatpush.msra.mxu0 %v366
      %407 = vmatpush.msra.mxu0 %v365
      %408 = vmatpush.msra.mxu0 %v364
      %409 = vmatpush.msra.mxu0 %v363
      %410 = vmatpush.msra.mxu0 %v362
      %411 = vmatmul.f32.gmra.mxu0 %v372
      %v412 = vpop.f32.mrf.mxu0
      %v413 = vadd.f32 %v369, %v412
      %414 = vmatmul.f32.gmra.mxu0 %v375
      %v415 = vpop.f32.mrf.mxu0
      %v416 = vadd.f32 %v369, %v415
      %417 = vmatmul.f32.gmra.mxu0 %v378
      %v418 = vpop.f32.mrf.mxu0
      %v419 = vadd.f32 %v369, %v418
      %420 = vmatmul.f32.gmra.mxu0 %v381
      %v421 = vpop.f32.mrf.mxu0
      %v422 = vadd.f32 %v369, %v421
      %423 = vmatmul.f32.gmra.mxu0 %v384
      %v424 = vpop.f32.mrf.mxu0
      %v425 = vadd.f32 %v369, %v424
      %426 = vmatmul.f32.gmra.mxu0 %v387
      %v427 = vpop.f32.mrf.mxu0
      %v428 = vadd.f32 %v369, %v427
      %429 = vmatmul.f32.gmra.mxu0 %v390
      %v430 = vpop.f32.mrf.mxu0
      %v431 = vadd.f32 %v369, %v430
      %432 = vmatmul.f32.gmra.mxu0 %v393
      %v433 = vpop.f32.mrf.mxu0
      %v434 = vadd.f32 %v369, %v433
      %435 = vdwg.mxu0
      %v436 = vlaneseq
      %v437 = vand.u32 %v436, 127
      %v438 = vcvt.s32.f32 %v437
      %v439 = vrcp.pop 8.0
      %v440 = vmul.f32 8.0, %v439
      %v441 = vsub.f32 1.0, %v440
      %v442 = vmul.f32 %v439, %v441
      %v443 = vadd.f32 %v439, %v442
      %vm444 = vweird.f32 %v439
      %v445 = vsel %vm444, %v439, %v443
      %v446 = vmul.f32 %v438, %v445
      %v447 = vfloor.f32 %v446
      %v448 = vmul.f32 %v447, 8.0
      %v449 = vsub.f32 %v438, %v448
      %v450 = vpack.c.bf16 %v343, %v343
      %v451 = vpack.c.bf16 %v345, %v345
      %v452 = vpack.c.bf16 %v348, %v348
      %v453 = vpack.c.bf16 %v350, %v350
      %v454 = vpack.c.bf16 %v353, %v353
      %v455 = vpack.c.bf16 %v355, %v355
      %v456 = vpack.c.bf16 %v358, %v358
      %v457 = vpack.c.bf16 %v360, %v360
      %459 = vset.pattern.permute.xlu0 0
      %460 = vperm.xlu0 %459, %v413
      %v461 = vpop.permute.xlu0 %460
      %464 = vset.pattern.permute.xlu0 0
      %465 = vperm.xlu0 %464, %v416
      %v466 = vpop.permute.xlu0 %465
      %469 = vset.pattern.permute.xlu0 0
      %470 = vperm.xlu0 %469, %v419
      %v471 = vpop.permute.xlu0 %470
      %474 = vset.pattern.permute.xlu0 0
      %475 = vperm.xlu0 %474, %v422
      %v476 = vpop.permute.xlu0 %475
      %479 = vset.pattern.permute.xlu0 0
      %480 = vperm.xlu0 %479, %v425
      %v481 = vpop.permute.xlu0 %480
      %484 = vset.pattern.permute.xlu0 0
      %485 = vperm.xlu0 %484, %v428
      %v486 = vpop.permute.xlu0 %485
      %489 = vset.pattern.permute.xlu0 0
      %490 = vperm.xlu0 %489, %v431
      %v491 = vpop.permute.xlu0 %490
      %494 = vset.pattern.permute.xlu0 0
      %495 = vperm.xlu0 %494, %v434
      %v496 = vpop.permute.xlu0 %495
      %v498 = vsub.f32 %v461, %v449
      %v499 = vsub.f32 %v466, %v449
      %v500 = vsub.f32 %v471, %v449
      %v501 = vsub.f32 %v476, %v449
      %v502 = vsub.f32 %v481, %v449
      %v503 = vsub.f32 %v486, %v449
      %v504 = vsub.f32 %v491, %v449
      %v505 = vsub.f32 %v496, %v449
      %v506 = vand.u32 2147483647, %v498
      %v507 = vand.u32 2147483647, %v499
      %v508 = vand.u32 2147483647, %v500
      %v509 = vand.u32 2147483647, %v501
      %v510 = vand.u32 2147483647, %v502
      %v511 = vand.u32 2147483647, %v503
      %v512 = vand.u32 2147483647, %v504
      %v513 = vand.u32 2147483647, %v505
      %v514 = vsub.f32 1.0, %v506
      %v515 = vsub.f32 1.0, %v507
      %v516 = vsub.f32 1.0, %v508
      %v517 = vsub.f32 1.0, %v509
      %v518 = vsub.f32 1.0, %v510
      %v519 = vsub.f32 1.0, %v511
      %v520 = vsub.f32 1.0, %v512
      %v521 = vsub.f32 1.0, %v513
      %v522 = vmax.f32 %v514, 0.0
      %v523 = vmax.f32 %v515, 0.0
      %v524 = vmax.f32 %v516, 0.0
      %v525 = vmax.f32 %v517, 0.0
      %v526 = vmax.f32 %v518, 0.0
      %v527 = vmax.f32 %v519, 0.0
      %v528 = vmax.f32 %v520, 0.0
      %v529 = vmax.f32 %v521, 0.0
      %530 = vset.pattern.permute.xlu0 4
      %531 = vperm.xlu0 %530, %v413
      %v532 = vpop.permute.xlu0 %531
      %534 = vset.pattern.permute.xlu0 4
      %535 = vperm.xlu0 %534, %v416
      %v536 = vpop.permute.xlu0 %535
      %538 = vset.pattern.permute.xlu0 4
      %539 = vperm.xlu0 %538, %v419
      %v540 = vpop.permute.xlu0 %539
      %542 = vset.pattern.permute.xlu0 4
      %543 = vperm.xlu0 %542, %v422
      %v544 = vpop.permute.xlu0 %543
      %546 = vset.pattern.permute.xlu0 4
      %547 = vperm.xlu0 %546, %v425
      %v548 = vpop.permute.xlu0 %547
      %550 = vset.pattern.permute.xlu0 4
      %551 = vperm.xlu0 %550, %v428
      %v552 = vpop.permute.xlu0 %551
      %554 = vset.pattern.permute.xlu0 4
      %555 = vperm.xlu0 %554, %v431
      %v556 = vpop.permute.xlu0 %555
      %558 = vset.pattern.permute.xlu0 4
      %559 = vperm.xlu0 %558, %v434
      %v560 = vpop.permute.xlu0 %559
      %v562 = vsub.f32 %v532, %v447
      %v563 = vsub.f32 %v536, %v447
      %v564 = vsub.f32 %v540, %v447
      %v565 = vsub.f32 %v544, %v447
      %v566 = vsub.f32 %v548, %v447
      %v567 = vsub.f32 %v552, %v447
      %v568 = vsub.f32 %v556, %v447
      %v569 = vsub.f32 %v560, %v447
      %v570 = vand.u32 2147483647, %v562
      %v571 = vand.u32 2147483647, %v563
      %v572 = vand.u32 2147483647, %v564
      %v573 = vand.u32 2147483647, %v565
      %v574 = vand.u32 2147483647, %v566
      %v575 = vand.u32 2147483647, %v567
      %v576 = vand.u32 2147483647, %v568
      %v577 = vand.u32 2147483647, %v569
      %v578 = vsub.f32 1.0, %v570
      %v579 = vsub.f32 1.0, %v571
      %v580 = vsub.f32 1.0, %v572
      %v581 = vsub.f32 1.0, %v573
      %v582 = vsub.f32 1.0, %v574
      %v583 = vsub.f32 1.0, %v575
      %v584 = vsub.f32 1.0, %v576
      %v585 = vsub.f32 1.0, %v577
      %v586 = vmax.f32 %v578, 0.0
      %v587 = vmax.f32 %v579, 0.0
      %v588 = vmax.f32 %v580, 0.0
      %v589 = vmax.f32 %v581, 0.0
      %v590 = vmax.f32 %v582, 0.0
      %v591 = vmax.f32 %v583, 0.0
      %v592 = vmax.f32 %v584, 0.0
      %v593 = vmax.f32 %v585, 0.0
      %v594 = vmul.f32 %v522, %v586
      %v595 = vmul.f32 %v523, %v587
      %v596 = vmul.f32 %v524, %v588
      %v597 = vmul.f32 %v525, %v589
      %v598 = vmul.f32 %v526, %v590
      %v599 = vmul.f32 %v527, %v591
      %v600 = vmul.f32 %v528, %v592
      %v601 = vmul.f32 %v529, %v593
      %v602 = vpack.c.bf16 %v594, %v594
      %v603 = vpack.c.bf16 %v595, %v595
      %v604 = vpack.c.bf16 %v596, %v596
      %v605 = vpack.c.bf16 %v597, %v597
      %v606 = vpack.c.bf16 %v598, %v598
      %v607 = vpack.c.bf16 %v599, %v599
      %v608 = vpack.c.bf16 %v600, %v600
      %v609 = vpack.c.bf16 %v601, %v601
      %vm610 = vcmask 519168
      %611 = vst.msk [vmem:[#allocation2] sm:$0xf] %vm610, %v602
      %612 = vst.msk [vmem:[#allocation2 + $0x4] sm:$0xf] %vm610, %v603
      %613 = vst.msk [vmem:[#allocation2 + $0x8] sm:$0xf] %vm610, %v604
      %614 = vst.msk [vmem:[#allocation2 + $0xc] sm:$0xf] %vm610, %v605
      %615 = vst.msk [vmem:[#allocation2 + $0x10] sm:$0xf] %vm610, %v606
      %616 = vst.msk [vmem:[#allocation2 + $0x14] sm:$0xf] %vm610, %v607
      %617 = vst.msk [vmem:[#allocation2 + $0x18] sm:$0xf] %vm610, %v608
      %618 = vst.msk [vmem:[#allocation2 + $0x1c] sm:$0xf] %vm610, %v609
      %619 = vset.pattern.permute.xlu0 1
      %620 = vperm.xlu0 %619, %v413
      %v621 = vpop.permute.xlu0 %620
      %623 = vset.pattern.permute.xlu0 1
      %624 = vperm.xlu0 %623, %v416
      %v625 = vpop.permute.xlu0 %624
      %627 = vset.pattern.permute.xlu0 1
      %628 = vperm.xlu0 %627, %v419
      %v629 = vpop.permute.xlu0 %628
      %631 = vset.pattern.permute.xlu0 1
      %632 = vperm.xlu0 %631, %v422
      %v633 = vpop.permute.xlu0 %632
      %635 = vset.pattern.permute.xlu0 1
      %636 = vperm.xlu0 %635, %v425
      %v637 = vpop.permute.xlu0 %636
      %639 = vset.pattern.permute.xlu0 1
      %640 = vperm.xlu0 %639, %v428
      %v641 = vpop.permute.xlu0 %640
      %643 = vset.pattern.permute.xlu0 1
      %644 = vperm.xlu0 %643, %v431
      %v645 = vpop.permute.xlu0 %644
      %647 = vset.pattern.permute.xlu0 1
      %648 = vperm.xlu0 %647, %v434
      %v649 = vpop.permute.xlu0 %648
      %v651 = vsub.f32 %v621, %v449
      %v652 = vsub.f32 %v625, %v449
      %v653 = vsub.f32 %v629, %v449
      %v654 = vsub.f32 %v633, %v449
      %v655 = vsub.f32 %v637, %v449
      %v656 = vsub.f32 %v641, %v449
      %v657 = vsub.f32 %v645, %v449
      %v658 = vsub.f32 %v649, %v449
      %v659 = vand.u32 2147483647, %v651
      %v660 = vand.u32 2147483647, %v652
      %v661 = vand.u32 2147483647, %v653
      %v662 = vand.u32 2147483647, %v654
      %v663 = vand.u32 2147483647, %v655
      %v664 = vand.u32 2147483647, %v656
      %v665 = vand.u32 2147483647, %v657
      %v666 = vand.u32 2147483647, %v658
      %v667 = vsub.f32 1.0, %v659
      %v668 = vsub.f32 1.0, %v660
      %v669 = vsub.f32 1.0, %v661
      %v670 = vsub.f32 1.0, %v662
      %v671 = vsub.f32 1.0, %v663
      %v672 = vsub.f32 1.0, %v664
      %v673 = vsub.f32 1.0, %v665
      %v674 = vsub.f32 1.0, %v666
      %v675 = vmax.f32 %v667, 0.0
      %v676 = vmax.f32 %v668, 0.0
      %v677 = vmax.f32 %v669, 0.0
      %v678 = vmax.f32 %v670, 0.0
      %v679 = vmax.f32 %v671, 0.0
      %v680 = vmax.f32 %v672, 0.0
      %v681 = vmax.f32 %v673, 0.0
      %v682 = vmax.f32 %v674, 0.0
      %683 = vset.pattern.permute.xlu0 5
      %684 = vperm.xlu0 %683, %v413
      %v685 = vpop.permute.xlu0 %684
      %687 = vset.pattern.permute.xlu0 5
      %688 = vperm.xlu0 %687, %v416
      %v689 = vpop.permute.xlu0 %688
      %691 = vset.pattern.permute.xlu0 5
      %692 = vperm.xlu0 %691, %v419
      %v693 = vpop.permute.xlu0 %692
      %695 = vset.pattern.permute.xlu0 5
      %696 = vperm.xlu0 %695, %v422
      %v697 = vpop.permute.xlu0 %696
      %699 = vset.pattern.permute.xlu0 5
      %700 = vperm.xlu0 %699, %v425
      %v701 = vpop.permute.xlu0 %700
      %703 = vset.pattern.permute.xlu0 5
      %704 = vperm.xlu0 %703, %v428
      %v705 = vpop.permute.xlu0 %704
      %707 = vset.pattern.permute.xlu0 5
      %708 = vperm.xlu0 %707, %v431
      %v709 = vpop.permute.xlu0 %708
      %711 = vset.pattern.permute.xlu0 5
      %712 = vperm.xlu0 %711, %v434
      %v713 = vpop.permute.xlu0 %712
      %v715 = vsub.f32 %v685, %v447
      %v716 = vsub.f32 %v689, %v447
      %v717 = vsub.f32 %v693, %v447
      %v718 = vsub.f32 %v697, %v447
      %v719 = vsub.f32 %v701, %v447
      %v720 = vsub.f32 %v705, %v447
      %v721 = vsub.f32 %v709, %v447
      %v722 = vsub.f32 %v713, %v447
      %v723 = vand.u32 2147483647, %v715
      %v724 = vand.u32 2147483647, %v716
      %v725 = vand.u32 2147483647, %v717
      %v726 = vand.u32 2147483647, %v718
      %v727 = vand.u32 2147483647, %v719
      %v728 = vand.u32 2147483647, %v720
      %v729 = vand.u32 2147483647, %v721
      %v730 = vand.u32 2147483647, %v722
      %v731 = vsub.f32 1.0, %v723
      %v732 = vsub.f32 1.0, %v724
      %v733 = vsub.f32 1.0, %v725
      %v734 = vsub.f32 1.0, %v726
      %v735 = vsub.f32 1.0, %v727
      %v736 = vsub.f32 1.0, %v728
      %v737 = vsub.f32 1.0, %v729
      %v738 = vsub.f32 1.0, %v730
      %v739 = vmax.f32 %v731, 0.0
      %v740 = vmax.f32 %v732, 0.0
      %v741 = vmax.f32 %v733, 0.0
      %v742 = vmax.f32 %v734, 0.0
      %v743 = vmax.f32 %v735, 0.0
      %v744 = vmax.f32 %v736, 0.0
      %v745 = vmax.f32 %v737, 0.0
      %v746 = vmax.f32 %v738, 0.0
      %v747 = vmul.f32 %v675, %v739
      %v748 = vmul.f32 %v676, %v740
      %v749 = vmul.f32 %v677, %v741
      %v750 = vmul.f32 %v678, %v742
      %v751 = vmul.f32 %v679, %v743
      %v752 = vmul.f32 %v680, %v744
      %v753 = vmul.f32 %v681, %v745
      %v754 = vmul.f32 %v682, %v746
      %v755 = vpack.c.bf16 %v747, %v747
      %v756 = vpack.c.bf16 %v748, %v748
      %v757 = vpack.c.bf16 %v749, %v749
      %v758 = vpack.c.bf16 %v750, %v750
      %v759 = vpack.c.bf16 %v751, %v751
      %v760 = vpack.c.bf16 %v752, %v752
      %v761 = vpack.c.bf16 %v753, %v753
      %v762 = vpack.c.bf16 %v754, %v754
      %763 = vst.msk [vmem:[#allocation2 + $0x20] sm:$0xf] %vm610, %v755
      %764 = vst.msk [vmem:[#allocation2 + $0x24] sm:$0xf] %vm610, %v756
      %765 = vst.msk [vmem:[#allocation2 + $0x28] sm:$0xf] %vm610, %v757
      %766 = vst.msk [vmem:[#allocation2 + $0x2c] sm:$0xf] %vm610, %v758
      %767 = vst.msk [vmem:[#allocation2 + $0x30] sm:$0xf] %vm610, %v759
      %768 = vst.msk [vmem:[#allocation2 + $0x34] sm:$0xf] %vm610, %v760
      %769 = vst.msk [vmem:[#allocation2 + $0x38] sm:$0xf] %vm610, %v761
      %770 = vst.msk [vmem:[#allocation2 + $0x3c] sm:$0xf] %vm610, %v762
      %771 = vset.pattern.permute.xlu0 2
      %772 = vperm.xlu0 %771, %v413
      %v773 = vpop.permute.xlu0 %772
      %775 = vset.pattern.permute.xlu0 2
      %776 = vperm.xlu0 %775, %v416
      %v777 = vpop.permute.xlu0 %776
      %779 = vset.pattern.permute.xlu0 2
      %780 = vperm.xlu0 %779, %v419
      %v781 = vpop.permute.xlu0 %780
      %783 = vset.pattern.permute.xlu0 2
      %784 = vperm.xlu0 %783, %v422
      %v785 = vpop.permute.xlu0 %784
      %787 = vset.pattern.permute.xlu0 2
      %788 = vperm.xlu0 %787, %v425
      %v789 = vpop.permute.xlu0 %788
      %791 = vset.pattern.permute.xlu0 2
      %792 = vperm.xlu0 %791, %v428
      %v793 = vpop.permute.xlu0 %792
      %795 = vset.pattern.permute.xlu0 2
      %796 = vperm.xlu0 %795, %v431
      %v797 = vpop.permute.xlu0 %796
      %799 = vset.pattern.permute.xlu0 2
      %800 = vperm.xlu0 %799, %v434
      %v801 = vpop.permute.xlu0 %800
      %v803 = vsub.f32 %v773, %v449
      %v804 = vsub.f32 %v777, %v449
      %v805 = vsub.f32 %v781, %v449
      %v806 = vsub.f32 %v785, %v449
      %v807 = vsub.f32 %v789, %v449
      %v808 = vsub.f32 %v793, %v449
      %v809 = vsub.f32 %v797, %v449
      %v810 = vsub.f32 %v801, %v449
      %v811 = vand.u32 2147483647, %v803
      %v812 = vand.u32 2147483647, %v804
      %v813 = vand.u32 2147483647, %v805
      %v814 = vand.u32 2147483647, %v806
      %v815 = vand.u32 2147483647, %v807
      %v816 = vand.u32 2147483647, %v808
      %v817 = vand.u32 2147483647, %v809
      %v818 = vand.u32 2147483647, %v810
      %v819 = vsub.f32 1.0, %v811
      %v820 = vsub.f32 1.0, %v812
      %v821 = vsub.f32 1.0, %v813
      %v822 = vsub.f32 1.0, %v814
      %v823 = vsub.f32 1.0, %v815
      %v824 = vsub.f32 1.0, %v816
      %v825 = vsub.f32 1.0, %v817
      %v826 = vsub.f32 1.0, %v818
      %v827 = vmax.f32 %v819, 0.0
      %v828 = vmax.f32 %v820, 0.0
      %v829 = vmax.f32 %v821, 0.0
      %v830 = vmax.f32 %v822, 0.0
      %v831 = vmax.f32 %v823, 0.0
      %v832 = vmax.f32 %v824, 0.0
      %v833 = vmax.f32 %v825, 0.0
      %v834 = vmax.f32 %v826, 0.0
      %835 = vset.pattern.permute.xlu0 6
      %836 = vperm.xlu0 %835, %v413
      %v837 = vpop.permute.xlu0 %836
      %839 = vset.pattern.permute.xlu0 6
      %840 = vperm.xlu0 %839, %v416
      %v841 = vpop.permute.xlu0 %840
      %843 = vset.pattern.permute.xlu0 6
      %844 = vperm.xlu0 %843, %v419
      %v845 = vpop.permute.xlu0 %844
      %847 = vset.pattern.permute.xlu0 6
      %848 = vperm.xlu0 %847, %v422
      %v849 = vpop.permute.xlu0 %848
      %851 = vset.pattern.permute.xlu0 6
      %852 = vperm.xlu0 %851, %v425
      %v853 = vpop.permute.xlu0 %852
      %855 = vset.pattern.permute.xlu0 6
      %856 = vperm.xlu0 %855, %v428
      %v857 = vpop.permute.xlu0 %856
      %859 = vset.pattern.permute.xlu0 6
      %860 = vperm.xlu0 %859, %v431
      %v861 = vpop.permute.xlu0 %860
      %863 = vset.pattern.permute.xlu0 6
      %864 = vperm.xlu0 %863, %v434
      %v865 = vpop.permute.xlu0 %864
      %v867 = vsub.f32 %v837, %v447
      %v868 = vsub.f32 %v841, %v447
      %v869 = vsub.f32 %v845, %v447
      %v870 = vsub.f32 %v849, %v447
      %v871 = vsub.f32 %v853, %v447
      %v872 = vsub.f32 %v857, %v447
      %v873 = vsub.f32 %v861, %v447
      %v874 = vsub.f32 %v865, %v447
      %v875 = vand.u32 2147483647, %v867
      %v876 = vand.u32 2147483647, %v868
      %v877 = vand.u32 2147483647, %v869
      %v878 = vand.u32 2147483647, %v870
      %v879 = vand.u32 2147483647, %v871
      %v880 = vand.u32 2147483647, %v872
      %v881 = vand.u32 2147483647, %v873
      %v882 = vand.u32 2147483647, %v874
      %v883 = vsub.f32 1.0, %v875
      %v884 = vsub.f32 1.0, %v876
      %v885 = vsub.f32 1.0, %v877
      %v886 = vsub.f32 1.0, %v878
      %v887 = vsub.f32 1.0, %v879
      %v888 = vsub.f32 1.0, %v880
      %v889 = vsub.f32 1.0, %v881
      %v890 = vsub.f32 1.0, %v882
      %v891 = vmax.f32 %v883, 0.0
      %v892 = vmax.f32 %v884, 0.0
      %v893 = vmax.f32 %v885, 0.0
      %v894 = vmax.f32 %v886, 0.0
      %v895 = vmax.f32 %v887, 0.0
      %v896 = vmax.f32 %v888, 0.0
      %v897 = vmax.f32 %v889, 0.0
      %v898 = vmax.f32 %v890, 0.0
      %v899 = vmul.f32 %v827, %v891
      %v900 = vmul.f32 %v828, %v892
      %v901 = vmul.f32 %v829, %v893
      %v902 = vmul.f32 %v830, %v894
      %v903 = vmul.f32 %v831, %v895
      %v904 = vmul.f32 %v832, %v896
      %v905 = vmul.f32 %v833, %v897
      %v906 = vmul.f32 %v834, %v898
      %v907 = vpack.c.bf16 %v899, %v899
      %v908 = vpack.c.bf16 %v900, %v900
      %v909 = vpack.c.bf16 %v901, %v901
      %v910 = vpack.c.bf16 %v902, %v902
      %v911 = vpack.c.bf16 %v903, %v903
      %v912 = vpack.c.bf16 %v904, %v904
      %v913 = vpack.c.bf16 %v905, %v905
      %v914 = vpack.c.bf16 %v906, %v906
      %915 = vst.msk [vmem:[#allocation2 + $0x40] sm:$0xf] %vm610, %v907
      %916 = vst.msk [vmem:[#allocation2 + $0x44] sm:$0xf] %vm610, %v908
      %917 = vst.msk [vmem:[#allocation2 + $0x48] sm:$0xf] %vm610, %v909
      %918 = vst.msk [vmem:[#allocation2 + $0x4c] sm:$0xf] %vm610, %v910
      %919 = vst.msk [vmem:[#allocation2 + $0x50] sm:$0xf] %vm610, %v911
      %920 = vst.msk [vmem:[#allocation2 + $0x54] sm:$0xf] %vm610, %v912
      %921 = vst.msk [vmem:[#allocation2 + $0x58] sm:$0xf] %vm610, %v913
      %922 = vst.msk [vmem:[#allocation2 + $0x5c] sm:$0xf] %vm610, %v914
      %923 = vset.pattern.permute.xlu0 3
      %924 = vperm.xlu0 %923, %v413
      %v925 = vpop.permute.xlu0 %924
      %927 = vset.pattern.permute.xlu0 3
      %928 = vperm.xlu0 %927, %v416
      %v929 = vpop.permute.xlu0 %928
      %931 = vset.pattern.permute.xlu0 3
      %932 = vperm.xlu0 %931, %v419
      %v933 = vpop.permute.xlu0 %932
      %935 = vset.pattern.permute.xlu0 3
      %936 = vperm.xlu0 %935, %v422
      %v937 = vpop.permute.xlu0 %936
      %939 = vset.pattern.permute.xlu0 3
      %940 = vperm.xlu0 %939, %v425
      %v941 = vpop.permute.xlu0 %940
      %943 = vset.pattern.permute.xlu0 3
      %944 = vperm.xlu0 %943, %v428
      %v945 = vpop.permute.xlu0 %944
      %947 = vset.pattern.permute.xlu0 3
      %948 = vperm.xlu0 %947, %v431
      %v949 = vpop.permute.xlu0 %948
      %951 = vset.pattern.permute.xlu0 3
      %952 = vperm.xlu0 %951, %v434
      %v953 = vpop.permute.xlu0 %952
      %v955 = vsub.f32 %v925, %v449
      %v956 = vsub.f32 %v929, %v449
      %v957 = vsub.f32 %v933, %v449
      %v958 = vsub.f32 %v937, %v449
      %v959 = vsub.f32 %v941, %v449
      %v960 = vsub.f32 %v945, %v449
      %v961 = vsub.f32 %v949, %v449
      %v962 = vsub.f32 %v953, %v449
      %v963 = vand.u32 2147483647, %v955
      %v964 = vand.u32 2147483647, %v956
      %v965 = vand.u32 2147483647, %v957
      %v966 = vand.u32 2147483647, %v958
      %v967 = vand.u32 2147483647, %v959
      %v968 = vand.u32 2147483647, %v960
      %v969 = vand.u32 2147483647, %v961
      %v970 = vand.u32 2147483647, %v962
      %v971 = vsub.f32 1.0, %v963
      %v972 = vsub.f32 1.0, %v964
      %v973 = vsub.f32 1.0, %v965
      %v974 = vsub.f32 1.0, %v966
      %v975 = vsub.f32 1.0, %v967
      %v976 = vsub.f32 1.0, %v968
      %v977 = vsub.f32 1.0, %v969
      %v978 = vsub.f32 1.0, %v970
      %v979 = vmax.f32 %v971, 0.0
      %v980 = vmax.f32 %v972, 0.0
      %v981 = vmax.f32 %v973, 0.0
      %v982 = vmax.f32 %v974, 0.0
      %v983 = vmax.f32 %v975, 0.0
      %v984 = vmax.f32 %v976, 0.0
      %v985 = vmax.f32 %v977, 0.0
      %v986 = vmax.f32 %v978, 0.0
      %987 = vset.pattern.permute.xlu0 7
      %988 = vperm.xlu0 %987, %v413
      %v989 = vpop.permute.xlu0 %988
      %991 = vset.pattern.permute.xlu0 7
      %992 = vperm.xlu0 %991, %v416
      %v993 = vpop.permute.xlu0 %992
      %995 = vset.pattern.permute.xlu0 7
      %996 = vperm.xlu0 %995, %v419
      %v997 = vpop.permute.xlu0 %996
      %999 = vset.pattern.permute.xlu0 7
      %1000 = vperm.xlu0 %999, %v422
      %v1001 = vpop.permute.xlu0 %1000
      %1003 = vset.pattern.permute.xlu0 7
      %1004 = vperm.xlu0 %1003, %v425
      %v1005 = vpop.permute.xlu0 %1004
      %1007 = vset.pattern.permute.xlu0 7
      %1008 = vperm.xlu0 %1007, %v428
      %v1009 = vpop.permute.xlu0 %1008
      %1011 = vset.pattern.permute.xlu0 7
      %1012 = vperm.xlu0 %1011, %v431
      %v1013 = vpop.permute.xlu0 %1012
      %1015 = vset.pattern.permute.xlu0 7
      %1016 = vperm.xlu0 %1015, %v434
      %v1017 = vpop.permute.xlu0 %1016
      %v1019 = vsub.f32 %v989, %v447
      %v1020 = vsub.f32 %v993, %v447
      %v1021 = vsub.f32 %v997, %v447
      %v1022 = vsub.f32 %v1001, %v447
      %v1023 = vsub.f32 %v1005, %v447
      %v1024 = vsub.f32 %v1009, %v447
      %v1025 = vsub.f32 %v1013, %v447
      %v1026 = vsub.f32 %v1017, %v447
      %v1027 = vand.u32 2147483647, %v1019
      %v1028 = vand.u32 2147483647, %v1020
      %v1029 = vand.u32 2147483647, %v1021
      %v1030 = vand.u32 2147483647, %v1022
      %v1031 = vand.u32 2147483647, %v1023
      %v1032 = vand.u32 2147483647, %v1024
      %v1033 = vand.u32 2147483647, %v1025
      %v1034 = vand.u32 2147483647, %v1026
      %v1035 = vsub.f32 1.0, %v1027
      %v1036 = vsub.f32 1.0, %v1028
      %v1037 = vsub.f32 1.0, %v1029
      %v1038 = vsub.f32 1.0, %v1030
      %v1039 = vsub.f32 1.0, %v1031
      %v1040 = vsub.f32 1.0, %v1032
      %v1041 = vsub.f32 1.0, %v1033
      %v1042 = vsub.f32 1.0, %v1034
      %v1043 = vmax.f32 %v1035, 0.0
      %v1044 = vmax.f32 %v1036, 0.0
      %v1045 = vmax.f32 %v1037, 0.0
      %v1046 = vmax.f32 %v1038, 0.0
      %v1047 = vmax.f32 %v1039, 0.0
      %v1048 = vmax.f32 %v1040, 0.0
      %v1049 = vmax.f32 %v1041, 0.0
      %v1050 = vmax.f32 %v1042, 0.0
      %v1051 = vmul.f32 %v979, %v1043
      %v1052 = vmul.f32 %v980, %v1044
      %v1053 = vmul.f32 %v981, %v1045
      %v1054 = vmul.f32 %v982, %v1046
      %v1055 = vmul.f32 %v983, %v1047
      %v1056 = vmul.f32 %v984, %v1048
      %v1057 = vmul.f32 %v985, %v1049
      %v1058 = vmul.f32 %v986, %v1050
      %v1059 = vpack.c.bf16 %v1051, %v1051
      %v1060 = vpack.c.bf16 %v1052, %v1052
      %v1061 = vpack.c.bf16 %v1053, %v1053
      %v1062 = vpack.c.bf16 %v1054, %v1054
      %v1063 = vpack.c.bf16 %v1055, %v1055
      %v1064 = vpack.c.bf16 %v1056, %v1056
      %v1065 = vpack.c.bf16 %v1057, %v1057
      %v1066 = vpack.c.bf16 %v1058, %v1058
      %1067 = vst.msk [vmem:[#allocation2 + $0x60] sm:$0xf] %vm610, %v1059
      %1068 = vst.msk [vmem:[#allocation2 + $0x64] sm:$0xf] %vm610, %v1060
      %1069 = vst.msk [vmem:[#allocation2 + $0x68] sm:$0xf] %vm610, %v1061
      %1070 = vst.msk [vmem:[#allocation2 + $0x6c] sm:$0xf] %vm610, %v1062
      %1071 = vst.msk [vmem:[#allocation2 + $0x70] sm:$0xf] %vm610, %v1063
      %1072 = vst.msk [vmem:[#allocation2 + $0x74] sm:$0xf] %vm610, %v1064
      %1073 = vst.msk [vmem:[#allocation2 + $0x78] sm:$0xf] %vm610, %v1065
      %1074 = vst.msk [vmem:[#allocation2 + $0x7c] sm:$0xf] %vm610, %v1066
      %v1075 = vld [vmem:[#allocation2] sm:$0xf]
      %v1076 = vld [vmem:[#allocation2 + $0x4] sm:$0xf]
      %v1077 = vld [vmem:[#allocation2 + $0x8] sm:$0xf]
      %v1078 = vld [vmem:[#allocation2 + $0xc] sm:$0xf]
      %v1079 = vld [vmem:[#allocation2 + $0x10] sm:$0xf]
      %v1080 = vld [vmem:[#allocation2 + $0x14] sm:$0xf]
      %v1081 = vld [vmem:[#allocation2 + $0x18] sm:$0xf]
      %v1082 = vld [vmem:[#allocation2 + $0x1c] sm:$0xf]
      %v1083 = vld [vmem:[#allocation2 + $0x20] sm:$0xf]
      %v1084 = vld [vmem:[#allocation2 + $0x24] sm:$0xf]
      %v1085 = vld [vmem:[#allocation2 + $0x28] sm:$0xf]
      %v1086 = vld [vmem:[#allocation2 + $0x2c] sm:$0xf]
      %v1087 = vld [vmem:[#allocation2 + $0x30] sm:$0xf]
      %v1088 = vld [vmem:[#allocation2 + $0x34] sm:$0xf]
      %v1089 = vld [vmem:[#allocation2 + $0x38] sm:$0xf]
      %v1090 = vld [vmem:[#allocation2 + $0x3c] sm:$0xf]
      %v1091 = vld [vmem:[#allocation2 + $0x40] sm:$0xf]
      %v1092 = vld [vmem:[#allocation2 + $0x44] sm:$0xf]
      %v1093 = vld [vmem:[#allocation2 + $0x48] sm:$0xf]
      %v1094 = vld [vmem:[#allocation2 + $0x4c] sm:$0xf]
      %v1095 = vld [vmem:[#allocation2 + $0x50] sm:$0xf]
      %v1096 = vld [vmem:[#allocation2 + $0x54] sm:$0xf]
      %v1097 = vld [vmem:[#allocation2 + $0x58] sm:$0xf]
      %v1098 = vld [vmem:[#allocation2 + $0x5c] sm:$0xf]
      %v1099 = vld [vmem:[#allocation2 + $0x60] sm:$0xf]
      %v1100 = vld [vmem:[#allocation2 + $0x64] sm:$0xf]
      %v1101 = vld [vmem:[#allocation2 + $0x68] sm:$0xf]
      %v1102 = vld [vmem:[#allocation2 + $0x6c] sm:$0xf]
      %v1103 = vld [vmem:[#allocation2 + $0x70] sm:$0xf]
      %v1104 = vld [vmem:[#allocation2 + $0x74] sm:$0xf]
      %v1105 = vld [vmem:[#allocation2 + $0x78] sm:$0xf]
      %v1106 = vld [vmem:[#allocation2 + $0x7c] sm:$0xf]
      %v1139 = vunpack.c.l.b16 %v1075
      %v1140 = vunpack.c.l.b16 %v1076
      %v1141 = vunpack.c.l.b16 %v1077
      %v1142 = vunpack.c.l.b16 %v1078
      %v1143 = vunpack.c.l.b16 %v1079
      %v1144 = vunpack.c.l.b16 %v1080
      %v1145 = vunpack.c.l.b16 %v1081
      %v1146 = vunpack.c.l.b16 %v1082
      %v1147 = vunpack.c.l.b16 %v1083
      %v1148 = vunpack.c.l.b16 %v1084
      %v1149 = vunpack.c.l.b16 %v1085
      %v1150 = vunpack.c.l.b16 %v1086
      %v1151 = vunpack.c.l.b16 %v1087
      %v1152 = vunpack.c.l.b16 %v1088
      %v1153 = vunpack.c.l.b16 %v1089
      %v1154 = vunpack.c.l.b16 %v1090
      %v1155 = vunpack.c.l.b16 %v1091
      %v1156 = vunpack.c.l.b16 %v1092
      %v1157 = vunpack.c.l.b16 %v1093
      %v1158 = vunpack.c.l.b16 %v1094
      %v1159 = vunpack.c.l.b16 %v1095
      %v1160 = vunpack.c.l.b16 %v1096
      %v1161 = vunpack.c.l.b16 %v1097
      %v1162 = vunpack.c.l.b16 %v1098
      %v1163 = vunpack.c.l.b16 %v1099
      %v1164 = vunpack.c.l.b16 %v1100
      %v1165 = vunpack.c.l.b16 %v1101
      %v1166 = vunpack.c.l.b16 %v1102
      %v1167 = vunpack.c.l.b16 %v1103
      %v1168 = vunpack.c.l.b16 %v1104
      %v1169 = vunpack.c.l.b16 %v1105
      %v1170 = vunpack.c.l.b16 %v1106
      %v1171 = vpack.c.b16 %v1140, %v1139
      %v1172 = vpack.c.b16 %v1142, %v1141
      %v1173 = vpack.c.b16 %v1144, %v1143
      %v1174 = vpack.c.b16 %v1146, %v1145
      %v1175 = vpack.c.b16 %v1148, %v1147
      %v1176 = vpack.c.b16 %v1150, %v1149
      %v1177 = vpack.c.b16 %v1152, %v1151
      %v1178 = vpack.c.b16 %v1154, %v1153
      %v1179 = vpack.c.b16 %v1156, %v1155
      %v1180 = vpack.c.b16 %v1158, %v1157
      %v1181 = vpack.c.b16 %v1160, %v1159
      %v1182 = vpack.c.b16 %v1162, %v1161
      %v1183 = vpack.c.b16 %v1164, %v1163
      %v1184 = vpack.c.b16 %v1166, %v1165
      %v1185 = vpack.c.b16 %v1168, %v1167
      %v1186 = vpack.c.b16 %v1170, %v1169
      %v1195 = vunpack.c.l.b16 %v450
      %v1196 = vunpack.c.l.b16 %v451
      %v1197 = vunpack.c.l.b16 %v452
      %v1198 = vunpack.c.l.b16 %v453
      %v1199 = vunpack.c.l.b16 %v454
      %v1200 = vunpack.c.l.b16 %v455
      %v1201 = vunpack.c.l.b16 %v456
      %v1202 = vunpack.c.l.b16 %v457
      %v1203 = vpack.c.b16 %v1196, %v1195
      %v1204 = vpack.c.b16 %v1198, %v1197
      %v1205 = vpack.c.b16 %v1200, %v1199
      %v1206 = vpack.c.b16 %v1202, %v1201
      %1207 = vrot.lane.b32.xlu0 %v1203, 96
      %v1208 = vpop.permute.xlu0 %1207
      %1209 = vrot.lane.b32.xlu0 %v1204, 96
      %v1210 = vpop.permute.xlu0 %1209
      %1211 = vrot.lane.b32.xlu0 %v1205, 96
      %v1212 = vpop.permute.xlu0 %1211
      %1213 = vrot.lane.b32.xlu0 %v1206, 96
      %v1214 = vpop.permute.xlu0 %1213
      %vm1219 = vcmask 523264
      %v1221 = vsel %vm1219, %v1171, 0
      %v1224 = vsel %vm1219, %v1172, 0
      %v1227 = vsel %vm1219, %v1173, 0
      %v1230 = vsel %vm1219, %v1174, 0
      %v1233 = vsel %vm1219, %v1175, 0
      %v1236 = vsel %vm1219, %v1176, 0
      %v1239 = vsel %vm1219, %v1177, 0
      %v1242 = vsel %vm1219, %v1178, 0
      %v1245 = vsel %vm1219, %v1179, 0
      %v1248 = vsel %vm1219, %v1180, 0
      %v1251 = vsel %vm1219, %v1181, 0
      %v1254 = vsel %vm1219, %v1182, 0
      %v1257 = vsel %vm1219, %v1183, 0
      %v1260 = vsel %vm1219, %v1184, 0
      %v1263 = vsel %vm1219, %v1185, 0
      %v1266 = vsel %vm1219, %v1186, 0
      %1268 = vmatpush.bf16.msra.mxu0 0
      %1269 = vmatpush.bf16.msra.mxu0 0
      %1270 = vmatpush.bf16.msra.mxu0 0
      %1271 = vmatpush.bf16.msra.mxu0 0
      %1272 = vmatpush.bf16.msra.mxu0 %v1214
      %1273 = vmatpush.bf16.msra.mxu0 %v1212
      %1274 = vmatpush.bf16.msra.mxu0 %v1210
      %1275 = vmatpush.bf16.msra.mxu0 %v1208
      %1276 = vmatmul.bf16.gmra.mxu0 %v1221
      %v1277 = vpop.f32.mrf.mxu0
      %v1278 = vadd.f32 0.0, %v1277
      %v1279 = vpop.f32.mrf.mxu0
      %v1280 = vadd.f32 0.0, %v1279
      %1281 = vmatmul.bf16.gmra.mxu0 %v1224
      %v1282 = vpop.f32.mrf.mxu0
      %v1283 = vadd.f32 0.0, %v1282
      %v1284 = vpop.f32.mrf.mxu0
      %v1285 = vadd.f32 0.0, %v1284
      %1286 = vmatmul.bf16.gmra.mxu0 %v1227
      %v1287 = vpop.f32.mrf.mxu0
      %v1288 = vadd.f32 0.0, %v1287
      %v1289 = vpop.f32.mrf.mxu0
      %v1290 = vadd.f32 0.0, %v1289
      %1291 = vmatmul.bf16.gmra.mxu0 %v1230
      %v1292 = vpop.f32.mrf.mxu0
      %v1293 = vadd.f32 0.0, %v1292
      %v1294 = vpop.f32.mrf.mxu0
      %v1295 = vadd.f32 0.0, %v1294
      %1296 = vmatmul.bf16.gmra.mxu0 %v1233
      %v1297 = vpop.f32.mrf.mxu0
      %v1298 = vadd.f32 0.0, %v1297
      %v1299 = vpop.f32.mrf.mxu0
      %v1300 = vadd.f32 0.0, %v1299
      %1301 = vmatmul.bf16.gmra.mxu0 %v1236
      %v1302 = vpop.f32.mrf.mxu0
      %v1303 = vadd.f32 0.0, %v1302
      %v1304 = vpop.f32.mrf.mxu0
      %v1305 = vadd.f32 0.0, %v1304
      %1306 = vmatmul.bf16.gmra.mxu0 %v1239
      %v1307 = vpop.f32.mrf.mxu0
      %v1308 = vadd.f32 0.0, %v1307
      %v1309 = vpop.f32.mrf.mxu0
      %v1310 = vadd.f32 0.0, %v1309
      %1311 = vmatmul.bf16.gmra.mxu0 %v1242
      %v1312 = vpop.f32.mrf.mxu0
      %v1313 = vadd.f32 0.0, %v1312
      %v1314 = vpop.f32.mrf.mxu0
      %v1315 = vadd.f32 0.0, %v1314
      %1316 = vmatmul.bf16.gmra.mxu0 %v1245
      %v1317 = vpop.f32.mrf.mxu0
      %v1318 = vadd.f32 0.0, %v1317
      %v1319 = vpop.f32.mrf.mxu0
      %v1320 = vadd.f32 0.0, %v1319
      %1321 = vmatmul.bf16.gmra.mxu0 %v1248
      %v1322 = vpop.f32.mrf.mxu0
      %v1323 = vadd.f32 0.0, %v1322
      %v1324 = vpop.f32.mrf.mxu0
      %v1325 = vadd.f32 0.0, %v1324
      %1326 = vmatmul.bf16.gmra.mxu0 %v1251
      %v1327 = vpop.f32.mrf.mxu0
      %v1328 = vadd.f32 0.0, %v1327
      %v1329 = vpop.f32.mrf.mxu0
      %v1330 = vadd.f32 0.0, %v1329
      %1331 = vmatmul.bf16.gmra.mxu0 %v1254
      %v1332 = vpop.f32.mrf.mxu0
      %v1333 = vadd.f32 0.0, %v1332
      %v1334 = vpop.f32.mrf.mxu0
      %v1335 = vadd.f32 0.0, %v1334
      %1336 = vmatmul.bf16.gmra.mxu0 %v1257
      %v1337 = vpop.f32.mrf.mxu0
      %v1338 = vadd.f32 0.0, %v1337
      %v1339 = vpop.f32.mrf.mxu0
      %v1340 = vadd.f32 0.0, %v1339
      %1341 = vmatmul.bf16.gmra.mxu0 %v1260
      %v1342 = vpop.f32.mrf.mxu0
      %v1343 = vadd.f32 0.0, %v1342
      %v1344 = vpop.f32.mrf.mxu0
      %v1345 = vadd.f32 0.0, %v1344
      %1346 = vmatmul.bf16.gmra.mxu0 %v1263
      %v1347 = vpop.f32.mrf.mxu0
      %v1348 = vadd.f32 0.0, %v1347
      %v1349 = vpop.f32.mrf.mxu0
      %v1350 = vadd.f32 0.0, %v1349
      %1351 = vmatmul.bf16.gmra.mxu0 %v1266
      %v1352 = vpop.f32.mrf.mxu0
      %v1353 = vadd.f32 0.0, %v1352
      %v1354 = vpop.f32.mrf.mxu0
      %v1355 = vadd.f32 0.0, %v1354
      %1356 = vdwg.mxu0
      %v1357 = vmul.f32 %v343, %v1278
      %v1358 = vmul.f32 %v345, %v1280
      %v1359 = vmul.f32 %v348, %v1283
      %v1360 = vmul.f32 %v350, %v1285
      %v1361 = vmul.f32 %v353, %v1288
      %v1362 = vmul.f32 %v355, %v1290
      %v1363 = vmul.f32 %v358, %v1293
      %v1364 = vmul.f32 %v360, %v1295
      %v1365 = vmul.f32 %v343, %v1298
      %v1366 = vmul.f32 %v345, %v1300
      %v1367 = vmul.f32 %v348, %v1303
      %v1368 = vmul.f32 %v350, %v1305
      %v1369 = vmul.f32 %v353, %v1308
      %v1370 = vmul.f32 %v355, %v1310
      %v1371 = vmul.f32 %v358, %v1313
      %v1372 = vmul.f32 %v360, %v1315
      %v1373 = vmul.f32 %v343, %v1318
      %v1374 = vmul.f32 %v345, %v1320
      %v1375 = vmul.f32 %v348, %v1323
      %v1376 = vmul.f32 %v350, %v1325
      %v1377 = vmul.f32 %v353, %v1328
      %v1378 = vmul.f32 %v355, %v1330
      %v1379 = vmul.f32 %v358, %v1333
      %v1380 = vmul.f32 %v360, %v1335
      %v1381 = vmul.f32 %v343, %v1338
      %v1382 = vmul.f32 %v345, %v1340
      %v1383 = vmul.f32 %v348, %v1343
      %v1384 = vmul.f32 %v350, %v1345
      %v1385 = vmul.f32 %v353, %v1348
      %v1386 = vmul.f32 %v355, %v1350
      %v1387 = vmul.f32 %v358, %v1353
      %v1388 = vmul.f32 %v360, %v1355
      %vm1389 = vcmask 64512
      %v1390 = vsel %vm1389, %v1357, 0.0
      %1391 = vadd.xlane.f32.xlu0 %v1390
      %v1392 = vpop.xlane.xlu0 %1391
      %v1393 = vsel %vm1389, %v1358, 0.0
      %1394 = vadd.xlane.f32.xlu0 %v1393
      %v1395 = vpop.xlane.xlu0 %1394
      %v1396 = vsel %vm1389, %v1359, 0.0
      %1397 = vadd.xlane.f32.xlu0 %v1396
      %v1398 = vpop.xlane.xlu0 %1397
      %v1399 = vsel %vm1389, %v1360, 0.0
      %1400 = vadd.xlane.f32.xlu0 %v1399
      %v1401 = vpop.xlane.xlu0 %1400
      %v1402 = vsel %vm1389, %v1361, 0.0
      %1403 = vadd.xlane.f32.xlu0 %v1402
      %v1404 = vpop.xlane.xlu0 %1403
      %v1405 = vsel %vm1389, %v1362, 0.0
      %1406 = vadd.xlane.f32.xlu0 %v1405
      %v1407 = vpop.xlane.xlu0 %1406
      %v1408 = vsel %vm1389, %v1363, 0.0
      %1409 = vadd.xlane.f32.xlu0 %v1408
      %v1410 = vpop.xlane.xlu0 %1409
      %v1411 = vsel %vm1389, %v1364, 0.0
      %1412 = vadd.xlane.f32.xlu0 %v1411
      %v1413 = vpop.xlane.xlu0 %1412
      %v1414 = vsel %vm1389, %v1365, 0.0
      %1415 = vadd.xlane.f32.xlu0 %v1414
      %v1416 = vpop.xlane.xlu0 %1415
      %v1417 = vsel %vm1389, %v1366, 0.0
      %1418 = vadd.xlane.f32.xlu0 %v1417
      %v1419 = vpop.xlane.xlu0 %1418
      %v1420 = vsel %vm1389, %v1367, 0.0
      %1421 = vadd.xlane.f32.xlu0 %v1420
      %v1422 = vpop.xlane.xlu0 %1421
      %v1423 = vsel %vm1389, %v1368, 0.0
      %1424 = vadd.xlane.f32.xlu0 %v1423
      %v1425 = vpop.xlane.xlu0 %1424
      %v1426 = vsel %vm1389, %v1369, 0.0
      %1427 = vadd.xlane.f32.xlu0 %v1426
      %v1428 = vpop.xlane.xlu0 %1427
      %v1429 = vsel %vm1389, %v1370, 0.0
      %1430 = vadd.xlane.f32.xlu0 %v1429
      %v1431 = vpop.xlane.xlu0 %1430
      %v1432 = vsel %vm1389, %v1371, 0.0
      %1433 = vadd.xlane.f32.xlu0 %v1432
      %v1434 = vpop.xlane.xlu0 %1433
      %v1435 = vsel %vm1389, %v1372, 0.0
      %1436 = vadd.xlane.f32.xlu0 %v1435
      %v1437 = vpop.xlane.xlu0 %1436
      %v1438 = vsel %vm1389, %v1373, 0.0
      %1439 = vadd.xlane.f32.xlu0 %v1438
      %v1440 = vpop.xlane.xlu0 %1439
      %v1441 = vsel %vm1389, %v1374, 0.0
      %1442 = vadd.xlane.f32.xlu0 %v1441
      %v1443 = vpop.xlane.xlu0 %1442
      %v1444 = vsel %vm1389, %v1375, 0.0
      %1445 = vadd.xlane.f32.xlu0 %v1444
      %v1446 = vpop.xlane.xlu0 %1445
      %v1447 = vsel %vm1389, %v1376, 0.0
      %1448 = vadd.xlane.f32.xlu0 %v1447
      %v1449 = vpop.xlane.xlu0 %1448
      %v1450 = vsel %vm1389, %v1377, 0.0
      %1451 = vadd.xlane.f32.xlu0 %v1450
      %v1452 = vpop.xlane.xlu0 %1451
      %v1453 = vsel %vm1389, %v1378, 0.0
      %1454 = vadd.xlane.f32.xlu0 %v1453
      %v1455 = vpop.xlane.xlu0 %1454
      %v1456 = vsel %vm1389, %v1379, 0.0
      %1457 = vadd.xlane.f32.xlu0 %v1456
      %v1458 = vpop.xlane.xlu0 %1457
      %v1459 = vsel %vm1389, %v1380, 0.0
      %1460 = vadd.xlane.f32.xlu0 %v1459
      %v1461 = vpop.xlane.xlu0 %1460
      %v1462 = vsel %vm1389, %v1381, 0.0
      %1463 = vadd.xlane.f32.xlu0 %v1462
      %v1464 = vpop.xlane.xlu0 %1463
      %v1465 = vsel %vm1389, %v1382, 0.0
      %1466 = vadd.xlane.f32.xlu0 %v1465
      %v1467 = vpop.xlane.xlu0 %1466
      %v1468 = vsel %vm1389, %v1383, 0.0
      %1469 = vadd.xlane.f32.xlu0 %v1468
      %v1470 = vpop.xlane.xlu0 %1469
      %v1471 = vsel %vm1389, %v1384, 0.0
      %1472 = vadd.xlane.f32.xlu0 %v1471
      %v1473 = vpop.xlane.xlu0 %1472
      %v1474 = vsel %vm1389, %v1385, 0.0
      %1475 = vadd.xlane.f32.xlu0 %v1474
      %v1476 = vpop.xlane.xlu0 %1475
      %v1477 = vsel %vm1389, %v1386, 0.0
      %1478 = vadd.xlane.f32.xlu0 %v1477
      %v1479 = vpop.xlane.xlu0 %1478
      %v1480 = vsel %vm1389, %v1387, 0.0
      %1481 = vadd.xlane.f32.xlu0 %v1480
      %v1482 = vpop.xlane.xlu0 %1481
      %v1483 = vsel %vm1389, %v1388, 0.0
      %1484 = vadd.xlane.f32.xlu0 %v1483
      %v1485 = vpop.xlane.xlu0 %1484
      %1486 = vset.pattern.permute.xlu0 8
      %1487 = vperm.xlu0 %1486, %v413
      %v1488 = vpop.permute.xlu0 %1487
      %1490 = vset.pattern.permute.xlu0 8
      %1491 = vperm.xlu0 %1490, %v416
      %v1492 = vpop.permute.xlu0 %1491
      %1494 = vset.pattern.permute.xlu0 8
      %1495 = vperm.xlu0 %1494, %v419
      %v1496 = vpop.permute.xlu0 %1495
      %1498 = vset.pattern.permute.xlu0 8
      %1499 = vperm.xlu0 %1498, %v422
      %v1500 = vpop.permute.xlu0 %1499
      %1502 = vset.pattern.permute.xlu0 8
      %1503 = vperm.xlu0 %1502, %v425
      %v1504 = vpop.permute.xlu0 %1503
      %1506 = vset.pattern.permute.xlu0 8
      %1507 = vperm.xlu0 %1506, %v428
      %v1508 = vpop.permute.xlu0 %1507
      %1510 = vset.pattern.permute.xlu0 8
      %1511 = vperm.xlu0 %1510, %v431
      %v1512 = vpop.permute.xlu0 %1511
      %1514 = vset.pattern.permute.xlu0 8
      %1515 = vperm.xlu0 %1514, %v434
      %v1516 = vpop.permute.xlu0 %1515
      %v1518 = vsub.f32 %v1488, %v449
      %v1519 = vsub.f32 %v1492, %v449
      %v1520 = vsub.f32 %v1496, %v449
      %v1521 = vsub.f32 %v1500, %v449
      %v1522 = vsub.f32 %v1504, %v449
      %v1523 = vsub.f32 %v1508, %v449
      %v1524 = vsub.f32 %v1512, %v449
      %v1525 = vsub.f32 %v1516, %v449
      %v1526 = vand.u32 2147483647, %v1518
      %v1527 = vand.u32 2147483647, %v1519
      %v1528 = vand.u32 2147483647, %v1520
      %v1529 = vand.u32 2147483647, %v1521
      %v1530 = vand.u32 2147483647, %v1522
      %v1531 = vand.u32 2147483647, %v1523
      %v1532 = vand.u32 2147483647, %v1524
      %v1533 = vand.u32 2147483647, %v1525
      %v1534 = vsub.f32 1.0, %v1526
      %v1535 = vsub.f32 1.0, %v1527
      %v1536 = vsub.f32 1.0, %v1528
      %v1537 = vsub.f32 1.0, %v1529
      %v1538 = vsub.f32 1.0, %v1530
      %v1539 = vsub.f32 1.0, %v1531
      %v1540 = vsub.f32 1.0, %v1532
      %v1541 = vsub.f32 1.0, %v1533
      %v1542 = vmax.f32 %v1534, 0.0
      %v1543 = vmax.f32 %v1535, 0.0
      %v1544 = vmax.f32 %v1536, 0.0
      %v1545 = vmax.f32 %v1537, 0.0
      %v1546 = vmax.f32 %v1538, 0.0
      %v1547 = vmax.f32 %v1539, 0.0
      %v1548 = vmax.f32 %v1540, 0.0
      %v1549 = vmax.f32 %v1541, 0.0
      %1550 = vset.pattern.permute.xlu0 12
      %1551 = vperm.xlu0 %1550, %v413
      %v1552 = vpop.permute.xlu0 %1551
      %1554 = vset.pattern.permute.xlu0 12
      %1555 = vperm.xlu0 %1554, %v416
      %v1556 = vpop.permute.xlu0 %1555
      %1558 = vset.pattern.permute.xlu0 12
      %1559 = vperm.xlu0 %1558, %v419
      %v1560 = vpop.permute.xlu0 %1559
      %1562 = vset.pattern.permute.xlu0 12
      %1563 = vperm.xlu0 %1562, %v422
      %v1564 = vpop.permute.xlu0 %1563
      %1566 = vset.pattern.permute.xlu0 12
      %1567 = vperm.xlu0 %1566, %v425
      %v1568 = vpop.permute.xlu0 %1567
      %1570 = vset.pattern.permute.xlu0 12
      %1571 = vperm.xlu0 %1570, %v428
      %v1572 = vpop.permute.xlu0 %1571
      %1574 = vset.pattern.permute.xlu0 12
      %1575 = vperm.xlu0 %1574, %v431
      %v1576 = vpop.permute.xlu0 %1575
      %1578 = vset.pattern.permute.xlu0 12
      %1579 = vperm.xlu0 %1578, %v434
      %v1580 = vpop.permute.xlu0 %1579
      %v1582 = vsub.f32 %v1552, %v447
      %v1583 = vsub.f32 %v1556, %v447
      %v1584 = vsub.f32 %v1560, %v447
      %v1585 = vsub.f32 %v1564, %v447
      %v1586 = vsub.f32 %v1568, %v447
      %v1587 = vsub.f32 %v1572, %v447
      %v1588 = vsub.f32 %v1576, %v447
      %v1589 = vsub.f32 %v1580, %v447
      %v1590 = vand.u32 2147483647, %v1582
      %v1591 = vand.u32 2147483647, %v1583
      %v1592 = vand.u32 2147483647, %v1584
      %v1593 = vand.u32 2147483647, %v1585
      %v1594 = vand.u32 2147483647, %v1586
      %v1595 = vand.u32 2147483647, %v1587
      %v1596 = vand.u32 2147483647, %v1588
      %v1597 = vand.u32 2147483647, %v1589
      %v1598 = vsub.f32 1.0, %v1590
      %v1599 = vsub.f32 1.0, %v1591
      %v1600 = vsub.f32 1.0, %v1592
      %v1601 = vsub.f32 1.0, %v1593
      %v1602 = vsub.f32 1.0, %v1594
      %v1603 = vsub.f32 1.0, %v1595
      %v1604 = vsub.f32 1.0, %v1596
      %v1605 = vsub.f32 1.0, %v1597
      %v1606 = vmax.f32 %v1598, 0.0
      %v1607 = vmax.f32 %v1599, 0.0
      %v1608 = vmax.f32 %v1600, 0.0
      %v1609 = vmax.f32 %v1601, 0.0
      %v1610 = vmax.f32 %v1602, 0.0
      %v1611 = vmax.f32 %v1603, 0.0
      %v1612 = vmax.f32 %v1604, 0.0
      %v1613 = vmax.f32 %v1605, 0.0
      %v1614 = vmul.f32 %v1542, %v1606
      %v1615 = vmul.f32 %v1543, %v1607
      %v1616 = vmul.f32 %v1544, %v1608
      %v1617 = vmul.f32 %v1545, %v1609
      %v1618 = vmul.f32 %v1546, %v1610
      %v1619 = vmul.f32 %v1547, %v1611
      %v1620 = vmul.f32 %v1548, %v1612
      %v1621 = vmul.f32 %v1549, %v1613
      %v1622 = vpack.c.bf16 %v1614, %v1614
      %v1623 = vpack.c.bf16 %v1615, %v1615
      %v1624 = vpack.c.bf16 %v1616, %v1616
      %v1625 = vpack.c.bf16 %v1617, %v1617
      %v1626 = vpack.c.bf16 %v1618, %v1618
      %v1627 = vpack.c.bf16 %v1619, %v1619
      %v1628 = vpack.c.bf16 %v1620, %v1620
      %v1629 = vpack.c.bf16 %v1621, %v1621
      %1630 = vst.msk [vmem:[#allocation2] sm:$0xf] %vm610, %v1622
      %1631 = vst.msk [vmem:[#allocation2 + $0x4] sm:$0xf] %vm610, %v1623
      %1632 = vst.msk [vmem:[#allocation2 + $0x8] sm:$0xf] %vm610, %v1624
      %1633 = vst.msk [vmem:[#allocation2 + $0xc] sm:$0xf] %vm610, %v1625
      %1634 = vst.msk [vmem:[#allocation2 + $0x10] sm:$0xf] %vm610, %v1626
      %1635 = vst.msk [vmem:[#allocation2 + $0x14] sm:$0xf] %vm610, %v1627
      %1636 = vst.msk [vmem:[#allocation2 + $0x18] sm:$0xf] %vm610, %v1628
      %1637 = vst.msk [vmem:[#allocation2 + $0x1c] sm:$0xf] %vm610, %v1629
      %1638 = vset.pattern.permute.xlu0 9
      %1639 = vperm.xlu0 %1638, %v413
      %v1640 = vpop.permute.xlu0 %1639
      %1642 = vset.pattern.permute.xlu0 9
      %1643 = vperm.xlu0 %1642, %v416
      %v1644 = vpop.permute.xlu0 %1643
      %1646 = vset.pattern.permute.xlu0 9
      %1647 = vperm.xlu0 %1646, %v419
      %v1648 = vpop.permute.xlu0 %1647
      %1650 = vset.pattern.permute.xlu0 9
      %1651 = vperm.xlu0 %1650, %v422
      %v1652 = vpop.permute.xlu0 %1651
      %1654 = vset.pattern.permute.xlu0 9
      %1655 = vperm.xlu0 %1654, %v425
      %v1656 = vpop.permute.xlu0 %1655
      %1658 = vset.pattern.permute.xlu0 9
      %1659 = vperm.xlu0 %1658, %v428
      %v1660 = vpop.permute.xlu0 %1659
      %1662 = vset.pattern.permute.xlu0 9
      %1663 = vperm.xlu0 %1662, %v431
      %v1664 = vpop.permute.xlu0 %1663
      %1666 = vset.pattern.permute.xlu0 9
      %1667 = vperm.xlu0 %1666, %v434
      %v1668 = vpop.permute.xlu0 %1667
      %v1670 = vsub.f32 %v1640, %v449
      %v1671 = vsub.f32 %v1644, %v449
      %v1672 = vsub.f32 %v1648, %v449
      %v1673 = vsub.f32 %v1652, %v449
      %v1674 = vsub.f32 %v1656, %v449
      %v1675 = vsub.f32 %v1660, %v449
      %v1676 = vsub.f32 %v1664, %v449
      %v1677 = vsub.f32 %v1668, %v449
      %v1678 = vand.u32 2147483647, %v1670
      %v1679 = vand.u32 2147483647, %v1671
      %v1680 = vand.u32 2147483647, %v1672
      %v1681 = vand.u32 2147483647, %v1673
      %v1682 = vand.u32 2147483647, %v1674
      %v1683 = vand.u32 2147483647, %v1675
      %v1684 = vand.u32 2147483647, %v1676
      %v1685 = vand.u32 2147483647, %v1677
      %v1686 = vsub.f32 1.0, %v1678
      %v1687 = vsub.f32 1.0, %v1679
      %v1688 = vsub.f32 1.0, %v1680
      %v1689 = vsub.f32 1.0, %v1681
      %v1690 = vsub.f32 1.0, %v1682
      %v1691 = vsub.f32 1.0, %v1683
      %v1692 = vsub.f32 1.0, %v1684
      %v1693 = vsub.f32 1.0, %v1685
      %v1694 = vmax.f32 %v1686, 0.0
      %v1695 = vmax.f32 %v1687, 0.0
      %v1696 = vmax.f32 %v1688, 0.0
      %v1697 = vmax.f32 %v1689, 0.0
      %v1698 = vmax.f32 %v1690, 0.0
      %v1699 = vmax.f32 %v1691, 0.0
      %v1700 = vmax.f32 %v1692, 0.0
      %v1701 = vmax.f32 %v1693, 0.0
      %1702 = vset.pattern.permute.xlu0 13
      %1703 = vperm.xlu0 %1702, %v413
      %v1704 = vpop.permute.xlu0 %1703
      %1706 = vset.pattern.permute.xlu0 13
      %1707 = vperm.xlu0 %1706, %v416
      %v1708 = vpop.permute.xlu0 %1707
      %1710 = vset.pattern.permute.xlu0 13
      %1711 = vperm.xlu0 %1710, %v419
      %v1712 = vpop.permute.xlu0 %1711
      %1714 = vset.pattern.permute.xlu0 13
      %1715 = vperm.xlu0 %1714, %v422
      %v1716 = vpop.permute.xlu0 %1715
      %1718 = vset.pattern.permute.xlu0 13
      %1719 = vperm.xlu0 %1718, %v425
      %v1720 = vpop.permute.xlu0 %1719
      %1722 = vset.pattern.permute.xlu0 13
      %1723 = vperm.xlu0 %1722, %v428
      %v1724 = vpop.permute.xlu0 %1723
      %1726 = vset.pattern.permute.xlu0 13
      %1727 = vperm.xlu0 %1726, %v431
      %v1728 = vpop.permute.xlu0 %1727
      %1730 = vset.pattern.permute.xlu0 13
      %1731 = vperm.xlu0 %1730, %v434
      %v1732 = vpop.permute.xlu0 %1731
      %v1734 = vsub.f32 %v1704, %v447
      %v1735 = vsub.f32 %v1708, %v447
      %v1736 = vsub.f32 %v1712, %v447
      %v1737 = vsub.f32 %v1716, %v447
      %v1738 = vsub.f32 %v1720, %v447
      %v1739 = vsub.f32 %v1724, %v447
      %v1740 = vsub.f32 %v1728, %v447
      %v1741 = vsub.f32 %v1732, %v447
      %v1742 = vand.u32 2147483647, %v1734
      %v1743 = vand.u32 2147483647, %v1735
      %v1744 = vand.u32 2147483647, %v1736
      %v1745 = vand.u32 2147483647, %v1737
      %v1746 = vand.u32 2147483647, %v1738
      %v1747 = vand.u32 2147483647, %v1739
      %v1748 = vand.u32 2147483647, %v1740
      %v1749 = vand.u32 2147483647, %v1741
      %v1750 = vsub.f32 1.0, %v1742
      %v1751 = vsub.f32 1.0, %v1743
      %v1752 = vsub.f32 1.0, %v1744
      %v1753 = vsub.f32 1.0, %v1745
      %v1754 = vsub.f32 1.0, %v1746
      %v1755 = vsub.f32 1.0, %v1747
      %v1756 = vsub.f32 1.0, %v1748
      %v1757 = vsub.f32 1.0, %v1749
      %v1758 = vmax.f32 %v1750, 0.0
      %v1759 = vmax.f32 %v1751, 0.0
      %v1760 = vmax.f32 %v1752, 0.0
      %v1761 = vmax.f32 %v1753, 0.0
      %v1762 = vmax.f32 %v1754, 0.0
      %v1763 = vmax.f32 %v1755, 0.0
      %v1764 = vmax.f32 %v1756, 0.0
      %v1765 = vmax.f32 %v1757, 0.0
      %v1766 = vmul.f32 %v1694, %v1758
      %v1767 = vmul.f32 %v1695, %v1759
      %v1768 = vmul.f32 %v1696, %v1760
      %v1769 = vmul.f32 %v1697, %v1761
      %v1770 = vmul.f32 %v1698, %v1762
      %v1771 = vmul.f32 %v1699, %v1763
      %v1772 = vmul.f32 %v1700, %v1764
      %v1773 = vmul.f32 %v1701, %v1765
      %v1774 = vpack.c.bf16 %v1766, %v1766
      %v1775 = vpack.c.bf16 %v1767, %v1767
      %v1776 = vpack.c.bf16 %v1768, %v1768
      %v1777 = vpack.c.bf16 %v1769, %v1769
      %v1778 = vpack.c.bf16 %v1770, %v1770
      %v1779 = vpack.c.bf16 %v1771, %v1771
      %v1780 = vpack.c.bf16 %v1772, %v1772
      %v1781 = vpack.c.bf16 %v1773, %v1773
      %1782 = vst.msk [vmem:[#allocation2 + $0x20] sm:$0xf] %vm610, %v1774
      %1783 = vst.msk [vmem:[#allocation2 + $0x24] sm:$0xf] %vm610, %v1775
      %1784 = vst.msk [vmem:[#allocation2 + $0x28] sm:$0xf] %vm610, %v1776
      %1785 = vst.msk [vmem:[#allocation2 + $0x2c] sm:$0xf] %vm610, %v1777
      %1786 = vst.msk [vmem:[#allocation2 + $0x30] sm:$0xf] %vm610, %v1778
      %1787 = vst.msk [vmem:[#allocation2 + $0x34] sm:$0xf] %vm610, %v1779
      %1788 = vst.msk [vmem:[#allocation2 + $0x38] sm:$0xf] %vm610, %v1780
      %1789 = vst.msk [vmem:[#allocation2 + $0x3c] sm:$0xf] %vm610, %v1781
      %1790 = vset.pattern.permute.xlu0 10
      %1791 = vperm.xlu0 %1790, %v413
      %v1792 = vpop.permute.xlu0 %1791
      %1794 = vset.pattern.permute.xlu0 10
      %1795 = vperm.xlu0 %1794, %v416
      %v1796 = vpop.permute.xlu0 %1795
      %1798 = vset.pattern.permute.xlu0 10
      %1799 = vperm.xlu0 %1798, %v419
      %v1800 = vpop.permute.xlu0 %1799
      %1802 = vset.pattern.permute.xlu0 10
      %1803 = vperm.xlu0 %1802, %v422
      %v1804 = vpop.permute.xlu0 %1803
      %1806 = vset.pattern.permute.xlu0 10
      %1807 = vperm.xlu0 %1806, %v425
      %v1808 = vpop.permute.xlu0 %1807
      %1810 = vset.pattern.permute.xlu0 10
      %1811 = vperm.xlu0 %1810, %v428
      %v1812 = vpop.permute.xlu0 %1811
      %1814 = vset.pattern.permute.xlu0 10
      %1815 = vperm.xlu0 %1814, %v431
      %v1816 = vpop.permute.xlu0 %1815
      %1818 = vset.pattern.permute.xlu0 10
      %1819 = vperm.xlu0 %1818, %v434
      %v1820 = vpop.permute.xlu0 %1819
      %v1822 = vsub.f32 %v1792, %v449
      %v1823 = vsub.f32 %v1796, %v449
      %v1824 = vsub.f32 %v1800, %v449
      %v1825 = vsub.f32 %v1804, %v449
      %v1826 = vsub.f32 %v1808, %v449
      %v1827 = vsub.f32 %v1812, %v449
      %v1828 = vsub.f32 %v1816, %v449
      %v1829 = vsub.f32 %v1820, %v449
      %v1830 = vand.u32 2147483647, %v1822
      %v1831 = vand.u32 2147483647, %v1823
      %v1832 = vand.u32 2147483647, %v1824
      %v1833 = vand.u32 2147483647, %v1825
      %v1834 = vand.u32 2147483647, %v1826
      %v1835 = vand.u32 2147483647, %v1827
      %v1836 = vand.u32 2147483647, %v1828
      %v1837 = vand.u32 2147483647, %v1829
      %v1838 = vsub.f32 1.0, %v1830
      %v1839 = vsub.f32 1.0, %v1831
      %v1840 = vsub.f32 1.0, %v1832
      %v1841 = vsub.f32 1.0, %v1833
      %v1842 = vsub.f32 1.0, %v1834
      %v1843 = vsub.f32 1.0, %v1835
      %v1844 = vsub.f32 1.0, %v1836
      %v1845 = vsub.f32 1.0, %v1837
      %v1846 = vmax.f32 %v1838, 0.0
      %v1847 = vmax.f32 %v1839, 0.0
      %v1848 = vmax.f32 %v1840, 0.0
      %v1849 = vmax.f32 %v1841, 0.0
      %v1850 = vmax.f32 %v1842, 0.0
      %v1851 = vmax.f32 %v1843, 0.0
      %v1852 = vmax.f32 %v1844, 0.0
      %v1853 = vmax.f32 %v1845, 0.0
      %1854 = vset.pattern.permute.xlu0 14
      %1855 = vperm.xlu0 %1854, %v413
      %v1856 = vpop.permute.xlu0 %1855
      %1858 = vset.pattern.permute.xlu0 14
      %1859 = vperm.xlu0 %1858, %v416
      %v1860 = vpop.permute.xlu0 %1859
      %1862 = vset.pattern.permute.xlu0 14
      %1863 = vperm.xlu0 %1862, %v419
      %v1864 = vpop.permute.xlu0 %1863
      %1866 = vset.pattern.permute.xlu0 14
      %1867 = vperm.xlu0 %1866, %v422
      %v1868 = vpop.permute.xlu0 %1867
      %1870 = vset.pattern.permute.xlu0 14
      %1871 = vperm.xlu0 %1870, %v425
      %v1872 = vpop.permute.xlu0 %1871
      %1874 = vset.pattern.permute.xlu0 14
      %1875 = vperm.xlu0 %1874, %v428
      %v1876 = vpop.permute.xlu0 %1875
      %1878 = vset.pattern.permute.xlu0 14
      %1879 = vperm.xlu0 %1878, %v431
      %v1880 = vpop.permute.xlu0 %1879
      %1882 = vset.pattern.permute.xlu0 14
      %1883 = vperm.xlu0 %1882, %v434
      %v1884 = vpop.permute.xlu0 %1883
      %v1886 = vsub.f32 %v1856, %v447
      %v1887 = vsub.f32 %v1860, %v447
      %v1888 = vsub.f32 %v1864, %v447
      %v1889 = vsub.f32 %v1868, %v447
      %v1890 = vsub.f32 %v1872, %v447
      %v1891 = vsub.f32 %v1876, %v447
      %v1892 = vsub.f32 %v1880, %v447
      %v1893 = vsub.f32 %v1884, %v447
      %v1894 = vand.u32 2147483647, %v1886
      %v1895 = vand.u32 2147483647, %v1887
      %v1896 = vand.u32 2147483647, %v1888
      %v1897 = vand.u32 2147483647, %v1889
      %v1898 = vand.u32 2147483647, %v1890
      %v1899 = vand.u32 2147483647, %v1891
      %v1900 = vand.u32 2147483647, %v1892
      %v1901 = vand.u32 2147483647, %v1893
      %v1902 = vsub.f32 1.0, %v1894
      %v1903 = vsub.f32 1.0, %v1895
      %v1904 = vsub.f32 1.0, %v1896
      %v1905 = vsub.f32 1.0, %v1897
      %v1906 = vsub.f32 1.0, %v1898
      %v1907 = vsub.f32 1.0, %v1899
      %v1908 = vsub.f32 1.0, %v1900
      %v1909 = vsub.f32 1.0, %v1901
      %v1910 = vmax.f32 %v1902, 0.0
      %v1911 = vmax.f32 %v1903, 0.0
      %v1912 = vmax.f32 %v1904, 0.0
      %v1913 = vmax.f32 %v1905, 0.0
      %v1914 = vmax.f32 %v1906, 0.0
      %v1915 = vmax.f32 %v1907, 0.0
      %v1916 = vmax.f32 %v1908, 0.0
      %v1917 = vmax.f32 %v1909, 0.0
      %v1918 = vmul.f32 %v1846, %v1910
      %v1919 = vmul.f32 %v1847, %v1911
      %v1920 = vmul.f32 %v1848, %v1912
      %v1921 = vmul.f32 %v1849, %v1913
      %v1922 = vmul.f32 %v1850, %v1914
      %v1923 = vmul.f32 %v1851, %v1915
      %v1924 = vmul.f32 %v1852, %v1916
      %v1925 = vmul.f32 %v1853, %v1917
      %v1926 = vpack.c.bf16 %v1918, %v1918
      %v1927 = vpack.c.bf16 %v1919, %v1919
      %v1928 = vpack.c.bf16 %v1920, %v1920
      %v1929 = vpack.c.bf16 %v1921, %v1921
      %v1930 = vpack.c.bf16 %v1922, %v1922
      %v1931 = vpack.c.bf16 %v1923, %v1923
      %v1932 = vpack.c.bf16 %v1924, %v1924
      %v1933 = vpack.c.bf16 %v1925, %v1925
      %1934 = vst.msk [vmem:[#allocation2 + $0x40] sm:$0xf] %vm610, %v1926
      %1935 = vst.msk [vmem:[#allocation2 + $0x44] sm:$0xf] %vm610, %v1927
      %1936 = vst.msk [vmem:[#allocation2 + $0x48] sm:$0xf] %vm610, %v1928
      %1937 = vst.msk [vmem:[#allocation2 + $0x4c] sm:$0xf] %vm610, %v1929
      %1938 = vst.msk [vmem:[#allocation2 + $0x50] sm:$0xf] %vm610, %v1930
      %1939 = vst.msk [vmem:[#allocation2 + $0x54] sm:$0xf] %vm610, %v1931
      %1940 = vst.msk [vmem:[#allocation2 + $0x58] sm:$0xf] %vm610, %v1932
      %1941 = vst.msk [vmem:[#allocation2 + $0x5c] sm:$0xf] %vm610, %v1933
      %1942 = vset.pattern.permute.xlu0 11
      %1943 = vperm.xlu0 %1942, %v413
      %v1944 = vpop.permute.xlu0 %1943
      %1946 = vset.pattern.permute.xlu0 11
      %1947 = vperm.xlu0 %1946, %v416
      %v1948 = vpop.permute.xlu0 %1947
      %1950 = vset.pattern.permute.xlu0 11
      %1951 = vperm.xlu0 %1950, %v419
      %v1952 = vpop.permute.xlu0 %1951
      %1954 = vset.pattern.permute.xlu0 11
      %1955 = vperm.xlu0 %1954, %v422
      %v1956 = vpop.permute.xlu0 %1955
      %1958 = vset.pattern.permute.xlu0 11
      %1959 = vperm.xlu0 %1958, %v425
      %v1960 = vpop.permute.xlu0 %1959
      %1962 = vset.pattern.permute.xlu0 11
      %1963 = vperm.xlu0 %1962, %v428
      %v1964 = vpop.permute.xlu0 %1963
      %1966 = vset.pattern.permute.xlu0 11
      %1967 = vperm.xlu0 %1966, %v431
      %v1968 = vpop.permute.xlu0 %1967
      %1970 = vset.pattern.permute.xlu0 11
      %1971 = vperm.xlu0 %1970, %v434
      %v1972 = vpop.permute.xlu0 %1971
      %v1974 = vsub.f32 %v1944, %v449
      %v1975 = vsub.f32 %v1948, %v449
      %v1976 = vsub.f32 %v1952, %v449
      %v1977 = vsub.f32 %v1956, %v449
      %v1978 = vsub.f32 %v1960, %v449
      %v1979 = vsub.f32 %v1964, %v449
      %v1980 = vsub.f32 %v1968, %v449
      %v1981 = vsub.f32 %v1972, %v449
      %v1982 = vand.u32 2147483647, %v1974
      %v1983 = vand.u32 2147483647, %v1975
      %v1984 = vand.u32 2147483647, %v1976
      %v1985 = vand.u32 2147483647, %v1977
      %v1986 = vand.u32 2147483647, %v1978
      %v1987 = vand.u32 2147483647, %v1979
      %v1988 = vand.u32 2147483647, %v1980
      %v1989 = vand.u32 2147483647, %v1981
      %v1990 = vsub.f32 1.0, %v1982
      %v1991 = vsub.f32 1.0, %v1983
      %v1992 = vsub.f32 1.0, %v1984
      %v1993 = vsub.f32 1.0, %v1985
      %v1994 = vsub.f32 1.0, %v1986
      %v1995 = vsub.f32 1.0, %v1987
      %v1996 = vsub.f32 1.0, %v1988
      %v1997 = vsub.f32 1.0, %v1989
      %v1998 = vmax.f32 %v1990, 0.0
      %v1999 = vmax.f32 %v1991, 0.0
      %v2000 = vmax.f32 %v1992, 0.0
      %v2001 = vmax.f32 %v1993, 0.0
      %v2002 = vmax.f32 %v1994, 0.0
      %v2003 = vmax.f32 %v1995, 0.0
      %v2004 = vmax.f32 %v1996, 0.0
      %v2005 = vmax.f32 %v1997, 0.0
      %2006 = vset.pattern.permute.xlu0 15
      %2007 = vperm.xlu0 %2006, %v413
      %v2008 = vpop.permute.xlu0 %2007
      %2010 = vset.pattern.permute.xlu0 15
      %2011 = vperm.xlu0 %2010, %v416
      %v2012 = vpop.permute.xlu0 %2011
      %2014 = vset.pattern.permute.xlu0 15
      %2015 = vperm.xlu0 %2014, %v419
      %v2016 = vpop.permute.xlu0 %2015
      %2018 = vset.pattern.permute.xlu0 15
      %2019 = vperm.xlu0 %2018, %v422
      %v2020 = vpop.permute.xlu0 %2019
      %2022 = vset.pattern.permute.xlu0 15
      %2023 = vperm.xlu0 %2022, %v425
      %v2024 = vpop.permute.xlu0 %2023
      %2026 = vset.pattern.permute.xlu0 15
      %2027 = vperm.xlu0 %2026, %v428
      %v2028 = vpop.permute.xlu0 %2027
      %2030 = vset.pattern.permute.xlu0 15
      %2031 = vperm.xlu0 %2030, %v431
      %v2032 = vpop.permute.xlu0 %2031
      %2034 = vset.pattern.permute.xlu0 15
      %2035 = vperm.xlu0 %2034, %v434
      %v2036 = vpop.permute.xlu0 %2035
      %v2038 = vsub.f32 %v2008, %v447
      %v2039 = vsub.f32 %v2012, %v447
      %v2040 = vsub.f32 %v2016, %v447
      %v2041 = vsub.f32 %v2020, %v447
      %v2042 = vsub.f32 %v2024, %v447
      %v2043 = vsub.f32 %v2028, %v447
      %v2044 = vsub.f32 %v2032, %v447
      %v2045 = vsub.f32 %v2036, %v447
      %v2046 = vand.u32 2147483647, %v2038
      %v2047 = vand.u32 2147483647, %v2039
      %v2048 = vand.u32 2147483647, %v2040
      %v2049 = vand.u32 2147483647, %v2041
      %v2050 = vand.u32 2147483647, %v2042
      %v2051 = vand.u32 2147483647, %v2043
      %v2052 = vand.u32 2147483647, %v2044
      %v2053 = vand.u32 2147483647, %v2045
      %v2054 = vsub.f32 1.0, %v2046
      %v2055 = vsub.f32 1.0, %v2047
      %v2056 = vsub.f32 1.0, %v2048
      %v2057 = vsub.f32 1.0, %v2049
      %v2058 = vsub.f32 1.0, %v2050
      %v2059 = vsub.f32 1.0, %v2051
      %v2060 = vsub.f32 1.0, %v2052
      %v2061 = vsub.f32 1.0, %v2053
      %v2062 = vmax.f32 %v2054, 0.0
      %v2063 = vmax.f32 %v2055, 0.0
      %v2064 = vmax.f32 %v2056, 0.0
      %v2065 = vmax.f32 %v2057, 0.0
      %v2066 = vmax.f32 %v2058, 0.0
      %v2067 = vmax.f32 %v2059, 0.0
      %v2068 = vmax.f32 %v2060, 0.0
      %v2069 = vmax.f32 %v2061, 0.0
      %v2070 = vmul.f32 %v1998, %v2062
      %v2071 = vmul.f32 %v1999, %v2063
      %v2072 = vmul.f32 %v2000, %v2064
      %v2073 = vmul.f32 %v2001, %v2065
      %v2074 = vmul.f32 %v2002, %v2066
      %v2075 = vmul.f32 %v2003, %v2067
      %v2076 = vmul.f32 %v2004, %v2068
      %v2077 = vmul.f32 %v2005, %v2069
      %v2078 = vpack.c.bf16 %v2070, %v2070
      %v2079 = vpack.c.bf16 %v2071, %v2071
      %v2080 = vpack.c.bf16 %v2072, %v2072
      %v2081 = vpack.c.bf16 %v2073, %v2073
      %v2082 = vpack.c.bf16 %v2074, %v2074
      %v2083 = vpack.c.bf16 %v2075, %v2075
      %v2084 = vpack.c.bf16 %v2076, %v2076
      %v2085 = vpack.c.bf16 %v2077, %v2077
      %2086 = vst.msk [vmem:[#allocation2 + $0x60] sm:$0xf] %vm610, %v2078
      %2087 = vst.msk [vmem:[#allocation2 + $0x64] sm:$0xf] %vm610, %v2079
      %2088 = vst.msk [vmem:[#allocation2 + $0x68] sm:$0xf] %vm610, %v2080
      %2089 = vst.msk [vmem:[#allocation2 + $0x6c] sm:$0xf] %vm610, %v2081
      %2090 = vst.msk [vmem:[#allocation2 + $0x70] sm:$0xf] %vm610, %v2082
      %2091 = vst.msk [vmem:[#allocation2 + $0x74] sm:$0xf] %vm610, %v2083
      %2092 = vst.msk [vmem:[#allocation2 + $0x78] sm:$0xf] %vm610, %v2084
      %2093 = vst.msk [vmem:[#allocation2 + $0x7c] sm:$0xf] %vm610, %v2085
      %v2094 = vld [vmem:[#allocation2] sm:$0xf]
      %v2095 = vld [vmem:[#allocation2 + $0x4] sm:$0xf]
      %v2096 = vld [vmem:[#allocation2 + $0x8] sm:$0xf]
      %v2097 = vld [vmem:[#allocation2 + $0xc] sm:$0xf]
      %v2098 = vld [vmem:[#allocation2 + $0x10] sm:$0xf]
      %v2099 = vld [vmem:[#allocation2 + $0x14] sm:$0xf]
      %v2100 = vld [vmem:[#allocation2 + $0x18] sm:$0xf]
      %v2101 = vld [vmem:[#allocation2 + $0x1c] sm:$0xf]
      %v2102 = vld [vmem:[#allocation2 + $0x20] sm:$0xf]
      %v2103 = vld [vmem:[#allocation2 + $0x24] sm:$0xf]
      %v2104 = vld [vmem:[#allocation2 + $0x28] sm:$0xf]
      %v2105 = vld [vmem:[#allocation2 + $0x2c] sm:$0xf]
      %v2106 = vld [vmem:[#allocation2 + $0x30] sm:$0xf]
      %v2107 = vld [vmem:[#allocation2 + $0x34] sm:$0xf]
      %v2108 = vld [vmem:[#allocation2 + $0x38] sm:$0xf]
      %v2109 = vld [vmem:[#allocation2 + $0x3c] sm:$0xf]
      %v2110 = vld [vmem:[#allocation2 + $0x40] sm:$0xf]
      %v2111 = vld [vmem:[#allocation2 + $0x44] sm:$0xf]
      %v2112 = vld [vmem:[#allocation2 + $0x48] sm:$0xf]
      %v2113 = vld [vmem:[#allocation2 + $0x4c] sm:$0xf]
      %v2114 = vld [vmem:[#allocation2 + $0x50] sm:$0xf]
      %v2115 = vld [vmem:[#allocation2 + $0x54] sm:$0xf]
      %v2116 = vld [vmem:[#allocation2 + $0x58] sm:$0xf]
      %v2117 = vld [vmem:[#allocation2 + $0x5c] sm:$0xf]
      %v2118 = vld [vmem:[#allocation2 + $0x60] sm:$0xf]
      %v2119 = vld [vmem:[#allocation2 + $0x64] sm:$0xf]
      %v2120 = vld [vmem:[#allocation2 + $0x68] sm:$0xf]
      %v2121 = vld [vmem:[#allocation2 + $0x6c] sm:$0xf]
      %v2122 = vld [vmem:[#allocation2 + $0x70] sm:$0xf]
      %v2123 = vld [vmem:[#allocation2 + $0x74] sm:$0xf]
      %v2124 = vld [vmem:[#allocation2 + $0x78] sm:$0xf]
      %v2125 = vld [vmem:[#allocation2 + $0x7c] sm:$0xf]
      %v2158 = vunpack.c.l.b16 %v2094
      %v2159 = vunpack.c.l.b16 %v2095
      %v2160 = vunpack.c.l.b16 %v2096
      %v2161 = vunpack.c.l.b16 %v2097
      %v2162 = vunpack.c.l.b16 %v2098
      %v2163 = vunpack.c.l.b16 %v2099
      %v2164 = vunpack.c.l.b16 %v2100
      %v2165 = vunpack.c.l.b16 %v2101
      %v2166 = vunpack.c.l.b16 %v2102
      %v2167 = vunpack.c.l.b16 %v2103
      %v2168 = vunpack.c.l.b16 %v2104
      %v2169 = vunpack.c.l.b16 %v2105
      %v2170 = vunpack.c.l.b16 %v2106
      %v2171 = vunpack.c.l.b16 %v2107
      %v2172 = vunpack.c.l.b16 %v2108
      %v2173 = vunpack.c.l.b16 %v2109
      %v2174 = vunpack.c.l.b16 %v2110
      %v2175 = vunpack.c.l.b16 %v2111
      %v2176 = vunpack.c.l.b16 %v2112
      %v2177 = vunpack.c.l.b16 %v2113
      %v2178 = vunpack.c.l.b16 %v2114
      %v2179 = vunpack.c.l.b16 %v2115
      %v2180 = vunpack.c.l.b16 %v2116
      %v2181 = vunpack.c.l.b16 %v2117
      %v2182 = vunpack.c.l.b16 %v2118
      %v2183 = vunpack.c.l.b16 %v2119
      %v2184 = vunpack.c.l.b16 %v2120
      %v2185 = vunpack.c.l.b16 %v2121
      %v2186 = vunpack.c.l.b16 %v2122
      %v2187 = vunpack.c.l.b16 %v2123
      %v2188 = vunpack.c.l.b16 %v2124
      %v2189 = vunpack.c.l.b16 %v2125
      %v2190 = vpack.c.b16 %v2159, %v2158
      %v2191 = vpack.c.b16 %v2161, %v2160
      %v2192 = vpack.c.b16 %v2163, %v2162
      %v2193 = vpack.c.b16 %v2165, %v2164
      %v2194 = vpack.c.b16 %v2167, %v2166
      %v2195 = vpack.c.b16 %v2169, %v2168
      %v2196 = vpack.c.b16 %v2171, %v2170
      %v2197 = vpack.c.b16 %v2173, %v2172
      %v2198 = vpack.c.b16 %v2175, %v2174
      %v2199 = vpack.c.b16 %v2177, %v2176
      %v2200 = vpack.c.b16 %v2179, %v2178
      %v2201 = vpack.c.b16 %v2181, %v2180
      %v2202 = vpack.c.b16 %v2183, %v2182
      %v2203 = vpack.c.b16 %v2185, %v2184
      %v2204 = vpack.c.b16 %v2187, %v2186
      %v2205 = vpack.c.b16 %v2189, %v2188
      %2206 = vrot.lane.b32.xlu0 %v1203, 80
      %v2207 = vpop.permute.xlu0 %2206
      %2208 = vrot.lane.b32.xlu0 %v1204, 80
      %v2209 = vpop.permute.xlu0 %2208
      %2210 = vrot.lane.b32.xlu0 %v1205, 80
      %v2211 = vpop.permute.xlu0 %2210
      %2212 = vrot.lane.b32.xlu0 %v1206, 80
      %v2213 = vpop.permute.xlu0 %2212
      %v2219 = vsel %vm1219, %v2190, 0
      %v2222 = vsel %vm1219, %v2191, 0
      %v2225 = vsel %vm1219, %v2192, 0
      %v2228 = vsel %vm1219, %v2193, 0
      %v2231 = vsel %vm1219, %v2194, 0
      %v2234 = vsel %vm1219, %v2195, 0
      %v2237 = vsel %vm1219, %v2196, 0
      %v2240 = vsel %vm1219, %v2197, 0
      %v2243 = vsel %vm1219, %v2198, 0
      %v2246 = vsel %vm1219, %v2199, 0
      %v2249 = vsel %vm1219, %v2200, 0
      %v2252 = vsel %vm1219, %v2201, 0
      %v2255 = vsel %vm1219, %v2202, 0
      %v2258 = vsel %vm1219, %v2203, 0
      %v2261 = vsel %vm1219, %v2204, 0
      %v2264 = vsel %vm1219, %v2205, 0
      %2266 = vmatpush.bf16.msra.mxu0 0
      %2267 = vmatpush.bf16.msra.mxu0 0
      %2268 = vmatpush.bf16.msra.mxu0 0
      %2269 = vmatpush.bf16.msra.mxu0 0
      %2270 = vmatpush.bf16.msra.mxu0 %v2213
      %2271 = vmatpush.bf16.msra.mxu0 %v2211
      %2272 = vmatpush.bf16.msra.mxu0 %v2209
      %2273 = vmatpush.bf16.msra.mxu0 %v2207
      %2274 = vmatmul.bf16.gmra.mxu0 %v2219
      %v2275 = vpop.f32.mrf.mxu0
      %v2276 = vadd.f32 0.0, %v2275
      %v2277 = vpop.f32.mrf.mxu0
      %v2278 = vadd.f32 0.0, %v2277
      %2279 = vmatmul.bf16.gmra.mxu0 %v2222
      %v2280 = vpop.f32.mrf.mxu0
      %v2281 = vadd.f32 0.0, %v2280
      %v2282 = vpop.f32.mrf.mxu0
      %v2283 = vadd.f32 0.0, %v2282
      %2284 = vmatmul.bf16.gmra.mxu0 %v2225
      %v2285 = vpop.f32.mrf.mxu0
      %v2286 = vadd.f32 0.0, %v2285
      %v2287 = vpop.f32.mrf.mxu0
      %v2288 = vadd.f32 0.0, %v2287
      %2289 = vmatmul.bf16.gmra.mxu0 %v2228
      %v2290 = vpop.f32.mrf.mxu0
      %v2291 = vadd.f32 0.0, %v2290
      %v2292 = vpop.f32.mrf.mxu0
      %v2293 = vadd.f32 0.0, %v2292
      %2294 = vmatmul.bf16.gmra.mxu0 %v2231
      %v2295 = vpop.f32.mrf.mxu0
      %v2296 = vadd.f32 0.0, %v2295
      %v2297 = vpop.f32.mrf.mxu0
      %v2298 = vadd.f32 0.0, %v2297
      %2299 = vmatmul.bf16.gmra.mxu0 %v2234
      %v2300 = vpop.f32.mrf.mxu0
      %v2301 = vadd.f32 0.0, %v2300
      %v2302 = vpop.f32.mrf.mxu0
      %v2303 = vadd.f32 0.0, %v2302
      %2304 = vmatmul.bf16.gmra.mxu0 %v2237
      %v2305 = vpop.f32.mrf.mxu0
      %v2306 = vadd.f32 0.0, %v2305
      %v2307 = vpop.f32.mrf.mxu0
      %v2308 = vadd.f32 0.0, %v2307
      %2309 = vmatmul.bf16.gmra.mxu0 %v2240
      %v2310 = vpop.f32.mrf.mxu0
      %v2311 = vadd.f32 0.0, %v2310
      %v2312 = vpop.f32.mrf.mxu0
      %v2313 = vadd.f32 0.0, %v2312
      %2314 = vmatmul.bf16.gmra.mxu0 %v2243
      %v2315 = vpop.f32.mrf.mxu0
      %v2316 = vadd.f32 0.0, %v2315
      %v2317 = vpop.f32.mrf.mxu0
      %v2318 = vadd.f32 0.0, %v2317
      %2319 = vmatmul.bf16.gmra.mxu0 %v2246
      %v2320 = vpop.f32.mrf.mxu0
      %v2321 = vadd.f32 0.0, %v2320
      %v2322 = vpop.f32.mrf.mxu0
      %v2323 = vadd.f32 0.0, %v2322
      %2324 = vmatmul.bf16.gmra.mxu0 %v2249
      %v2325 = vpop.f32.mrf.mxu0
      %v2326 = vadd.f32 0.0, %v2325
      %v2327 = vpop.f32.mrf.mxu0
      %v2328 = vadd.f32 0.0, %v2327
      %2329 = vmatmul.bf16.gmra.mxu0 %v2252
      %v2330 = vpop.f32.mrf.mxu0
      %v2331 = vadd.f32 0.0, %v2330
      %v2332 = vpop.f32.mrf.mxu0
      %v2333 = vadd.f32 0.0, %v2332
      %2334 = vmatmul.bf16.gmra.mxu0 %v2255
      %v2335 = vpop.f32.mrf.mxu0
      %v2336 = vadd.f32 0.0, %v2335
      %v2337 = vpop.f32.mrf.mxu0
      %v2338 = vadd.f32 0.0, %v2337
      %2339 = vmatmul.bf16.gmra.mxu0 %v2258
      %v2340 = vpop.f32.mrf.mxu0
      %v2341 = vadd.f32 0.0, %v2340
      %v2342 = vpop.f32.mrf.mxu0
      %v2343 = vadd.f32 0.0, %v2342
      %2344 = vmatmul.bf16.gmra.mxu0 %v2261
      %v2345 = vpop.f32.mrf.mxu0
      %v2346 = vadd.f32 0.0, %v2345
      %v2347 = vpop.f32.mrf.mxu0
      %v2348 = vadd.f32 0.0, %v2347
      %2349 = vmatmul.bf16.gmra.mxu0 %v2264
      %v2350 = vpop.f32.mrf.mxu0
      %v2351 = vadd.f32 0.0, %v2350
      %v2352 = vpop.f32.mrf.mxu0
      %v2353 = vadd.f32 0.0, %v2352
      %2354 = vdwg.mxu0
      %2387 = vrot.lane.b32.xlu0 %v2276, 8
      %v2388 = vpop.permute.xlu0 %2387
      %2389 = vrot.lane.b32.xlu0 %v2278, 8
      %v2390 = vpop.permute.xlu0 %2389
      %2391 = vrot.lane.b32.xlu0 %v2281, 8
      %v2392 = vpop.permute.xlu0 %2391
      %2393 = vrot.lane.b32.xlu0 %v2283, 8
      %v2394 = vpop.permute.xlu0 %2393
      %2395 = vrot.lane.b32.xlu0 %v2286, 8
      %v2396 = vpop.permute.xlu0 %2395
      %2397 = vrot.lane.b32.xlu0 %v2288, 8
      %v2398 = vpop.permute.xlu0 %2397
      %2399 = vrot.lane.b32.xlu0 %v2291, 8
      %v2400 = vpop.permute.xlu0 %2399
      %2401 = vrot.lane.b32.xlu0 %v2293, 8
      %v2402 = vpop.permute.xlu0 %2401
      %2403 = vrot.lane.b32.xlu0 %v2296, 8
      %v2404 = vpop.permute.xlu0 %2403
      %2405 = vrot.lane.b32.xlu0 %v2298, 8
      %v2406 = vpop.permute.xlu0 %2405
      %2407 = vrot.lane.b32.xlu0 %v2301, 8
      %v2408 = vpop.permute.xlu0 %2407
      %2409 = vrot.lane.b32.xlu0 %v2303, 8
      %v2410 = vpop.permute.xlu0 %2409
      %2411 = vrot.lane.b32.xlu0 %v2306, 8
      %v2412 = vpop.permute.xlu0 %2411
      %2413 = vrot.lane.b32.xlu0 %v2308, 8
      %v2414 = vpop.permute.xlu0 %2413
      %2415 = vrot.lane.b32.xlu0 %v2311, 8
      %v2416 = vpop.permute.xlu0 %2415
      %2417 = vrot.lane.b32.xlu0 %v2313, 8
      %v2418 = vpop.permute.xlu0 %2417
      %2419 = vrot.lane.b32.xlu0 %v2316, 8
      %v2420 = vpop.permute.xlu0 %2419
      %2421 = vrot.lane.b32.xlu0 %v2318, 8
      %v2422 = vpop.permute.xlu0 %2421
      %2423 = vrot.lane.b32.xlu0 %v2321, 8
      %v2424 = vpop.permute.xlu0 %2423
      %2425 = vrot.lane.b32.xlu0 %v2323, 8
      %v2426 = vpop.permute.xlu0 %2425
      %2427 = vrot.lane.b32.xlu0 %v2326, 8
      %v2428 = vpop.permute.xlu0 %2427
      %2429 = vrot.lane.b32.xlu0 %v2328, 8
      %v2430 = vpop.permute.xlu0 %2429
      %2431 = vrot.lane.b32.xlu0 %v2331, 8
      %v2432 = vpop.permute.xlu0 %2431
      %2433 = vrot.lane.b32.xlu0 %v2333, 8
      %v2434 = vpop.permute.xlu0 %2433
      %2435 = vrot.lane.b32.xlu0 %v2336, 8
      %v2436 = vpop.permute.xlu0 %2435
      %2437 = vrot.lane.b32.xlu0 %v2338, 8
      %v2438 = vpop.permute.xlu0 %2437
      %2439 = vrot.lane.b32.xlu0 %v2341, 8
      %v2440 = vpop.permute.xlu0 %2439
      %2441 = vrot.lane.b32.xlu0 %v2343, 8
      %v2442 = vpop.permute.xlu0 %2441
      %2443 = vrot.lane.b32.xlu0 %v2346, 8
      %v2444 = vpop.permute.xlu0 %2443
      %2445 = vrot.lane.b32.xlu0 %v2348, 8
      %v2446 = vpop.permute.xlu0 %2445
      %2447 = vrot.lane.b32.xlu0 %v2351, 8
      %v2448 = vpop.permute.xlu0 %2447
      %2449 = vrot.lane.b32.xlu0 %v2353, 8
      %v2450 = vpop.permute.xlu0 %2449
      %v2483 = vmul.f32 %v343, %v2388
      %v2484 = vmul.f32 %v345, %v2390
      %v2485 = vmul.f32 %v348, %v2392
      %v2486 = vmul.f32 %v350, %v2394
      %v2487 = vmul.f32 %v353, %v2396
      %v2488 = vmul.f32 %v355, %v2398
      %v2489 = vmul.f32 %v358, %v2400
      %v2490 = vmul.f32 %v360, %v2402
      %v2491 = vmul.f32 %v343, %v2404
      %v2492 = vmul.f32 %v345, %v2406
      %v2493 = vmul.f32 %v348, %v2408
      %v2494 = vmul.f32 %v350, %v2410
      %v2495 = vmul.f32 %v353, %v2412
      %v2496 = vmul.f32 %v355, %v2414
      %v2497 = vmul.f32 %v358, %v2416
      %v2498 = vmul.f32 %v360, %v2418
      %v2499 = vmul.f32 %v343, %v2420
      %v2500 = vmul.f32 %v345, %v2422
      %v2501 = vmul.f32 %v348, %v2424
      %v2502 = vmul.f32 %v350, %v2426
      %v2503 = vmul.f32 %v353, %v2428
      %v2504 = vmul.f32 %v355, %v2430
      %v2505 = vmul.f32 %v358, %v2432
      %v2506 = vmul.f32 %v360, %v2434
      %v2507 = vmul.f32 %v343, %v2436
      %v2508 = vmul.f32 %v345, %v2438
      %v2509 = vmul.f32 %v348, %v2440
      %v2510 = vmul.f32 %v350, %v2442
      %v2511 = vmul.f32 %v353, %v2444
      %v2512 = vmul.f32 %v355, %v2446
      %v2513 = vmul.f32 %v358, %v2448
      %v2514 = vmul.f32 %v360, %v2450
      %2547 = vrot.lane.b32.xlu0 %v2483, 120
      %v2548 = vpop.permute.xlu0 %2547
      %2549 = vrot.lane.b32.xlu0 %v2484, 120
      %v2550 = vpop.permute.xlu0 %2549
      %2551 = vrot.lane.b32.xlu0 %v2485, 120
      %v2552 = vpop.permute.xlu0 %2551
      %2553 = vrot.lane.b32.xlu0 %v2486, 120
      %v2554 = vpop.permute.xlu0 %2553
      %2555 = vrot.lane.b32.xlu0 %v2487, 120
      %v2556 = vpop.permute.xlu0 %2555
      %2557 = vrot.lane.b32.xlu0 %v2488, 120
      %v2558 = vpop.permute.xlu0 %2557
      %2559 = vrot.lane.b32.xlu0 %v2489, 120
      %v2560 = vpop.permute.xlu0 %2559
      %2561 = vrot.lane.b32.xlu0 %v2490, 120
      %v2562 = vpop.permute.xlu0 %2561
      %2563 = vrot.lane.b32.xlu0 %v2491, 120
      %v2564 = vpop.permute.xlu0 %2563
      %2565 = vrot.lane.b32.xlu0 %v2492, 120
      %v2566 = vpop.permute.xlu0 %2565
      %2567 = vrot.lane.b32.xlu0 %v2493, 120
      %v2568 = vpop.permute.xlu0 %2567
      %2569 = vrot.lane.b32.xlu0 %v2494, 120
      %v2570 = vpop.permute.xlu0 %2569
      %2571 = vrot.lane.b32.xlu0 %v2495, 120
      %v2572 = vpop.permute.xlu0 %2571
      %2573 = vrot.lane.b32.xlu0 %v2496, 120
      %v2574 = vpop.permute.xlu0 %2573
      %2575 = vrot.lane.b32.xlu0 %v2497, 120
      %v2576 = vpop.permute.xlu0 %2575
      %2577 = vrot.lane.b32.xlu0 %v2498, 120
      %v2578 = vpop.permute.xlu0 %2577
      %2579 = vrot.lane.b32.xlu0 %v2499, 120
      %v2580 = vpop.permute.xlu0 %2579
      %2581 = vrot.lane.b32.xlu0 %v2500, 120
      %v2582 = vpop.permute.xlu0 %2581
      %2583 = vrot.lane.b32.xlu0 %v2501, 120
      %v2584 = vpop.permute.xlu0 %2583
      %2585 = vrot.lane.b32.xlu0 %v2502, 120
      %v2586 = vpop.permute.xlu0 %2585
      %2587 = vrot.lane.b32.xlu0 %v2503, 120
      %v2588 = vpop.permute.xlu0 %2587
      %2589 = vrot.lane.b32.xlu0 %v2504, 120
      %v2590 = vpop.permute.xlu0 %2589
      %2591 = vrot.lane.b32.xlu0 %v2505, 120
      %v2592 = vpop.permute.xlu0 %2591
      %2593 = vrot.lane.b32.xlu0 %v2506, 120
      %v2594 = vpop.permute.xlu0 %2593
      %2595 = vrot.lane.b32.xlu0 %v2507, 120
      %v2596 = vpop.permute.xlu0 %2595
      %2597 = vrot.lane.b32.xlu0 %v2508, 120
      %v2598 = vpop.permute.xlu0 %2597
      %2599 = vrot.lane.b32.xlu0 %v2509, 120
      %v2600 = vpop.permute.xlu0 %2599
      %2601 = vrot.lane.b32.xlu0 %v2510, 120
      %v2602 = vpop.permute.xlu0 %2601
      %2603 = vrot.lane.b32.xlu0 %v2511, 120
      %v2604 = vpop.permute.xlu0 %2603
      %2605 = vrot.lane.b32.xlu0 %v2512, 120
      %v2606 = vpop.permute.xlu0 %2605
      %2607 = vrot.lane.b32.xlu0 %v2513, 120
      %v2608 = vpop.permute.xlu0 %2607
      %2609 = vrot.lane.b32.xlu0 %v2514, 120
      %v2610 = vpop.permute.xlu0 %2609
      %v2643 = vsel %vm1389, %v2548, 0.0
      %2644 = vadd.xlane.f32.xlu0 %v2643
      %v2645 = vpop.xlane.xlu0 %2644
      %v2646 = vsel %vm1389, %v2550, 0.0
      %2647 = vadd.xlane.f32.xlu0 %v2646
      %v2648 = vpop.xlane.xlu0 %2647
      %v2649 = vsel %vm1389, %v2552, 0.0
      %2650 = vadd.xlane.f32.xlu0 %v2649
      %v2651 = vpop.xlane.xlu0 %2650
      %v2652 = vsel %vm1389, %v2554, 0.0
      %2653 = vadd.xlane.f32.xlu0 %v2652
      %v2654 = vpop.xlane.xlu0 %2653
      %v2655 = vsel %vm1389, %v2556, 0.0
      %2656 = vadd.xlane.f32.xlu0 %v2655
      %v2657 = vpop.xlane.xlu0 %2656
      %v2658 = vsel %vm1389, %v2558, 0.0
      %2659 = vadd.xlane.f32.xlu0 %v2658
      %v2660 = vpop.xlane.xlu0 %2659
      %v2661 = vsel %vm1389, %v2560, 0.0
      %2662 = vadd.xlane.f32.xlu0 %v2661
      %v2663 = vpop.xlane.xlu0 %2662
      %v2664 = vsel %vm1389, %v2562, 0.0
      %2665 = vadd.xlane.f32.xlu0 %v2664
      %v2666 = vpop.xlane.xlu0 %2665
      %v2667 = vsel %vm1389, %v2564, 0.0
      %2668 = vadd.xlane.f32.xlu0 %v2667
      %v2669 = vpop.xlane.xlu0 %2668
      %v2670 = vsel %vm1389, %v2566, 0.0
      %2671 = vadd.xlane.f32.xlu0 %v2670
      %v2672 = vpop.xlane.xlu0 %2671
      %v2673 = vsel %vm1389, %v2568, 0.0
      %2674 = vadd.xlane.f32.xlu0 %v2673
      %v2675 = vpop.xlane.xlu0 %2674
      %v2676 = vsel %vm1389, %v2570, 0.0
      %2677 = vadd.xlane.f32.xlu0 %v2676
      %v2678 = vpop.xlane.xlu0 %2677
      %v2679 = vsel %vm1389, %v2572, 0.0
      %2680 = vadd.xlane.f32.xlu0 %v2679
      %v2681 = vpop.xlane.xlu0 %2680
      %v2682 = vsel %vm1389, %v2574, 0.0
      %2683 = vadd.xlane.f32.xlu0 %v2682
      %v2684 = vpop.xlane.xlu0 %2683
      %v2685 = vsel %vm1389, %v2576, 0.0
      %2686 = vadd.xlane.f32.xlu0 %v2685
      %v2687 = vpop.xlane.xlu0 %2686
      %v2688 = vsel %vm1389, %v2578, 0.0
      %2689 = vadd.xlane.f32.xlu0 %v2688
      %v2690 = vpop.xlane.xlu0 %2689
      %v2691 = vsel %vm1389, %v2580, 0.0
      %2692 = vadd.xlane.f32.xlu0 %v2691
      %v2693 = vpop.xlane.xlu0 %2692
      %v2694 = vsel %vm1389, %v2582, 0.0
      %2695 = vadd.xlane.f32.xlu0 %v2694
      %v2696 = vpop.xlane.xlu0 %2695
      %v2697 = vsel %vm1389, %v2584, 0.0
      %2698 = vadd.xlane.f32.xlu0 %v2697
      %v2699 = vpop.xlane.xlu0 %2698
      %v2700 = vsel %vm1389, %v2586, 0.0
      %2701 = vadd.xlane.f32.xlu0 %v2700
      %v2702 = vpop.xlane.xlu0 %2701
      %v2703 = vsel %vm1389, %v2588, 0.0
      %2704 = vadd.xlane.f32.xlu0 %v2703
      %v2705 = vpop.xlane.xlu0 %2704
      %v2706 = vsel %vm1389, %v2590, 0.0
      %2707 = vadd.xlane.f32.xlu0 %v2706
      %v2708 = vpop.xlane.xlu0 %2707
      %v2709 = vsel %vm1389, %v2592, 0.0
      %2710 = vadd.xlane.f32.xlu0 %v2709
      %v2711 = vpop.xlane.xlu0 %2710
      %v2712 = vsel %vm1389, %v2594, 0.0
      %2713 = vadd.xlane.f32.xlu0 %v2712
      %v2714 = vpop.xlane.xlu0 %2713
      %v2715 = vsel %vm1389, %v2596, 0.0
      %2716 = vadd.xlane.f32.xlu0 %v2715
      %v2717 = vpop.xlane.xlu0 %2716
      %v2718 = vsel %vm1389, %v2598, 0.0
      %2719 = vadd.xlane.f32.xlu0 %v2718
      %v2720 = vpop.xlane.xlu0 %2719
      %v2721 = vsel %vm1389, %v2600, 0.0
      %2722 = vadd.xlane.f32.xlu0 %v2721
      %v2723 = vpop.xlane.xlu0 %2722
      %v2724 = vsel %vm1389, %v2602, 0.0
      %2725 = vadd.xlane.f32.xlu0 %v2724
      %v2726 = vpop.xlane.xlu0 %2725
      %v2727 = vsel %vm1389, %v2604, 0.0
      %2728 = vadd.xlane.f32.xlu0 %v2727
      %v2729 = vpop.xlane.xlu0 %2728
      %v2730 = vsel %vm1389, %v2606, 0.0
      %2731 = vadd.xlane.f32.xlu0 %v2730
      %v2732 = vpop.xlane.xlu0 %2731
      %v2733 = vsel %vm1389, %v2608, 0.0
      %2734 = vadd.xlane.f32.xlu0 %v2733
      %v2735 = vpop.xlane.xlu0 %2734
      %v2736 = vsel %vm1389, %v2610, 0.0
      %2737 = vadd.xlane.f32.xlu0 %v2736
      %v2738 = vpop.xlane.xlu0 %2737
      %2739 = vset.pattern.permute.xlu0 16
      %2740 = vperm.xlu0 %2739, %v413
      %v2741 = vpop.permute.xlu0 %2740
      %2743 = vset.pattern.permute.xlu0 16
      %2744 = vperm.xlu0 %2743, %v416
      %v2745 = vpop.permute.xlu0 %2744
      %2747 = vset.pattern.permute.xlu0 16
      %2748 = vperm.xlu0 %2747, %v419
      %v2749 = vpop.permute.xlu0 %2748
      %2751 = vset.pattern.permute.xlu0 16
      %2752 = vperm.xlu0 %2751, %v422
      %v2753 = vpop.permute.xlu0 %2752
      %2755 = vset.pattern.permute.xlu0 16
      %2756 = vperm.xlu0 %2755, %v425
      %v2757 = vpop.permute.xlu0 %2756
      %2759 = vset.pattern.permute.xlu0 16
      %2760 = vperm.xlu0 %2759, %v428
      %v2761 = vpop.permute.xlu0 %2760
      %2763 = vset.pattern.permute.xlu0 16
      %2764 = vperm.xlu0 %2763, %v431
      %v2765 = vpop.permute.xlu0 %2764
      %2767 = vset.pattern.permute.xlu0 16
      %2768 = vperm.xlu0 %2767, %v434
      %v2769 = vpop.permute.xlu0 %2768
      %v2771 = vsub.f32 %v2741, %v449
      %v2772 = vsub.f32 %v2745, %v449
      %v2773 = vsub.f32 %v2749, %v449
      %v2774 = vsub.f32 %v2753, %v449
      %v2775 = vsub.f32 %v2757, %v449
      %v2776 = vsub.f32 %v2761, %v449
      %v2777 = vsub.f32 %v2765, %v449
      %v2778 = vsub.f32 %v2769, %v449
      %v2779 = vand.u32 2147483647, %v2771
      %v2780 = vand.u32 2147483647, %v2772
      %v2781 = vand.u32 2147483647, %v2773
      %v2782 = vand.u32 2147483647, %v2774
      %v2783 = vand.u32 2147483647, %v2775
      %v2784 = vand.u32 2147483647, %v2776
      %v2785 = vand.u32 2147483647, %v2777
      %v2786 = vand.u32 2147483647, %v2778
      %v2787 = vsub.f32 1.0, %v2779
      %v2788 = vsub.f32 1.0, %v2780
      %v2789 = vsub.f32 1.0, %v2781
      %v2790 = vsub.f32 1.0, %v2782
      %v2791 = vsub.f32 1.0, %v2783
      %v2792 = vsub.f32 1.0, %v2784
      %v2793 = vsub.f32 1.0, %v2785
      %v2794 = vsub.f32 1.0, %v2786
      %v2795 = vmax.f32 %v2787, 0.0
      %v2796 = vmax.f32 %v2788, 0.0
      %v2797 = vmax.f32 %v2789, 0.0
      %v2798 = vmax.f32 %v2790, 0.0
      %v2799 = vmax.f32 %v2791, 0.0
      %v2800 = vmax.f32 %v2792, 0.0
      %v2801 = vmax.f32 %v2793, 0.0
      %v2802 = vmax.f32 %v2794, 0.0
      %2803 = vset.pattern.permute.xlu0 20
      %2804 = vperm.xlu0 %2803, %v413
      %v2805 = vpop.permute.xlu0 %2804
      %2807 = vset.pattern.permute.xlu0 20
      %2808 = vperm.xlu0 %2807, %v416
      %v2809 = vpop.permute.xlu0 %2808
      %2811 = vset.pattern.permute.xlu0 20
      %2812 = vperm.xlu0 %2811, %v419
      %v2813 = vpop.permute.xlu0 %2812
      %2815 = vset.pattern.permute.xlu0 20
      %2816 = vperm.xlu0 %2815, %v422
      %v2817 = vpop.permute.xlu0 %2816
      %2819 = vset.pattern.permute.xlu0 20
      %2820 = vperm.xlu0 %2819, %v425
      %v2821 = vpop.permute.xlu0 %2820
      %2823 = vset.pattern.permute.xlu0 20
      %2824 = vperm.xlu0 %2823, %v428
      %v2825 = vpop.permute.xlu0 %2824
      %2827 = vset.pattern.permute.xlu0 20
      %2828 = vperm.xlu0 %2827, %v431
      %v2829 = vpop.permute.xlu0 %2828
      %2831 = vset.pattern.permute.xlu0 20
      %2832 = vperm.xlu0 %2831, %v434
      %v2833 = vpop.permute.xlu0 %2832
      %v2835 = vsub.f32 %v2805, %v447
      %v2836 = vsub.f32 %v2809, %v447
      %v2837 = vsub.f32 %v2813, %v447
      %v2838 = vsub.f32 %v2817, %v447
      %v2839 = vsub.f32 %v2821, %v447
      %v2840 = vsub.f32 %v2825, %v447
      %v2841 = vsub.f32 %v2829, %v447
      %v2842 = vsub.f32 %v2833, %v447
      %v2843 = vand.u32 2147483647, %v2835
      %v2844 = vand.u32 2147483647, %v2836
      %v2845 = vand.u32 2147483647, %v2837
      %v2846 = vand.u32 2147483647, %v2838
      %v2847 = vand.u32 2147483647, %v2839
      %v2848 = vand.u32 2147483647, %v2840
      %v2849 = vand.u32 2147483647, %v2841
      %v2850 = vand.u32 2147483647, %v2842
      %v2851 = vsub.f32 1.0, %v2843
      %v2852 = vsub.f32 1.0, %v2844
      %v2853 = vsub.f32 1.0, %v2845
      %v2854 = vsub.f32 1.0, %v2846
      %v2855 = vsub.f32 1.0, %v2847
      %v2856 = vsub.f32 1.0, %v2848
      %v2857 = vsub.f32 1.0, %v2849
      %v2858 = vsub.f32 1.0, %v2850
      %v2859 = vmax.f32 %v2851, 0.0
      %v2860 = vmax.f32 %v2852, 0.0
      %v2861 = vmax.f32 %v2853, 0.0
      %v2862 = vmax.f32 %v2854, 0.0
      %v2863 = vmax.f32 %v2855, 0.0
      %v2864 = vmax.f32 %v2856, 0.0
      %v2865 = vmax.f32 %v2857, 0.0
      %v2866 = vmax.f32 %v2858, 0.0
      %v2867 = vmul.f32 %v2795, %v2859
      %v2868 = vmul.f32 %v2796, %v2860
      %v2869 = vmul.f32 %v2797, %v2861
      %v2870 = vmul.f32 %v2798, %v2862
      %v2871 = vmul.f32 %v2799, %v2863
      %v2872 = vmul.f32 %v2800, %v2864
      %v2873 = vmul.f32 %v2801, %v2865
      %v2874 = vmul.f32 %v2802, %v2866
      %v2875 = vpack.c.bf16 %v2867, %v2867
      %v2876 = vpack.c.bf16 %v2868, %v2868
      %v2877 = vpack.c.bf16 %v2869, %v2869
      %v2878 = vpack.c.bf16 %v2870, %v2870
      %v2879 = vpack.c.bf16 %v2871, %v2871
      %v2880 = vpack.c.bf16 %v2872, %v2872
      %v2881 = vpack.c.bf16 %v2873, %v2873
      %v2882 = vpack.c.bf16 %v2874, %v2874
      %2883 = vst.msk [vmem:[#allocation2] sm:$0xf] %vm610, %v2875
      %2884 = vst.msk [vmem:[#allocation2 + $0x4] sm:$0xf] %vm610, %v2876
      %2885 = vst.msk [vmem:[#allocation2 + $0x8] sm:$0xf] %vm610, %v2877
      %2886 = vst.msk [vmem:[#allocation2 + $0xc] sm:$0xf] %vm610, %v2878
      %2887 = vst.msk [vmem:[#allocation2 + $0x10] sm:$0xf] %vm610, %v2879
      %2888 = vst.msk [vmem:[#allocation2 + $0x14] sm:$0xf] %vm610, %v2880
      %2889 = vst.msk [vmem:[#allocation2 + $0x18] sm:$0xf] %vm610, %v2881
      %2890 = vst.msk [vmem:[#allocation2 + $0x1c] sm:$0xf] %vm610, %v2882
      %2891 = vset.pattern.permute.xlu0 17
      %2892 = vperm.xlu0 %2891, %v413
      %v2893 = vpop.permute.xlu0 %2892
      %2895 = vset.pattern.permute.xlu0 17
      %2896 = vperm.xlu0 %2895, %v416
      %v2897 = vpop.permute.xlu0 %2896
      %2899 = vset.pattern.permute.xlu0 17
      %2900 = vperm.xlu0 %2899, %v419
      %v2901 = vpop.permute.xlu0 %2900
      %2903 = vset.pattern.permute.xlu0 17
      %2904 = vperm.xlu0 %2903, %v422
      %v2905 = vpop.permute.xlu0 %2904
      %2907 = vset.pattern.permute.xlu0 17
      %2908 = vperm.xlu0 %2907, %v425
      %v2909 = vpop.permute.xlu0 %2908
      %2911 = vset.pattern.permute.xlu0 17
      %2912 = vperm.xlu0 %2911, %v428
      %v2913 = vpop.permute.xlu0 %2912
      %2915 = vset.pattern.permute.xlu0 17
      %2916 = vperm.xlu0 %2915, %v431
      %v2917 = vpop.permute.xlu0 %2916
      %2919 = vset.pattern.permute.xlu0 17
      %2920 = vperm.xlu0 %2919, %v434
      %v2921 = vpop.permute.xlu0 %2920
      %v2923 = vsub.f32 %v2893, %v449
      %v2924 = vsub.f32 %v2897, %v449
      %v2925 = vsub.f32 %v2901, %v449
      %v2926 = vsub.f32 %v2905, %v449
      %v2927 = vsub.f32 %v2909, %v449
      %v2928 = vsub.f32 %v2913, %v449
      %v2929 = vsub.f32 %v2917, %v449
      %v2930 = vsub.f32 %v2921, %v449
      %v2931 = vand.u32 2147483647, %v2923
      %v2932 = vand.u32 2147483647, %v2924
      %v2933 = vand.u32 2147483647, %v2925
      %v2934 = vand.u32 2147483647, %v2926
      %v2935 = vand.u32 2147483647, %v2927
      %v2936 = vand.u32 2147483647, %v2928
      %v2937 = vand.u32 2147483647, %v2929
      %v2938 = vand.u32 2147483647, %v2930
      %v2939 = vsub.f32 1.0, %v2931
      %v2940 = vsub.f32 1.0, %v2932
      %v2941 = vsub.f32 1.0, %v2933
      %v2942 = vsub.f32 1.0, %v2934
      %v2943 = vsub.f32 1.0, %v2935
      %v2944 = vsub.f32 1.0, %v2936
      %v2945 = vsub.f32 1.0, %v2937
      %v2946 = vsub.f32 1.0, %v2938
      %v2947 = vmax.f32 %v2939, 0.0
      %v2948 = vmax.f32 %v2940, 0.0
      %v2949 = vmax.f32 %v2941, 0.0
      %v2950 = vmax.f32 %v2942, 0.0
      %v2951 = vmax.f32 %v2943, 0.0
      %v2952 = vmax.f32 %v2944, 0.0
      %v2953 = vmax.f32 %v2945, 0.0
      %v2954 = vmax.f32 %v2946, 0.0
      %2955 = vset.pattern.permute.xlu0 21
      %2956 = vperm.xlu0 %2955, %v413
      %v2957 = vpop.permute.xlu0 %2956
      %2959 = vset.pattern.permute.xlu0 21
      %2960 = vperm.xlu0 %2959, %v416
      %v2961 = vpop.permute.xlu0 %2960
      %2963 = vset.pattern.permute.xlu0 21
      %2964 = vperm.xlu0 %2963, %v419
      %v2965 = vpop.permute.xlu0 %2964
      %2967 = vset.pattern.permute.xlu0 21
      %2968 = vperm.xlu0 %2967, %v422
      %v2969 = vpop.permute.xlu0 %2968
      %2971 = vset.pattern.permute.xlu0 21
      %2972 = vperm.xlu0 %2971, %v425
      %v2973 = vpop.permute.xlu0 %2972
      %2975 = vset.pattern.permute.xlu0 21
      %2976 = vperm.xlu0 %2975, %v428
      %v2977 = vpop.permute.xlu0 %2976
      %2979 = vset.pattern.permute.xlu0 21
      %2980 = vperm.xlu0 %2979, %v431
      %v2981 = vpop.permute.xlu0 %2980
      %2983 = vset.pattern.permute.xlu0 21
      %2984 = vperm.xlu0 %2983, %v434
      %v2985 = vpop.permute.xlu0 %2984
      %v2987 = vsub.f32 %v2957, %v447
      %v2988 = vsub.f32 %v2961, %v447
      %v2989 = vsub.f32 %v2965, %v447
      %v2990 = vsub.f32 %v2969, %v447
      %v2991 = vsub.f32 %v2973, %v447
      %v2992 = vsub.f32 %v2977, %v447
      %v2993 = vsub.f32 %v2981, %v447
      %v2994 = vsub.f32 %v2985, %v447
      %v2995 = vand.u32 2147483647, %v2987
      %v2996 = vand.u32 2147483647, %v2988
      %v2997 = vand.u32 2147483647, %v2989
      %v2998 = vand.u32 2147483647, %v2990
      %v2999 = vand.u32 2147483647, %v2991
      %v3000 = vand.u32 2147483647, %v2992
      %v3001 = vand.u32 2147483647, %v2993
      %v3002 = vand.u32 2147483647, %v2994
      %v3003 = vsub.f32 1.0, %v2995
      %v3004 = vsub.f32 1.0, %v2996
      %v3005 = vsub.f32 1.0, %v2997
      %v3006 = vsub.f32 1.0, %v2998
      %v3007 = vsub.f32 1.0, %v2999
      %v3008 = vsub.f32 1.0, %v3000
      %v3009 = vsub.f32 1.0, %v3001
      %v3010 = vsub.f32 1.0, %v3002
      %v3011 = vmax.f32 %v3003, 0.0
      %v3012 = vmax.f32 %v3004, 0.0
      %v3013 = vmax.f32 %v3005, 0.0
      %v3014 = vmax.f32 %v3006, 0.0
      %v3015 = vmax.f32 %v3007, 0.0
      %v3016 = vmax.f32 %v3008, 0.0
      %v3017 = vmax.f32 %v3009, 0.0
      %v3018 = vmax.f32 %v3010, 0.0
      %v3019 = vmul.f32 %v2947, %v3011
      %v3020 = vmul.f32 %v2948, %v3012
      %v3021 = vmul.f32 %v2949, %v3013
      %v3022 = vmul.f32 %v2950, %v3014
      %v3023 = vmul.f32 %v2951, %v3015
      %v3024 = vmul.f32 %v2952, %v3016
      %v3025 = vmul.f32 %v2953, %v3017
      %v3026 = vmul.f32 %v2954, %v3018
      %v3027 = vpack.c.bf16 %v3019, %v3019
      %v3028 = vpack.c.bf16 %v3020, %v3020
      %v3029 = vpack.c.bf16 %v3021, %v3021
      %v3030 = vpack.c.bf16 %v3022, %v3022
      %v3031 = vpack.c.bf16 %v3023, %v3023
      %v3032 = vpack.c.bf16 %v3024, %v3024
      %v3033 = vpack.c.bf16 %v3025, %v3025
      %v3034 = vpack.c.bf16 %v3026, %v3026
      %3035 = vst.msk [vmem:[#allocation2 + $0x20] sm:$0xf] %vm610, %v3027
      %3036 = vst.msk [vmem:[#allocation2 + $0x24] sm:$0xf] %vm610, %v3028
      %3037 = vst.msk [vmem:[#allocation2 + $0x28] sm:$0xf] %vm610, %v3029
      %3038 = vst.msk [vmem:[#allocation2 + $0x2c] sm:$0xf] %vm610, %v3030
      %3039 = vst.msk [vmem:[#allocation2 + $0x30] sm:$0xf] %vm610, %v3031
      %3040 = vst.msk [vmem:[#allocation2 + $0x34] sm:$0xf] %vm610, %v3032
      %3041 = vst.msk [vmem:[#allocation2 + $0x38] sm:$0xf] %vm610, %v3033
      %3042 = vst.msk [vmem:[#allocation2 + $0x3c] sm:$0xf] %vm610, %v3034
      %3043 = vset.pattern.permute.xlu0 18
      %3044 = vperm.xlu0 %3043, %v413
      %v3045 = vpop.permute.xlu0 %3044
      %3047 = vset.pattern.permute.xlu0 18
      %3048 = vperm.xlu0 %3047, %v416
      %v3049 = vpop.permute.xlu0 %3048
      %3051 = vset.pattern.permute.xlu0 18
      %3052 = vperm.xlu0 %3051, %v419
      %v3053 = vpop.permute.xlu0 %3052
      %3055 = vset.pattern.permute.xlu0 18
      %3056 = vperm.xlu0 %3055, %v422
      %v3057 = vpop.permute.xlu0 %3056
      %3059 = vset.pattern.permute.xlu0 18
      %3060 = vperm.xlu0 %3059, %v425
      %v3061 = vpop.permute.xlu0 %3060
      %3063 = vset.pattern.permute.xlu0 18
      %3064 = vperm.xlu0 %3063, %v428
      %v3065 = vpop.permute.xlu0 %3064
      %3067 = vset.pattern.permute.xlu0 18
      %3068 = vperm.xlu0 %3067, %v431
      %v3069 = vpop.permute.xlu0 %3068
      %3071 = vset.pattern.permute.xlu0 18
      %3072 = vperm.xlu0 %3071, %v434
      %v3073 = vpop.permute.xlu0 %3072
      %v3075 = vsub.f32 %v3045, %v449
      %v3076 = vsub.f32 %v3049, %v449
      %v3077 = vsub.f32 %v3053, %v449
      %v3078 = vsub.f32 %v3057, %v449
      %v3079 = vsub.f32 %v3061, %v449
      %v3080 = vsub.f32 %v3065, %v449
      %v3081 = vsub.f32 %v3069, %v449
      %v3082 = vsub.f32 %v3073, %v449
      %v3083 = vand.u32 2147483647, %v3075
      %v3084 = vand.u32 2147483647, %v3076
      %v3085 = vand.u32 2147483647, %v3077
      %v3086 = vand.u32 2147483647, %v3078
      %v3087 = vand.u32 2147483647, %v3079
      %v3088 = vand.u32 2147483647, %v3080
      %v3089 = vand.u32 2147483647, %v3081
      %v3090 = vand.u32 2147483647, %v3082
      %v3091 = vsub.f32 1.0, %v3083
      %v3092 = vsub.f32 1.0, %v3084
      %v3093 = vsub.f32 1.0, %v3085
      %v3094 = vsub.f32 1.0, %v3086
      %v3095 = vsub.f32 1.0, %v3087
      %v3096 = vsub.f32 1.0, %v3088
      %v3097 = vsub.f32 1.0, %v3089
      %v3098 = vsub.f32 1.0, %v3090
      %v3099 = vmax.f32 %v3091, 0.0
      %v3100 = vmax.f32 %v3092, 0.0
      %v3101 = vmax.f32 %v3093, 0.0
      %v3102 = vmax.f32 %v3094, 0.0
      %v3103 = vmax.f32 %v3095, 0.0
      %v3104 = vmax.f32 %v3096, 0.0
      %v3105 = vmax.f32 %v3097, 0.0
      %v3106 = vmax.f32 %v3098, 0.0
      %3107 = vset.pattern.permute.xlu0 22
      %3108 = vperm.xlu0 %3107, %v413
      %v3109 = vpop.permute.xlu0 %3108
      %3111 = vset.pattern.permute.xlu0 22
      %3112 = vperm.xlu0 %3111, %v416
      %v3113 = vpop.permute.xlu0 %3112
      %3115 = vset.pattern.permute.xlu0 22
      %3116 = vperm.xlu0 %3115, %v419
      %v3117 = vpop.permute.xlu0 %3116
      %3119 = vset.pattern.permute.xlu0 22
      %3120 = vperm.xlu0 %3119, %v422
      %v3121 = vpop.permute.xlu0 %3120
      %3123 = vset.pattern.permute.xlu0 22
      %3124 = vperm.xlu0 %3123, %v425
      %v3125 = vpop.permute.xlu0 %3124
      %3127 = vset.pattern.permute.xlu0 22
      %3128 = vperm.xlu0 %3127, %v428
      %v3129 = vpop.permute.xlu0 %3128
      %3131 = vset.pattern.permute.xlu0 22
      %3132 = vperm.xlu0 %3131, %v431
      %v3133 = vpop.permute.xlu0 %3132
      %3135 = vset.pattern.permute.xlu0 22
      %3136 = vperm.xlu0 %3135, %v434
      %v3137 = vpop.permute.xlu0 %3136
      %v3139 = vsub.f32 %v3109, %v447
      %v3140 = vsub.f32 %v3113, %v447
      %v3141 = vsub.f32 %v3117, %v447
      %v3142 = vsub.f32 %v3121, %v447
      %v3143 = vsub.f32 %v3125, %v447
      %v3144 = vsub.f32 %v3129, %v447
      %v3145 = vsub.f32 %v3133, %v447
      %v3146 = vsub.f32 %v3137, %v447
      %v3147 = vand.u32 2147483647, %v3139
      %v3148 = vand.u32 2147483647, %v3140
      %v3149 = vand.u32 2147483647, %v3141
      %v3150 = vand.u32 2147483647, %v3142
      %v3151 = vand.u32 2147483647, %v3143
      %v3152 = vand.u32 2147483647, %v3144
      %v3153 = vand.u32 2147483647, %v3145
      %v3154 = vand.u32 2147483647, %v3146
      %v3155 = vsub.f32 1.0, %v3147
      %v3156 = vsub.f32 1.0, %v3148
      %v3157 = vsub.f32 1.0, %v3149
      %v3158 = vsub.f32 1.0, %v3150
      %v3159 = vsub.f32 1.0, %v3151
      %v3160 = vsub.f32 1.0, %v3152
      %v3161 = vsub.f32 1.0, %v3153
      %v3162 = vsub.f32 1.0, %v3154
      %v3163 = vmax.f32 %v3155, 0.0
      %v3164 = vmax.f32 %v3156, 0.0
      %v3165 = vmax.f32 %v3157, 0.0
      %v3166 = vmax.f32 %v3158, 0.0
      %v3167 = vmax.f32 %v3159, 0.0
      %v3168 = vmax.f32 %v3160, 0.0
      %v3169 = vmax.f32 %v3161, 0.0
      %v3170 = vmax.f32 %v3162, 0.0
      %v3171 = vmul.f32 %v3099, %v3163
      %v3172 = vmul.f32 %v3100, %v3164
      %v3173 = vmul.f32 %v3101, %v3165
      %v3174 = vmul.f32 %v3102, %v3166
      %v3175 = vmul.f32 %v3103, %v3167
      %v3176 = vmul.f32 %v3104, %v3168
      %v3177 = vmul.f32 %v3105, %v3169
      %v3178 = vmul.f32 %v3106, %v3170
      %v3179 = vpack.c.bf16 %v3171, %v3171
      %v3180 = vpack.c.bf16 %v3172, %v3172
      %v3181 = vpack.c.bf16 %v3173, %v3173
      %v3182 = vpack.c.bf16 %v3174, %v3174
      %v3183 = vpack.c.bf16 %v3175, %v3175
      %v3184 = vpack.c.bf16 %v3176, %v3176
      %v3185 = vpack.c.bf16 %v3177, %v3177
      %v3186 = vpack.c.bf16 %v3178, %v3178
      %3187 = vst.msk [vmem:[#allocation2 + $0x40] sm:$0xf] %vm610, %v3179
      %3188 = vst.msk [vmem:[#allocation2 + $0x44] sm:$0xf] %vm610, %v3180
      %3189 = vst.msk [vmem:[#allocation2 + $0x48] sm:$0xf] %vm610, %v3181
      %3190 = vst.msk [vmem:[#allocation2 + $0x4c] sm:$0xf] %vm610, %v3182
      %3191 = vst.msk [vmem:[#allocation2 + $0x50] sm:$0xf] %vm610, %v3183
      %3192 = vst.msk [vmem:[#allocation2 + $0x54] sm:$0xf] %vm610, %v3184
      %3193 = vst.msk [vmem:[#allocation2 + $0x58] sm:$0xf] %vm610, %v3185
      %3194 = vst.msk [vmem:[#allocation2 + $0x5c] sm:$0xf] %vm610, %v3186
      %3195 = vset.pattern.permute.xlu0 19
      %3196 = vperm.xlu0 %3195, %v413
      %v3197 = vpop.permute.xlu0 %3196
      %3199 = vset.pattern.permute.xlu0 19
      %3200 = vperm.xlu0 %3199, %v416
      %v3201 = vpop.permute.xlu0 %3200
      %3203 = vset.pattern.permute.xlu0 19
      %3204 = vperm.xlu0 %3203, %v419
      %v3205 = vpop.permute.xlu0 %3204
      %3207 = vset.pattern.permute.xlu0 19
      %3208 = vperm.xlu0 %3207, %v422
      %v3209 = vpop.permute.xlu0 %3208
      %3211 = vset.pattern.permute.xlu0 19
      %3212 = vperm.xlu0 %3211, %v425
      %v3213 = vpop.permute.xlu0 %3212
      %3215 = vset.pattern.permute.xlu0 19
      %3216 = vperm.xlu0 %3215, %v428
      %v3217 = vpop.permute.xlu0 %3216
      %3219 = vset.pattern.permute.xlu0 19
      %3220 = vperm.xlu0 %3219, %v431
      %v3221 = vpop.permute.xlu0 %3220
      %3223 = vset.pattern.permute.xlu0 19
      %3224 = vperm.xlu0 %3223, %v434
      %v3225 = vpop.permute.xlu0 %3224
      %v3227 = vsub.f32 %v3197, %v449
      %v3228 = vsub.f32 %v3201, %v449
      %v3229 = vsub.f32 %v3205, %v449
      %v3230 = vsub.f32 %v3209, %v449
      %v3231 = vsub.f32 %v3213, %v449
      %v3232 = vsub.f32 %v3217, %v449
      %v3233 = vsub.f32 %v3221, %v449
      %v3234 = vsub.f32 %v3225, %v449
      %v3235 = vand.u32 2147483647, %v3227
      %v3236 = vand.u32 2147483647, %v3228
      %v3237 = vand.u32 2147483647, %v3229
      %v3238 = vand.u32 2147483647, %v3230
      %v3239 = vand.u32 2147483647, %v3231
      %v3240 = vand.u32 2147483647, %v3232
      %v3241 = vand.u32 2147483647, %v3233
      %v3242 = vand.u32 2147483647, %v3234
      %v3243 = vsub.f32 1.0, %v3235
      %v3244 = vsub.f32 1.0, %v3236
      %v3245 = vsub.f32 1.0, %v3237
      %v3246 = vsub.f32 1.0, %v3238
      %v3247 = vsub.f32 1.0, %v3239
      %v3248 = vsub.f32 1.0, %v3240
      %v3249 = vsub.f32 1.0, %v3241
      %v3250 = vsub.f32 1.0, %v3242
      %v3251 = vmax.f32 %v3243, 0.0
      %v3252 = vmax.f32 %v3244, 0.0
      %v3253 = vmax.f32 %v3245, 0.0
      %v3254 = vmax.f32 %v3246, 0.0
      %v3255 = vmax.f32 %v3247, 0.0
      %v3256 = vmax.f32 %v3248, 0.0
      %v3257 = vmax.f32 %v3249, 0.0
      %v3258 = vmax.f32 %v3250, 0.0
      %3259 = vset.pattern.permute.xlu0 23
      %3260 = vperm.xlu0 %3259, %v413
      %v3261 = vpop.permute.xlu0 %3260
      %3263 = vset.pattern.permute.xlu0 23
      %3264 = vperm.xlu0 %3263, %v416
      %v3265 = vpop.permute.xlu0 %3264
      %3267 = vset.pattern.permute.xlu0 23
      %3268 = vperm.xlu0 %3267, %v419
      %v3269 = vpop.permute.xlu0 %3268
      %3271 = vset.pattern.permute.xlu0 23
      %3272 = vperm.xlu0 %3271, %v422
      %v3273 = vpop.permute.xlu0 %3272
      %3275 = vset.pattern.permute.xlu0 23
      %3276 = vperm.xlu0 %3275, %v425
      %v3277 = vpop.permute.xlu0 %3276
      %3279 = vset.pattern.permute.xlu0 23
      %3280 = vperm.xlu0 %3279, %v428
      %v3281 = vpop.permute.xlu0 %3280
      %3283 = vset.pattern.permute.xlu0 23
      %3284 = vperm.xlu0 %3283, %v431
      %v3285 = vpop.permute.xlu0 %3284
      %3287 = vset.pattern.permute.xlu0 23
      %3288 = vperm.xlu0 %3287, %v434
      %v3289 = vpop.permute.xlu0 %3288
      %v3291 = vsub.f32 %v3261, %v447
      %v3292 = vsub.f32 %v3265, %v447
      %v3293 = vsub.f32 %v3269, %v447
      %v3294 = vsub.f32 %v3273, %v447
      %v3295 = vsub.f32 %v3277, %v447
      %v3296 = vsub.f32 %v3281, %v447
      %v3297 = vsub.f32 %v3285, %v447
      %v3298 = vsub.f32 %v3289, %v447
      %v3299 = vand.u32 2147483647, %v3291
      %v3300 = vand.u32 2147483647, %v3292
      %v3301 = vand.u32 2147483647, %v3293
      %v3302 = vand.u32 2147483647, %v3294
      %v3303 = vand.u32 2147483647, %v3295
      %v3304 = vand.u32 2147483647, %v3296
      %v3305 = vand.u32 2147483647, %v3297
      %v3306 = vand.u32 2147483647, %v3298
      %v3307 = vsub.f32 1.0, %v3299
      %v3308 = vsub.f32 1.0, %v3300
      %v3309 = vsub.f32 1.0, %v3301
      %v3310 = vsub.f32 1.0, %v3302
      %v3311 = vsub.f32 1.0, %v3303
      %v3312 = vsub.f32 1.0, %v3304
      %v3313 = vsub.f32 1.0, %v3305
      %v3314 = vsub.f32 1.0, %v3306
      %v3315 = vmax.f32 %v3307, 0.0
      %v3316 = vmax.f32 %v3308, 0.0
      %v3317 = vmax.f32 %v3309, 0.0
      %v3318 = vmax.f32 %v3310, 0.0
      %v3319 = vmax.f32 %v3311, 0.0
      %v3320 = vmax.f32 %v3312, 0.0
      %v3321 = vmax.f32 %v3313, 0.0
      %v3322 = vmax.f32 %v3314, 0.0
      %v3323 = vmul.f32 %v3251, %v3315
      %v3324 = vmul.f32 %v3252, %v3316
      %v3325 = vmul.f32 %v3253, %v3317
      %v3326 = vmul.f32 %v3254, %v3318
      %v3327 = vmul.f32 %v3255, %v3319
      %v3328 = vmul.f32 %v3256, %v3320
      %v3329 = vmul.f32 %v3257, %v3321
      %v3330 = vmul.f32 %v3258, %v3322
      %v3331 = vpack.c.bf16 %v3323, %v3323
      %v3332 = vpack.c.bf16 %v3324, %v3324
      %v3333 = vpack.c.bf16 %v3325, %v3325
      %v3334 = vpack.c.bf16 %v3326, %v3326
      %v3335 = vpack.c.bf16 %v3327, %v3327
      %v3336 = vpack.c.bf16 %v3328, %v3328
      %v3337 = vpack.c.bf16 %v3329, %v3329
      %v3338 = vpack.c.bf16 %v3330, %v3330
      %3339 = vst.msk [vmem:[#allocation2 + $0x60] sm:$0xf] %vm610, %v3331
      %3340 = vst.msk [vmem:[#allocation2 + $0x64] sm:$0xf] %vm610, %v3332
      %3341 = vst.msk [vmem:[#allocation2 + $0x68] sm:$0xf] %vm610, %v3333
      %3342 = vst.msk [vmem:[#allocation2 + $0x6c] sm:$0xf] %vm610, %v3334
      %3343 = vst.msk [vmem:[#allocation2 + $0x70] sm:$0xf] %vm610, %v3335
      %3344 = vst.msk [vmem:[#allocation2 + $0x74] sm:$0xf] %vm610, %v3336
      %3345 = vst.msk [vmem:[#allocation2 + $0x78] sm:$0xf] %vm610, %v3337
      %3346 = vst.msk [vmem:[#allocation2 + $0x7c] sm:$0xf] %vm610, %v3338
      %v3347 = vld [vmem:[#allocation2] sm:$0xf]
      %v3348 = vld [vmem:[#allocation2 + $0x4] sm:$0xf]
      %v3349 = vld [vmem:[#allocation2 + $0x8] sm:$0xf]
      %v3350 = vld [vmem:[#allocation2 + $0xc] sm:$0xf]
      %v3351 = vld [vmem:[#allocation2 + $0x10] sm:$0xf]
      %v3352 = vld [vmem:[#allocation2 + $0x14] sm:$0xf]
      %v3353 = vld [vmem:[#allocation2 + $0x18] sm:$0xf]
      %v3354 = vld [vmem:[#allocation2 + $0x1c] sm:$0xf]
      %v3355 = vld [vmem:[#allocation2 + $0x20] sm:$0xf]
      %v3356 = vld [vmem:[#allocation2 + $0x24] sm:$0xf]
      %v3357 = vld [vmem:[#allocation2 + $0x28] sm:$0xf]
      %v3358 = vld [vmem:[#allocation2 + $0x2c] sm:$0xf]
      %v3359 = vld [vmem:[#allocation2 + $0x30] sm:$0xf]
      %v3360 = vld [vmem:[#allocation2 + $0x34] sm:$0xf]
      %v3361 = vld [vmem:[#allocation2 + $0x38] sm:$0xf]
      %v3362 = vld [vmem:[#allocation2 + $0x3c] sm:$0xf]
      %v3363 = vld [vmem:[#allocation2 + $0x40] sm:$0xf]
      %v3364 = vld [vmem:[#allocation2 + $0x44] sm:$0xf]
      %v3365 = vld [vmem:[#allocation2 + $0x48] sm:$0xf]
      %v3366 = vld [vmem:[#allocation2 + $0x4c] sm:$0xf]
      %v3367 = vld [vmem:[#allocation2 + $0x50] sm:$0xf]
      %v3368 = vld [vmem:[#allocation2 + $0x54] sm:$0xf]
      %v3369 = vld [vmem:[#allocation2 + $0x58] sm:$0xf]
      %v3370 = vld [vmem:[#allocation2 + $0x5c] sm:$0xf]
      %v3371 = vld [vmem:[#allocation2 + $0x60] sm:$0xf]
      %v3372 = vld [vmem:[#allocation2 + $0x64] sm:$0xf]
      %v3373 = vld [vmem:[#allocation2 + $0x68] sm:$0xf]
      %v3374 = vld [vmem:[#allocation2 + $0x6c] sm:$0xf]
      %v3375 = vld [vmem:[#allocation2 + $0x70] sm:$0xf]
      %v3376 = vld [vmem:[#allocation2 + $0x74] sm:$0xf]
      %v3377 = vld [vmem:[#allocation2 + $0x78] sm:$0xf]
      %v3378 = vld [vmem:[#allocation2 + $0x7c] sm:$0xf]
      %v3411 = vunpack.c.l.b16 %v3347
      %v3412 = vunpack.c.l.b16 %v3348
      %v3413 = vunpack.c.l.b16 %v3349
      %v3414 = vunpack.c.l.b16 %v3350
      %v3415 = vunpack.c.l.b16 %v3351
      %v3416 = vunpack.c.l.b16 %v3352
      %v3417 = vunpack.c.l.b16 %v3353
      %v3418 = vunpack.c.l.b16 %v3354
      %v3419 = vunpack.c.l.b16 %v3355
      %v3420 = vunpack.c.l.b16 %v3356
      %v3421 = vunpack.c.l.b16 %v3357
      %v3422 = vunpack.c.l.b16 %v3358
      %v3423 = vunpack.c.l.b16 %v3359
      %v3424 = vunpack.c.l.b16 %v3360
      %v3425 = vunpack.c.l.b16 %v3361
      %v3426 = vunpack.c.l.b16 %v3362
      %v3427 = vunpack.c.l.b16 %v3363
      %v3428 = vunpack.c.l.b16 %v3364
      %v3429 = vunpack.c.l.b16 %v3365
      %v3430 = vunpack.c.l.b16 %v3366
      %v3431 = vunpack.c.l.b16 %v3367
      %v3432 = vunpack.c.l.b16 %v3368
      %v3433 = vunpack.c.l.b16 %v3369
      %v3434 = vunpack.c.l.b16 %v3370
      %v3435 = vunpack.c.l.b16 %v3371
      %v3436 = vunpack.c.l.b16 %v3372
      %v3437 = vunpack.c.l.b16 %v3373
      %v3438 = vunpack.c.l.b16 %v3374
      %v3439 = vunpack.c.l.b16 %v3375
      %v3440 = vunpack.c.l.b16 %v3376
      %v3441 = vunpack.c.l.b16 %v3377
      %v3442 = vunpack.c.l.b16 %v3378
      %v3443 = vpack.c.b16 %v3412, %v3411
      %v3444 = vpack.c.b16 %v3414, %v3413
      %v3445 = vpack.c.b16 %v3416, %v3415
      %v3446 = vpack.c.b16 %v3418, %v3417
      %v3447 = vpack.c.b16 %v3420, %v3419
      %v3448 = vpack.c.b16 %v3422, %v3421
      %v3449 = vpack.c.b16 %v3424, %v3423
      %v3450 = vpack.c.b16 %v3426, %v3425
      %v3451 = vpack.c.b16 %v3428, %v3427
      %v3452 = vpack.c.b16 %v3430, %v3429
      %v3453 = vpack.c.b16 %v3432, %v3431
      %v3454 = vpack.c.b16 %v3434, %v3433
      %v3455 = vpack.c.b16 %v3436, %v3435
      %v3456 = vpack.c.b16 %v3438, %v3437
      %v3457 = vpack.c.b16 %v3440, %v3439
      %v3458 = vpack.c.b16 %v3442, %v3441
      %3459 = vrot.lane.b32.xlu0 %v1203, 64
      %v3460 = vpop.permute.xlu0 %3459
      %3461 = vrot.lane.b32.xlu0 %v1204, 64
      %v3462 = vpop.permute.xlu0 %3461
      %3463 = vrot.lane.b32.xlu0 %v1205, 64
      %v3464 = vpop.permute.xlu0 %3463
      %3465 = vrot.lane.b32.xlu0 %v1206, 64
      %v3466 = vpop.permute.xlu0 %3465
      %v3472 = vsel %vm1219, %v3443, 0
      %v3475 = vsel %vm1219, %v3444, 0
      %v3478 = vsel %vm1219, %v3445, 0
      %v3481 = vsel %vm1219, %v3446, 0
      %v3484 = vsel %vm1219, %v3447, 0
      %v3487 = vsel %vm1219, %v3448, 0
      %v3490 = vsel %vm1219, %v3449, 0
      %v3493 = vsel %vm1219, %v3450, 0
      %v3496 = vsel %vm1219, %v3451, 0
      %v3499 = vsel %vm1219, %v3452, 0
      %v3502 = vsel %vm1219, %v3453, 0
      %v3505 = vsel %vm1219, %v3454, 0
      %v3508 = vsel %vm1219, %v3455, 0
      %v3511 = vsel %vm1219, %v3456, 0
      %v3514 = vsel %vm1219, %v3457, 0
      %v3517 = vsel %vm1219, %v3458, 0
      %3519 = vmatpush.bf16.msra.mxu0 0
      %3520 = vmatpush.bf16.msra.mxu0 0
      %3521 = vmatpush.bf16.msra.mxu0 0
      %3522 = vmatpush.bf16.msra.mxu0 0
      %3523 = vmatpush.bf16.msra.mxu0 %v3466
      %3524 = vmatpush.bf16.msra.mxu0 %v3464
      %3525 = vmatpush.bf16.msra.mxu0 %v3462
      %3526 = vmatpush.bf16.msra.mxu0 %v3460
      %3527 = vmatmul.bf16.gmra.mxu0 %v3472
      %v3528 = vpop.f32.mrf.mxu0
      %v3529 = vadd.f32 0.0, %v3528
      %v3530 = vpop.f32.mrf.mxu0
      %v3531 = vadd.f32 0.0, %v3530
      %3532 = vmatmul.bf16.gmra.mxu0 %v3475
      %v3533 = vpop.f32.mrf.mxu0
      %v3534 = vadd.f32 0.0, %v3533
      %v3535 = vpop.f32.mrf.mxu0
      %v3536 = vadd.f32 0.0, %v3535
      %3537 = vmatmul.bf16.gmra.mxu0 %v3478
      %v3538 = vpop.f32.mrf.mxu0
      %v3539 = vadd.f32 0.0, %v3538
      %v3540 = vpop.f32.mrf.mxu0
      %v3541 = vadd.f32 0.0, %v3540
      %3542 = vmatmul.bf16.gmra.mxu0 %v3481
      %v3543 = vpop.f32.mrf.mxu0
      %v3544 = vadd.f32 0.0, %v3543
      %v3545 = vpop.f32.mrf.mxu0
      %v3546 = vadd.f32 0.0, %v3545
      %3547 = vmatmul.bf16.gmra.mxu0 %v3484
      %v3548 = vpop.f32.mrf.mxu0
      %v3549 = vadd.f32 0.0, %v3548
      %v3550 = vpop.f32.mrf.mxu0
      %v3551 = vadd.f32 0.0, %v3550
      %3552 = vmatmul.bf16.gmra.mxu0 %v3487
      %v3553 = vpop.f32.mrf.mxu0
      %v3554 = vadd.f32 0.0, %v3553
      %v3555 = vpop.f32.mrf.mxu0
      %v3556 = vadd.f32 0.0, %v3555
      %3557 = vmatmul.bf16.gmra.mxu0 %v3490
      %v3558 = vpop.f32.mrf.mxu0
      %v3559 = vadd.f32 0.0, %v3558
      %v3560 = vpop.f32.mrf.mxu0
      %v3561 = vadd.f32 0.0, %v3560
      %3562 = vmatmul.bf16.gmra.mxu0 %v3493
      %v3563 = vpop.f32.mrf.mxu0
      %v3564 = vadd.f32 0.0, %v3563
      %v3565 = vpop.f32.mrf.mxu0
      %v3566 = vadd.f32 0.0, %v3565
      %3567 = vmatmul.bf16.gmra.mxu0 %v3496
      %v3568 = vpop.f32.mrf.mxu0
      %v3569 = vadd.f32 0.0, %v3568
      %v3570 = vpop.f32.mrf.mxu0
      %v3571 = vadd.f32 0.0, %v3570
      %3572 = vmatmul.bf16.gmra.mxu0 %v3499
      %v3573 = vpop.f32.mrf.mxu0
      %v3574 = vadd.f32 0.0, %v3573
      %v3575 = vpop.f32.mrf.mxu0
      %v3576 = vadd.f32 0.0, %v3575
      %3577 = vmatmul.bf16.gmra.mxu0 %v3502
      %v3578 = vpop.f32.mrf.mxu0
      %v3579 = vadd.f32 0.0, %v3578
      %v3580 = vpop.f32.mrf.mxu0
      %v3581 = vadd.f32 0.0, %v3580
      %3582 = vmatmul.bf16.gmra.mxu0 %v3505
      %v3583 = vpop.f32.mrf.mxu0
      %v3584 = vadd.f32 0.0, %v3583
      %v3585 = vpop.f32.mrf.mxu0
      %v3586 = vadd.f32 0.0, %v3585
      %3587 = vmatmul.bf16.gmra.mxu0 %v3508
      %v3588 = vpop.f32.mrf.mxu0
      %v3589 = vadd.f32 0.0, %v3588
      %v3590 = vpop.f32.mrf.mxu0
      %v3591 = vadd.f32 0.0, %v3590
      %3592 = vmatmul.bf16.gmra.mxu0 %v3511
      %v3593 = vpop.f32.mrf.mxu0
      %v3594 = vadd.f32 0.0, %v3593
      %v3595 = vpop.f32.mrf.mxu0
      %v3596 = vadd.f32 0.0, %v3595
      %3597 = vmatmul.bf16.gmra.mxu0 %v3514
      %v3598 = vpop.f32.mrf.mxu0
      %v3599 = vadd.f32 0.0, %v3598
      %v3600 = vpop.f32.mrf.mxu0
      %v3601 = vadd.f32 0.0, %v3600
      %3602 = vmatmul.bf16.gmra.mxu0 %v3517
      %v3603 = vpop.f32.mrf.mxu0
      %v3604 = vadd.f32 0.0, %v3603
      %v3605 = vpop.f32.mrf.mxu0
      %v3606 = vadd.f32 0.0, %v3605
      %3607 = vdwg.mxu0
      %3640 = vrot.lane.b32.xlu0 %v3529, 16
      %v3641 = vpop.permute.xlu0 %3640
      %3642 = vrot.lane.b32.xlu0 %v3531, 16
      %v3643 = vpop.permute.xlu0 %3642
      %3644 = vrot.lane.b32.xlu0 %v3534, 16
      %v3645 = vpop.permute.xlu0 %3644
      %3646 = vrot.lane.b32.xlu0 %v3536, 16
      %v3647 = vpop.permute.xlu0 %3646
      %3648 = vrot.lane.b32.xlu0 %v3539, 16
      %v3649 = vpop.permute.xlu0 %3648
      %3650 = vrot.lane.b32.xlu0 %v3541, 16
      %v3651 = vpop.permute.xlu0 %3650
      %3652 = vrot.lane.b32.xlu0 %v3544, 16
      %v3653 = vpop.permute.xlu0 %3652
      %3654 = vrot.lane.b32.xlu0 %v3546, 16
      %v3655 = vpop.permute.xlu0 %3654
      %3656 = vrot.lane.b32.xlu0 %v3549, 16
      %v3657 = vpop.permute.xlu0 %3656
      %3658 = vrot.lane.b32.xlu0 %v3551, 16
      %v3659 = vpop.permute.xlu0 %3658
      %3660 = vrot.lane.b32.xlu0 %v3554, 16
      %v3661 = vpop.permute.xlu0 %3660
      %3662 = vrot.lane.b32.xlu0 %v3556, 16
      %v3663 = vpop.permute.xlu0 %3662
      %3664 = vrot.lane.b32.xlu0 %v3559, 16
      %v3665 = vpop.permute.xlu0 %3664
      %3666 = vrot.lane.b32.xlu0 %v3561, 16
      %v3667 = vpop.permute.xlu0 %3666
      %3668 = vrot.lane.b32.xlu0 %v3564, 16
      %v3669 = vpop.permute.xlu0 %3668
      %3670 = vrot.lane.b32.xlu0 %v3566, 16
      %v3671 = vpop.permute.xlu0 %3670
      %3672 = vrot.lane.b32.xlu0 %v3569, 16
      %v3673 = vpop.permute.xlu0 %3672
      %3674 = vrot.lane.b32.xlu0 %v3571, 16
      %v3675 = vpop.permute.xlu0 %3674
      %3676 = vrot.lane.b32.xlu0 %v3574, 16
      %v3677 = vpop.permute.xlu0 %3676
      %3678 = vrot.lane.b32.xlu0 %v3576, 16
      %v3679 = vpop.permute.xlu0 %3678
      %3680 = vrot.lane.b32.xlu0 %v3579, 16
      %v3681 = vpop.permute.xlu0 %3680
      %3682 = vrot.lane.b32.xlu0 %v3581, 16
      %v3683 = vpop.permute.xlu0 %3682
      %3684 = vrot.lane.b32.xlu0 %v3584, 16
      %v3685 = vpop.permute.xlu0 %3684
      %3686 = vrot.lane.b32.xlu0 %v3586, 16
      %v3687 = vpop.permute.xlu0 %3686
      %3688 = vrot.lane.b32.xlu0 %v3589, 16
      %v3689 = vpop.permute.xlu0 %3688
      %3690 = vrot.lane.b32.xlu0 %v3591, 16
      %v3691 = vpop.permute.xlu0 %3690
      %3692 = vrot.lane.b32.xlu0 %v3594, 16
      %v3693 = vpop.permute.xlu0 %3692
      %3694 = vrot.lane.b32.xlu0 %v3596, 16
      %v3695 = vpop.permute.xlu0 %3694
      %3696 = vrot.lane.b32.xlu0 %v3599, 16
      %v3697 = vpop.permute.xlu0 %3696
      %3698 = vrot.lane.b32.xlu0 %v3601, 16
      %v3699 = vpop.permute.xlu0 %3698
      %3700 = vrot.lane.b32.xlu0 %v3604, 16
      %v3701 = vpop.permute.xlu0 %3700
      %3702 = vrot.lane.b32.xlu0 %v3606, 16
      %v3703 = vpop.permute.xlu0 %3702
      %v3736 = vmul.f32 %v343, %v3641
      %v3737 = vmul.f32 %v345, %v3643
      %v3738 = vmul.f32 %v348, %v3645
      %v3739 = vmul.f32 %v350, %v3647
      %v3740 = vmul.f32 %v353, %v3649
      %v3741 = vmul.f32 %v355, %v3651
      %v3742 = vmul.f32 %v358, %v3653
      %v3743 = vmul.f32 %v360, %v3655
      %v3744 = vmul.f32 %v343, %v3657
      %v3745 = vmul.f32 %v345, %v3659
      %v3746 = vmul.f32 %v348, %v3661
      %v3747 = vmul.f32 %v350, %v3663
      %v3748 = vmul.f32 %v353, %v3665
      %v3749 = vmul.f32 %v355, %v3667
      %v3750 = vmul.f32 %v358, %v3669
      %v3751 = vmul.f32 %v360, %v3671
      %v3752 = vmul.f32 %v343, %v3673
      %v3753 = vmul.f32 %v345, %v3675
      %v3754 = vmul.f32 %v348, %v3677
      %v3755 = vmul.f32 %v350, %v3679
      %v3756 = vmul.f32 %v353, %v3681
      %v3757 = vmul.f32 %v355, %v3683
      %v3758 = vmul.f32 %v358, %v3685
      %v3759 = vmul.f32 %v360, %v3687
      %v3760 = vmul.f32 %v343, %v3689
      %v3761 = vmul.f32 %v345, %v3691
      %v3762 = vmul.f32 %v348, %v3693
      %v3763 = vmul.f32 %v350, %v3695
      %v3764 = vmul.f32 %v353, %v3697
      %v3765 = vmul.f32 %v355, %v3699
      %v3766 = vmul.f32 %v358, %v3701
      %v3767 = vmul.f32 %v360, %v3703
      %3800 = vrot.lane.b32.xlu0 %v3736, 112
      %v3801 = vpop.permute.xlu0 %3800
      %3802 = vrot.lane.b32.xlu0 %v3737, 112
      %v3803 = vpop.permute.xlu0 %3802
      %3804 = vrot.lane.b32.xlu0 %v3738, 112
      %v3805 = vpop.permute.xlu0 %3804
      %3806 = vrot.lane.b32.xlu0 %v3739, 112
      %v3807 = vpop.permute.xlu0 %3806
      %3808 = vrot.lane.b32.xlu0 %v3740, 112
      %v3809 = vpop.permute.xlu0 %3808
      %3810 = vrot.lane.b32.xlu0 %v3741, 112
      %v3811 = vpop.permute.xlu0 %3810
      %3812 = vrot.lane.b32.xlu0 %v3742, 112
      %v3813 = vpop.permute.xlu0 %3812
      %3814 = vrot.lane.b32.xlu0 %v3743, 112
      %v3815 = vpop.permute.xlu0 %3814
      %3816 = vrot.lane.b32.xlu0 %v3744, 112
      %v3817 = vpop.permute.xlu0 %3816
      %3818 = vrot.lane.b32.xlu0 %v3745, 112
      %v3819 = vpop.permute.xlu0 %3818
      %3820 = vrot.lane.b32.xlu0 %v3746, 112
      %v3821 = vpop.permute.xlu0 %3820
      %3822 = vrot.lane.b32.xlu0 %v3747, 112
      %v3823 = vpop.permute.xlu0 %3822
      %3824 = vrot.lane.b32.xlu0 %v3748, 112
      %v3825 = vpop.permute.xlu0 %3824
      %3826 = vrot.lane.b32.xlu0 %v3749, 112
      %v3827 = vpop.permute.xlu0 %3826
      %3828 = vrot.lane.b32.xlu0 %v3750, 112
      %v3829 = vpop.permute.xlu0 %3828
      %3830 = vrot.lane.b32.xlu0 %v3751, 112
      %v3831 = vpop.permute.xlu0 %3830
      %3832 = vrot.lane.b32.xlu0 %v3752, 112
      %v3833 = vpop.permute.xlu0 %3832
      %3834 = vrot.lane.b32.xlu0 %v3753, 112
      %v3835 = vpop.permute.xlu0 %3834
      %3836 = vrot.lane.b32.xlu0 %v3754, 112
      %v3837 = vpop.permute.xlu0 %3836
      %3838 = vrot.lane.b32.xlu0 %v3755, 112
      %v3839 = vpop.permute.xlu0 %3838
      %3840 = vrot.lane.b32.xlu0 %v3756, 112
      %v3841 = vpop.permute.xlu0 %3840
      %3842 = vrot.lane.b32.xlu0 %v3757, 112
      %v3843 = vpop.permute.xlu0 %3842
      %3844 = vrot.lane.b32.xlu0 %v3758, 112
      %v3845 = vpop.permute.xlu0 %3844
      %3846 = vrot.lane.b32.xlu0 %v3759, 112
      %v3847 = vpop.permute.xlu0 %3846
      %3848 = vrot.lane.b32.xlu0 %v3760, 112
      %v3849 = vpop.permute.xlu0 %3848
      %3850 = vrot.lane.b32.xlu0 %v3761, 112
      %v3851 = vpop.permute.xlu0 %3850
      %3852 = vrot.lane.b32.xlu0 %v3762, 112
      %v3853 = vpop.permute.xlu0 %3852
      %3854 = vrot.lane.b32.xlu0 %v3763, 112
      %v3855 = vpop.permute.xlu0 %3854
      %3856 = vrot.lane.b32.xlu0 %v3764, 112
      %v3857 = vpop.permute.xlu0 %3856
      %3858 = vrot.lane.b32.xlu0 %v3765, 112
      %v3859 = vpop.permute.xlu0 %3858
      %3860 = vrot.lane.b32.xlu0 %v3766, 112
      %v3861 = vpop.permute.xlu0 %3860
      %3862 = vrot.lane.b32.xlu0 %v3767, 112
      %v3863 = vpop.permute.xlu0 %3862
      %v3896 = vsel %vm1389, %v3801, 0.0
      %3897 = vadd.xlane.f32.xlu0 %v3896
      %v3898 = vpop.xlane.xlu0 %3897
      %v3899 = vsel %vm1389, %v3803, 0.0
      %3900 = vadd.xlane.f32.xlu0 %v3899
      %v3901 = vpop.xlane.xlu0 %3900
      %v3902 = vsel %vm1389, %v3805, 0.0
      %3903 = vadd.xlane.f32.xlu0 %v3902
      %v3904 = vpop.xlane.xlu0 %3903
      %v3905 = vsel %vm1389, %v3807, 0.0
      %3906 = vadd.xlane.f32.xlu0 %v3905
      %v3907 = vpop.xlane.xlu0 %3906
      %v3908 = vsel %vm1389, %v3809, 0.0
      %3909 = vadd.xlane.f32.xlu0 %v3908
      %v3910 = vpop.xlane.xlu0 %3909
      %v3911 = vsel %vm1389, %v3811, 0.0
      %3912 = vadd.xlane.f32.xlu0 %v3911
      %v3913 = vpop.xlane.xlu0 %3912
      %v3914 = vsel %vm1389, %v3813, 0.0
      %3915 = vadd.xlane.f32.xlu0 %v3914
      %v3916 = vpop.xlane.xlu0 %3915
      %v3917 = vsel %vm1389, %v3815, 0.0
      %3918 = vadd.xlane.f32.xlu0 %v3917
      %v3919 = vpop.xlane.xlu0 %3918
      %v3920 = vsel %vm1389, %v3817, 0.0
      %3921 = vadd.xlane.f32.xlu0 %v3920
      %v3922 = vpop.xlane.xlu0 %3921
      %v3923 = vsel %vm1389, %v3819, 0.0
      %3924 = vadd.xlane.f32.xlu0 %v3923
      %v3925 = vpop.xlane.xlu0 %3924
      %v3926 = vsel %vm1389, %v3821, 0.0
      %3927 = vadd.xlane.f32.xlu0 %v3926
      %v3928 = vpop.xlane.xlu0 %3927
      %v3929 = vsel %vm1389, %v3823, 0.0
      %3930 = vadd.xlane.f32.xlu0 %v3929
      %v3931 = vpop.xlane.xlu0 %3930
      %v3932 = vsel %vm1389, %v3825, 0.0
      %3933 = vadd.xlane.f32.xlu0 %v3932
      %v3934 = vpop.xlane.xlu0 %3933
      %v3935 = vsel %vm1389, %v3827, 0.0
      %3936 = vadd.xlane.f32.xlu0 %v3935
      %v3937 = vpop.xlane.xlu0 %3936
      %v3938 = vsel %vm1389, %v3829, 0.0
      %3939 = vadd.xlane.f32.xlu0 %v3938
      %v3940 = vpop.xlane.xlu0 %3939
      %v3941 = vsel %vm1389, %v3831, 0.0
      %3942 = vadd.xlane.f32.xlu0 %v3941
      %v3943 = vpop.xlane.xlu0 %3942
      %v3944 = vsel %vm1389, %v3833, 0.0
      %3945 = vadd.xlane.f32.xlu0 %v3944
      %v3946 = vpop.xlane.xlu0 %3945
      %v3947 = vsel %vm1389, %v3835, 0.0
      %3948 = vadd.xlane.f32.xlu0 %v3947
      %v3949 = vpop.xlane.xlu0 %3948
      %v3950 = vsel %vm1389, %v3837, 0.0
      %3951 = vadd.xlane.f32.xlu0 %v3950
      %v3952 = vpop.xlane.xlu0 %3951
      %v3953 = vsel %vm1389, %v3839, 0.0
      %3954 = vadd.xlane.f32.xlu0 %v3953
      %v3955 = vpop.xlane.xlu0 %3954
      %v3956 = vsel %vm1389, %v3841, 0.0
      %3957 = vadd.xlane.f32.xlu0 %v3956
      %v3958 = vpop.xlane.xlu0 %3957
      %v3959 = vsel %vm1389, %v3843, 0.0
      %3960 = vadd.xlane.f32.xlu0 %v3959
      %v3961 = vpop.xlane.xlu0 %3960
      %v3962 = vsel %vm1389, %v3845, 0.0
      %3963 = vadd.xlane.f32.xlu0 %v3962
      %v3964 = vpop.xlane.xlu0 %3963
      %v3965 = vsel %vm1389, %v3847, 0.0
      %3966 = vadd.xlane.f32.xlu0 %v3965
      %v3967 = vpop.xlane.xlu0 %3966
      %v3968 = vsel %vm1389, %v3849, 0.0
      %3969 = vadd.xlane.f32.xlu0 %v3968
      %v3970 = vpop.xlane.xlu0 %3969
      %v3971 = vsel %vm1389, %v3851, 0.0
      %3972 = vadd.xlane.f32.xlu0 %v3971
      %v3973 = vpop.xlane.xlu0 %3972
      %v3974 = vsel %vm1389, %v3853, 0.0
      %3975 = vadd.xlane.f32.xlu0 %v3974
      %v3976 = vpop.xlane.xlu0 %3975
      %v3977 = vsel %vm1389, %v3855, 0.0
      %3978 = vadd.xlane.f32.xlu0 %v3977
      %v3979 = vpop.xlane.xlu0 %3978
      %v3980 = vsel %vm1389, %v3857, 0.0
      %3981 = vadd.xlane.f32.xlu0 %v3980
      %v3982 = vpop.xlane.xlu0 %3981
      %v3983 = vsel %vm1389, %v3859, 0.0
      %3984 = vadd.xlane.f32.xlu0 %v3983
      %v3985 = vpop.xlane.xlu0 %3984
      %v3986 = vsel %vm1389, %v3861, 0.0
      %3987 = vadd.xlane.f32.xlu0 %v3986
      %v3988 = vpop.xlane.xlu0 %3987
      %v3989 = vsel %vm1389, %v3863, 0.0
      %3990 = vadd.xlane.f32.xlu0 %v3989
      %v3991 = vpop.xlane.xlu0 %3990
      %3992 = vset.pattern.permute.xlu0 24
      %3993 = vperm.xlu0 %3992, %v413
      %v3994 = vpop.permute.xlu0 %3993
      %3996 = vset.pattern.permute.xlu0 24
      %3997 = vperm.xlu0 %3996, %v416
      %v3998 = vpop.permute.xlu0 %3997
      %4000 = vset.pattern.permute.xlu0 24
      %4001 = vperm.xlu0 %4000, %v419
      %v4002 = vpop.permute.xlu0 %4001
      %4004 = vset.pattern.permute.xlu0 24
      %4005 = vperm.xlu0 %4004, %v422
      %v4006 = vpop.permute.xlu0 %4005
      %4008 = vset.pattern.permute.xlu0 24
      %4009 = vperm.xlu0 %4008, %v425
      %v4010 = vpop.permute.xlu0 %4009
      %4012 = vset.pattern.permute.xlu0 24
      %4013 = vperm.xlu0 %4012, %v428
      %v4014 = vpop.permute.xlu0 %4013
      %4016 = vset.pattern.permute.xlu0 24
      %4017 = vperm.xlu0 %4016, %v431
      %v4018 = vpop.permute.xlu0 %4017
      %4020 = vset.pattern.permute.xlu0 24
      %4021 = vperm.xlu0 %4020, %v434
      %v4022 = vpop.permute.xlu0 %4021
      %v4024 = vsub.f32 %v3994, %v449
      %v4025 = vsub.f32 %v3998, %v449
      %v4026 = vsub.f32 %v4002, %v449
      %v4027 = vsub.f32 %v4006, %v449
      %v4028 = vsub.f32 %v4010, %v449
      %v4029 = vsub.f32 %v4014, %v449
      %v4030 = vsub.f32 %v4018, %v449
      %v4031 = vsub.f32 %v4022, %v449
      %v4032 = vand.u32 2147483647, %v4024
      %v4033 = vand.u32 2147483647, %v4025
      %v4034 = vand.u32 2147483647, %v4026
      %v4035 = vand.u32 2147483647, %v4027
      %v4036 = vand.u32 2147483647, %v4028
      %v4037 = vand.u32 2147483647, %v4029
      %v4038 = vand.u32 2147483647, %v4030
      %v4039 = vand.u32 2147483647, %v4031
      %v4040 = vsub.f32 1.0, %v4032
      %v4041 = vsub.f32 1.0, %v4033
      %v4042 = vsub.f32 1.0, %v4034
      %v4043 = vsub.f32 1.0, %v4035
      %v4044 = vsub.f32 1.0, %v4036
      %v4045 = vsub.f32 1.0, %v4037
      %v4046 = vsub.f32 1.0, %v4038
      %v4047 = vsub.f32 1.0, %v4039
      %v4048 = vmax.f32 %v4040, 0.0
      %v4049 = vmax.f32 %v4041, 0.0
      %v4050 = vmax.f32 %v4042, 0.0
      %v4051 = vmax.f32 %v4043, 0.0
      %v4052 = vmax.f32 %v4044, 0.0
      %v4053 = vmax.f32 %v4045, 0.0
      %v4054 = vmax.f32 %v4046, 0.0
      %v4055 = vmax.f32 %v4047, 0.0
      %4056 = vset.pattern.permute.xlu0 28
      %4057 = vperm.xlu0 %4056, %v413
      %v4058 = vpop.permute.xlu0 %4057
      %4060 = vset.pattern.permute.xlu0 28
      %4061 = vperm.xlu0 %4060, %v416
      %v4062 = vpop.permute.xlu0 %4061
      %4064 = vset.pattern.permute.xlu0 28
      %4065 = vperm.xlu0 %4064, %v419
      %v4066 = vpop.permute.xlu0 %4065
      %4068 = vset.pattern.permute.xlu0 28
      %4069 = vperm.xlu0 %4068, %v422
      %v4070 = vpop.permute.xlu0 %4069
      %4072 = vset.pattern.permute.xlu0 28
      %4073 = vperm.xlu0 %4072, %v425
      %v4074 = vpop.permute.xlu0 %4073
      %4076 = vset.pattern.permute.xlu0 28
      %4077 = vperm.xlu0 %4076, %v428
      %v4078 = vpop.permute.xlu0 %4077
      %4080 = vset.pattern.permute.xlu0 28
      %4081 = vperm.xlu0 %4080, %v431
      %v4082 = vpop.permute.xlu0 %4081
      %4084 = vset.pattern.permute.xlu0 28
      %4085 = vperm.xlu0 %4084, %v434
      %v4086 = vpop.permute.xlu0 %4085
      %v4088 = vsub.f32 %v4058, %v447
      %v4089 = vsub.f32 %v4062, %v447
      %v4090 = vsub.f32 %v4066, %v447
      %v4091 = vsub.f32 %v4070, %v447
      %v4092 = vsub.f32 %v4074, %v447
      %v4093 = vsub.f32 %v4078, %v447
      %v4094 = vsub.f32 %v4082, %v447
      %v4095 = vsub.f32 %v4086, %v447
      %v4096 = vand.u32 2147483647, %v4088
      %v4097 = vand.u32 2147483647, %v4089
      %v4098 = vand.u32 2147483647, %v4090
      %v4099 = vand.u32 2147483647, %v4091
      %v4100 = vand.u32 2147483647, %v4092
      %v4101 = vand.u32 2147483647, %v4093
      %v4102 = vand.u32 2147483647, %v4094
      %v4103 = vand.u32 2147483647, %v4095
      %v4104 = vsub.f32 1.0, %v4096
      %v4105 = vsub.f32 1.0, %v4097
      %v4106 = vsub.f32 1.0, %v4098
      %v4107 = vsub.f32 1.0, %v4099
      %v4108 = vsub.f32 1.0, %v4100
      %v4109 = vsub.f32 1.0, %v4101
      %v4110 = vsub.f32 1.0, %v4102
      %v4111 = vsub.f32 1.0, %v4103
      %v4112 = vmax.f32 %v4104, 0.0
      %v4113 = vmax.f32 %v4105, 0.0
      %v4114 = vmax.f32 %v4106, 0.0
      %v4115 = vmax.f32 %v4107, 0.0
      %v4116 = vmax.f32 %v4108, 0.0
      %v4117 = vmax.f32 %v4109, 0.0
      %v4118 = vmax.f32 %v4110, 0.0
      %v4119 = vmax.f32 %v4111, 0.0
      %v4120 = vmul.f32 %v4048, %v4112
      %v4121 = vmul.f32 %v4049, %v4113
      %v4122 = vmul.f32 %v4050, %v4114
      %v4123 = vmul.f32 %v4051, %v4115
      %v4124 = vmul.f32 %v4052, %v4116
      %v4125 = vmul.f32 %v4053, %v4117
      %v4126 = vmul.f32 %v4054, %v4118
      %v4127 = vmul.f32 %v4055, %v4119
      %v4128 = vpack.c.bf16 %v4120, %v4120
      %v4129 = vpack.c.bf16 %v4121, %v4121
      %v4130 = vpack.c.bf16 %v4122, %v4122
      %v4131 = vpack.c.bf16 %v4123, %v4123
      %v4132 = vpack.c.bf16 %v4124, %v4124
      %v4133 = vpack.c.bf16 %v4125, %v4125
      %v4134 = vpack.c.bf16 %v4126, %v4126
      %v4135 = vpack.c.bf16 %v4127, %v4127
      %4136 = vst.msk [vmem:[#allocation2] sm:$0xf] %vm610, %v4128
      %4137 = vst.msk [vmem:[#allocation2 + $0x4] sm:$0xf] %vm610, %v4129
      %4138 = vst.msk [vmem:[#allocation2 + $0x8] sm:$0xf] %vm610, %v4130
      %4139 = vst.msk [vmem:[#allocation2 + $0xc] sm:$0xf] %vm610, %v4131
      %4140 = vst.msk [vmem:[#allocation2 + $0x10] sm:$0xf] %vm610, %v4132
      %4141 = vst.msk [vmem:[#allocation2 + $0x14] sm:$0xf] %vm610, %v4133
      %4142 = vst.msk [vmem:[#allocation2 + $0x18] sm:$0xf] %vm610, %v4134
      %4143 = vst.msk [vmem:[#allocation2 + $0x1c] sm:$0xf] %vm610, %v4135
      %4144 = vset.pattern.permute.xlu0 25
      %4145 = vperm.xlu0 %4144, %v413
      %v4146 = vpop.permute.xlu0 %4145
      %4148 = vset.pattern.permute.xlu0 25
      %4149 = vperm.xlu0 %4148, %v416
      %v4150 = vpop.permute.xlu0 %4149
      %4152 = vset.pattern.permute.xlu0 25
      %4153 = vperm.xlu0 %4152, %v419
      %v4154 = vpop.permute.xlu0 %4153
      %4156 = vset.pattern.permute.xlu0 25
      %4157 = vperm.xlu0 %4156, %v422
      %v4158 = vpop.permute.xlu0 %4157
      %4160 = vset.pattern.permute.xlu0 25
      %4161 = vperm.xlu0 %4160, %v425
      %v4162 = vpop.permute.xlu0 %4161
      %4164 = vset.pattern.permute.xlu0 25
      %4165 = vperm.xlu0 %4164, %v428
      %v4166 = vpop.permute.xlu0 %4165
      %4168 = vset.pattern.permute.xlu0 25
      %4169 = vperm.xlu0 %4168, %v431
      %v4170 = vpop.permute.xlu0 %4169
      %4172 = vset.pattern.permute.xlu0 25
      %4173 = vperm.xlu0 %4172, %v434
      %v4174 = vpop.permute.xlu0 %4173
      %v4176 = vsub.f32 %v4146, %v449
      %v4177 = vsub.f32 %v4150, %v449
      %v4178 = vsub.f32 %v4154, %v449
      %v4179 = vsub.f32 %v4158, %v449
      %v4180 = vsub.f32 %v4162, %v449
      %v4181 = vsub.f32 %v4166, %v449
      %v4182 = vsub.f32 %v4170, %v449
      %v4183 = vsub.f32 %v4174, %v449
      %v4184 = vand.u32 2147483647, %v4176
      %v4185 = vand.u32 2147483647, %v4177
      %v4186 = vand.u32 2147483647, %v4178
      %v4187 = vand.u32 2147483647, %v4179
      %v4188 = vand.u32 2147483647, %v4180
      %v4189 = vand.u32 2147483647, %v4181
      %v4190 = vand.u32 2147483647, %v4182
      %v4191 = vand.u32 2147483647, %v4183
      %v4192 = vsub.f32 1.0, %v4184
      %v4193 = vsub.f32 1.0, %v4185
      %v4194 = vsub.f32 1.0, %v4186
      %v4195 = vsub.f32 1.0, %v4187
      %v4196 = vsub.f32 1.0, %v4188
      %v4197 = vsub.f32 1.0, %v4189
      %v4198 = vsub.f32 1.0, %v4190
      %v4199 = vsub.f32 1.0, %v4191
      %v4200 = vmax.f32 %v4192, 0.0
      %v4201 = vmax.f32 %v4193, 0.0
      %v4202 = vmax.f32 %v4194, 0.0
      %v4203 = vmax.f32 %v4195, 0.0
      %v4204 = vmax.f32 %v4196, 0.0
      %v4205 = vmax.f32 %v4197, 0.0
      %v4206 = vmax.f32 %v4198, 0.0
      %v4207 = vmax.f32 %v4199, 0.0
      %4208 = vset.pattern.permute.xlu0 29
      %4209 = vperm.xlu0 %4208, %v413
      %v4210 = vpop.permute.xlu0 %4209
      %4212 = vset.pattern.permute.xlu0 29
      %4213 = vperm.xlu0 %4212, %v416
      %v4214 = vpop.permute.xlu0 %4213
      %4216 = vset.pattern.permute.xlu0 29
      %4217 = vperm.xlu0 %4216, %v419
      %v4218 = vpop.permute.xlu0 %4217
      %4220 = vset.pattern.permute.xlu0 29
      %4221 = vperm.xlu0 %4220, %v422
      %v4222 = vpop.permute.xlu0 %4221
      %4224 = vset.pattern.permute.xlu0 29
      %4225 = vperm.xlu0 %4224, %v425
      %v4226 = vpop.permute.xlu0 %4225
      %4228 = vset.pattern.permute.xlu0 29
      %4229 = vperm.xlu0 %4228, %v428
      %v4230 = vpop.permute.xlu0 %4229
      %4232 = vset.pattern.permute.xlu0 29
      %4233 = vperm.xlu0 %4232, %v431
      %v4234 = vpop.permute.xlu0 %4233
      %4236 = vset.pattern.permute.xlu0 29
      %4237 = vperm.xlu0 %4236, %v434
      %v4238 = vpop.permute.xlu0 %4237
      %v4240 = vsub.f32 %v4210, %v447
      %v4241 = vsub.f32 %v4214, %v447
      %v4242 = vsub.f32 %v4218, %v447
      %v4243 = vsub.f32 %v4222, %v447
      %v4244 = vsub.f32 %v4226, %v447
      %v4245 = vsub.f32 %v4230, %v447
      %v4246 = vsub.f32 %v4234, %v447
      %v4247 = vsub.f32 %v4238, %v447
      %v4248 = vand.u32 2147483647, %v4240
      %v4249 = vand.u32 2147483647, %v4241
      %v4250 = vand.u32 2147483647, %v4242
      %v4251 = vand.u32 2147483647, %v4243
      %v4252 = vand.u32 2147483647, %v4244
      %v4253 = vand.u32 2147483647, %v4245
      %v4254 = vand.u32 2147483647, %v4246
      %v4255 = vand.u32 2147483647, %v4247
      %v4256 = vsub.f32 1.0, %v4248
      %v4257 = vsub.f32 1.0, %v4249
      %v4258 = vsub.f32 1.0, %v4250
      %v4259 = vsub.f32 1.0, %v4251
      %v4260 = vsub.f32 1.0, %v4252
      %v4261 = vsub.f32 1.0, %v4253
      %v4262 = vsub.f32 1.0, %v4254
      %v4263 = vsub.f32 1.0, %v4255
      %v4264 = vmax.f32 %v4256, 0.0
      %v4265 = vmax.f32 %v4257, 0.0
      %v4266 = vmax.f32 %v4258, 0.0
      %v4267 = vmax.f32 %v4259, 0.0
      %v4268 = vmax.f32 %v4260, 0.0
      %v4269 = vmax.f32 %v4261, 0.0
      %v4270 = vmax.f32 %v4262, 0.0
      %v4271 = vmax.f32 %v4263, 0.0
      %v4272 = vmul.f32 %v4200, %v4264
      %v4273 = vmul.f32 %v4201, %v4265
      %v4274 = vmul.f32 %v4202, %v4266
      %v4275 = vmul.f32 %v4203, %v4267
      %v4276 = vmul.f32 %v4204, %v4268
      %v4277 = vmul.f32 %v4205, %v4269
      %v4278 = vmul.f32 %v4206, %v4270
      %v4279 = vmul.f32 %v4207, %v4271
      %v4280 = vpack.c.bf16 %v4272, %v4272
      %v4281 = vpack.c.bf16 %v4273, %v4273
      %v4282 = vpack.c.bf16 %v4274, %v4274
      %v4283 = vpack.c.bf16 %v4275, %v4275
      %v4284 = vpack.c.bf16 %v4276, %v4276
      %v4285 = vpack.c.bf16 %v4277, %v4277
      %v4286 = vpack.c.bf16 %v4278, %v4278
      %v4287 = vpack.c.bf16 %v4279, %v4279
      %4288 = vst.msk [vmem:[#allocation2 + $0x20] sm:$0xf] %vm610, %v4280
      %4289 = vst.msk [vmem:[#allocation2 + $0x24] sm:$0xf] %vm610, %v4281
      %4290 = vst.msk [vmem:[#allocation2 + $0x28] sm:$0xf] %vm610, %v4282
      %4291 = vst.msk [vmem:[#allocation2 + $0x2c] sm:$0xf] %vm610, %v4283
      %4292 = vst.msk [vmem:[#allocation2 + $0x30] sm:$0xf] %vm610, %v4284
      %4293 = vst.msk [vmem:[#allocation2 + $0x34] sm:$0xf] %vm610, %v4285
      %4294 = vst.msk [vmem:[#allocation2 + $0x38] sm:$0xf] %vm610, %v4286
      %4295 = vst.msk [vmem:[#allocation2 + $0x3c] sm:$0xf] %vm610, %v4287
      %4296 = vset.pattern.permute.xlu0 26
      %4297 = vperm.xlu0 %4296, %v413
      %v4298 = vpop.permute.xlu0 %4297
      %4300 = vset.pattern.permute.xlu0 26
      %4301 = vperm.xlu0 %4300, %v416
      %v4302 = vpop.permute.xlu0 %4301
      %4304 = vset.pattern.permute.xlu0 26
      %4305 = vperm.xlu0 %4304, %v419
      %v4306 = vpop.permute.xlu0 %4305
      %4308 = vset.pattern.permute.xlu0 26
      %4309 = vperm.xlu0 %4308, %v422
      %v4310 = vpop.permute.xlu0 %4309
      %4312 = vset.pattern.permute.xlu0 26
      %4313 = vperm.xlu0 %4312, %v425
      %v4314 = vpop.permute.xlu0 %4313
      %4316 = vset.pattern.permute.xlu0 26
      %4317 = vperm.xlu0 %4316, %v428
      %v4318 = vpop.permute.xlu0 %4317
      %4320 = vset.pattern.permute.xlu0 26
      %4321 = vperm.xlu0 %4320, %v431
      %v4322 = vpop.permute.xlu0 %4321
      %4324 = vset.pattern.permute.xlu0 26
      %4325 = vperm.xlu0 %4324, %v434
      %v4326 = vpop.permute.xlu0 %4325
      %v4328 = vsub.f32 %v4298, %v449
      %v4329 = vsub.f32 %v4302, %v449
      %v4330 = vsub.f32 %v4306, %v449
      %v4331 = vsub.f32 %v4310, %v449
      %v4332 = vsub.f32 %v4314, %v449
      %v4333 = vsub.f32 %v4318, %v449
      %v4334 = vsub.f32 %v4322, %v449
      %v4335 = vsub.f32 %v4326, %v449
      %v4336 = vand.u32 2147483647, %v4328
      %v4337 = vand.u32 2147483647, %v4329
      %v4338 = vand.u32 2147483647, %v4330
      %v4339 = vand.u32 2147483647, %v4331
      %v4340 = vand.u32 2147483647, %v4332
      %v4341 = vand.u32 2147483647, %v4333
      %v4342 = vand.u32 2147483647, %v4334
      %v4343 = vand.u32 2147483647, %v4335
      %v4344 = vsub.f32 1.0, %v4336
      %v4345 = vsub.f32 1.0, %v4337
      %v4346 = vsub.f32 1.0, %v4338
      %v4347 = vsub.f32 1.0, %v4339
      %v4348 = vsub.f32 1.0, %v4340
      %v4349 = vsub.f32 1.0, %v4341
      %v4350 = vsub.f32 1.0, %v4342
      %v4351 = vsub.f32 1.0, %v4343
      %v4352 = vmax.f32 %v4344, 0.0
      %v4353 = vmax.f32 %v4345, 0.0
      %v4354 = vmax.f32 %v4346, 0.0
      %v4355 = vmax.f32 %v4347, 0.0
      %v4356 = vmax.f32 %v4348, 0.0
      %v4357 = vmax.f32 %v4349, 0.0
      %v4358 = vmax.f32 %v4350, 0.0
      %v4359 = vmax.f32 %v4351, 0.0
      %4360 = vset.pattern.permute.xlu0 30
      %4361 = vperm.xlu0 %4360, %v413
      %v4362 = vpop.permute.xlu0 %4361
      %4364 = vset.pattern.permute.xlu0 30
      %4365 = vperm.xlu0 %4364, %v416
      %v4366 = vpop.permute.xlu0 %4365
      %4368 = vset.pattern.permute.xlu0 30
      %4369 = vperm.xlu0 %4368, %v419
      %v4370 = vpop.permute.xlu0 %4369
      %4372 = vset.pattern.permute.xlu0 30
      %4373 = vperm.xlu0 %4372, %v422
      %v4374 = vpop.permute.xlu0 %4373
      %4376 = vset.pattern.permute.xlu0 30
      %4377 = vperm.xlu0 %4376, %v425
      %v4378 = vpop.permute.xlu0 %4377
      %4380 = vset.pattern.permute.xlu0 30
      %4381 = vperm.xlu0 %4380, %v428
      %v4382 = vpop.permute.xlu0 %4381
      %4384 = vset.pattern.permute.xlu0 30
      %4385 = vperm.xlu0 %4384, %v431
      %v4386 = vpop.permute.xlu0 %4385
      %4388 = vset.pattern.permute.xlu0 30
      %4389 = vperm.xlu0 %4388, %v434
      %v4390 = vpop.permute.xlu0 %4389
      %v4392 = vsub.f32 %v4362, %v447
      %v4393 = vsub.f32 %v4366, %v447
      %v4394 = vsub.f32 %v4370, %v447
      %v4395 = vsub.f32 %v4374, %v447
      %v4396 = vsub.f32 %v4378, %v447
      %v4397 = vsub.f32 %v4382, %v447
      %v4398 = vsub.f32 %v4386, %v447
      %v4399 = vsub.f32 %v4390, %v447
      %v4400 = vand.u32 2147483647, %v4392
      %v4401 = vand.u32 2147483647, %v4393
      %v4402 = vand.u32 2147483647, %v4394
      %v4403 = vand.u32 2147483647, %v4395
      %v4404 = vand.u32 2147483647, %v4396
      %v4405 = vand.u32 2147483647, %v4397
      %v4406 = vand.u32 2147483647, %v4398
      %v4407 = vand.u32 2147483647, %v4399
      %v4408 = vsub.f32 1.0, %v4400
      %v4409 = vsub.f32 1.0, %v4401
      %v4410 = vsub.f32 1.0, %v4402
      %v4411 = vsub.f32 1.0, %v4403
      %v4412 = vsub.f32 1.0, %v4404
      %v4413 = vsub.f32 1.0, %v4405
      %v4414 = vsub.f32 1.0, %v4406
      %v4415 = vsub.f32 1.0, %v4407
      %v4416 = vmax.f32 %v4408, 0.0
      %v4417 = vmax.f32 %v4409, 0.0
      %v4418 = vmax.f32 %v4410, 0.0
      %v4419 = vmax.f32 %v4411, 0.0
      %v4420 = vmax.f32 %v4412, 0.0
      %v4421 = vmax.f32 %v4413, 0.0
      %v4422 = vmax.f32 %v4414, 0.0
      %v4423 = vmax.f32 %v4415, 0.0
      %v4424 = vmul.f32 %v4352, %v4416
      %v4425 = vmul.f32 %v4353, %v4417
      %v4426 = vmul.f32 %v4354, %v4418
      %v4427 = vmul.f32 %v4355, %v4419
      %v4428 = vmul.f32 %v4356, %v4420
      %v4429 = vmul.f32 %v4357, %v4421
      %v4430 = vmul.f32 %v4358, %v4422
      %v4431 = vmul.f32 %v4359, %v4423
      %v4432 = vpack.c.bf16 %v4424, %v4424
      %v4433 = vpack.c.bf16 %v4425, %v4425
      %v4434 = vpack.c.bf16 %v4426, %v4426
      %v4435 = vpack.c.bf16 %v4427, %v4427
      %v4436 = vpack.c.bf16 %v4428, %v4428
      %v4437 = vpack.c.bf16 %v4429, %v4429
      %v4438 = vpack.c.bf16 %v4430, %v4430
      %v4439 = vpack.c.bf16 %v4431, %v4431
      %4440 = vst.msk [vmem:[#allocation2 + $0x40] sm:$0xf] %vm610, %v4432
      %4441 = vst.msk [vmem:[#allocation2 + $0x44] sm:$0xf] %vm610, %v4433
      %4442 = vst.msk [vmem:[#allocation2 + $0x48] sm:$0xf] %vm610, %v4434
      %4443 = vst.msk [vmem:[#allocation2 + $0x4c] sm:$0xf] %vm610, %v4435
      %4444 = vst.msk [vmem:[#allocation2 + $0x50] sm:$0xf] %vm610, %v4436
      %4445 = vst.msk [vmem:[#allocation2 + $0x54] sm:$0xf] %vm610, %v4437
      %4446 = vst.msk [vmem:[#allocation2 + $0x58] sm:$0xf] %vm610, %v4438
      %4447 = vst.msk [vmem:[#allocation2 + $0x5c] sm:$0xf] %vm610, %v4439
      %4448 = vset.pattern.permute.xlu0 27
      %4449 = vperm.xlu0 %4448, %v413
      %v4450 = vpop.permute.xlu0 %4449
      %4452 = vset.pattern.permute.xlu0 27
      %4453 = vperm.xlu0 %4452, %v416
      %v4454 = vpop.permute.xlu0 %4453
      %4456 = vset.pattern.permute.xlu0 27
      %4457 = vperm.xlu0 %4456, %v419
      %v4458 = vpop.permute.xlu0 %4457
      %4460 = vset.pattern.permute.xlu0 27
      %4461 = vperm.xlu0 %4460, %v422
      %v4462 = vpop.permute.xlu0 %4461
      %4464 = vset.pattern.permute.xlu0 27
      %4465 = vperm.xlu0 %4464, %v425
      %v4466 = vpop.permute.xlu0 %4465
      %4468 = vset.pattern.permute.xlu0 27
      %4469 = vperm.xlu0 %4468, %v428
      %v4470 = vpop.permute.xlu0 %4469
      %4472 = vset.pattern.permute.xlu0 27
      %4473 = vperm.xlu0 %4472, %v431
      %v4474 = vpop.permute.xlu0 %4473
      %4476 = vset.pattern.permute.xlu0 27
      %4477 = vperm.xlu0 %4476, %v434
      %v4478 = vpop.permute.xlu0 %4477
      %v4480 = vsub.f32 %v4450, %v449
      %v4481 = vsub.f32 %v4454, %v449
      %v4482 = vsub.f32 %v4458, %v449
      %v4483 = vsub.f32 %v4462, %v449
      %v4484 = vsub.f32 %v4466, %v449
      %v4485 = vsub.f32 %v4470, %v449
      %v4486 = vsub.f32 %v4474, %v449
      %v4487 = vsub.f32 %v4478, %v449
      %v4488 = vand.u32 2147483647, %v4480
      %v4489 = vand.u32 2147483647, %v4481
      %v4490 = vand.u32 2147483647, %v4482
      %v4491 = vand.u32 2147483647, %v4483
      %v4492 = vand.u32 2147483647, %v4484
      %v4493 = vand.u32 2147483647, %v4485
      %v4494 = vand.u32 2147483647, %v4486
      %v4495 = vand.u32 2147483647, %v4487
      %v4496 = vsub.f32 1.0, %v4488
      %v4497 = vsub.f32 1.0, %v4489
      %v4498 = vsub.f32 1.0, %v4490
      %v4499 = vsub.f32 1.0, %v4491
      %v4500 = vsub.f32 1.0, %v4492
      %v4501 = vsub.f32 1.0, %v4493
      %v4502 = vsub.f32 1.0, %v4494
      %v4503 = vsub.f32 1.0, %v4495
      %v4504 = vmax.f32 %v4496, 0.0
      %v4505 = vmax.f32 %v4497, 0.0
      %v4506 = vmax.f32 %v4498, 0.0
      %v4507 = vmax.f32 %v4499, 0.0
      %v4508 = vmax.f32 %v4500, 0.0
      %v4509 = vmax.f32 %v4501, 0.0
      %v4510 = vmax.f32 %v4502, 0.0
      %v4511 = vmax.f32 %v4503, 0.0
      %4512 = vset.pattern.permute.xlu0 31
      %4513 = vperm.xlu0 %4512, %v413
      %v4514 = vpop.permute.xlu0 %4513
      %4516 = vset.pattern.permute.xlu0 31
      %4517 = vperm.xlu0 %4516, %v416
      %v4518 = vpop.permute.xlu0 %4517
      %4520 = vset.pattern.permute.xlu0 31
      %4521 = vperm.xlu0 %4520, %v419
      %v4522 = vpop.permute.xlu0 %4521
      %4524 = vset.pattern.permute.xlu0 31
      %4525 = vperm.xlu0 %4524, %v422
      %v4526 = vpop.permute.xlu0 %4525
      %4528 = vset.pattern.permute.xlu0 31
      %4529 = vperm.xlu0 %4528, %v425
      %v4530 = vpop.permute.xlu0 %4529
      %4532 = vset.pattern.permute.xlu0 31
      %4533 = vperm.xlu0 %4532, %v428
      %v4534 = vpop.permute.xlu0 %4533
      %4536 = vset.pattern.permute.xlu0 31
      %4537 = vperm.xlu0 %4536, %v431
      %v4538 = vpop.permute.xlu0 %4537
      %4540 = vset.pattern.permute.xlu0 31
      %4541 = vperm.xlu0 %4540, %v434
      %v4542 = vpop.permute.xlu0 %4541
      %v4544 = vsub.f32 %v4514, %v447
      %v4545 = vsub.f32 %v4518, %v447
      %v4546 = vsub.f32 %v4522, %v447
      %v4547 = vsub.f32 %v4526, %v447
      %v4548 = vsub.f32 %v4530, %v447
      %v4549 = vsub.f32 %v4534, %v447
      %v4550 = vsub.f32 %v4538, %v447
      %v4551 = vsub.f32 %v4542, %v447
      %v4552 = vand.u32 2147483647, %v4544
      %v4553 = vand.u32 2147483647, %v4545
      %v4554 = vand.u32 2147483647, %v4546
      %v4555 = vand.u32 2147483647, %v4547
      %v4556 = vand.u32 2147483647, %v4548
      %v4557 = vand.u32 2147483647, %v4549
      %v4558 = vand.u32 2147483647, %v4550
      %v4559 = vand.u32 2147483647, %v4551
      %v4560 = vsub.f32 1.0, %v4552
      %v4561 = vsub.f32 1.0, %v4553
      %v4562 = vsub.f32 1.0, %v4554
      %v4563 = vsub.f32 1.0, %v4555
      %v4564 = vsub.f32 1.0, %v4556
      %v4565 = vsub.f32 1.0, %v4557
      %v4566 = vsub.f32 1.0, %v4558
      %v4567 = vsub.f32 1.0, %v4559
      %v4568 = vmax.f32 %v4560, 0.0
      %v4569 = vmax.f32 %v4561, 0.0
      %v4570 = vmax.f32 %v4562, 0.0
      %v4571 = vmax.f32 %v4563, 0.0
      %v4572 = vmax.f32 %v4564, 0.0
      %v4573 = vmax.f32 %v4565, 0.0
      %v4574 = vmax.f32 %v4566, 0.0
      %v4575 = vmax.f32 %v4567, 0.0
      %v4576 = vmul.f32 %v4504, %v4568
      %v4577 = vmul.f32 %v4505, %v4569
      %v4578 = vmul.f32 %v4506, %v4570
      %v4579 = vmul.f32 %v4507, %v4571
      %v4580 = vmul.f32 %v4508, %v4572
      %v4581 = vmul.f32 %v4509, %v4573
      %v4582 = vmul.f32 %v4510, %v4574
      %v4583 = vmul.f32 %v4511, %v4575
      %v4584 = vpack.c.bf16 %v4576, %v4576
      %v4585 = vpack.c.bf16 %v4577, %v4577
      %v4586 = vpack.c.bf16 %v4578, %v4578
      %v4587 = vpack.c.bf16 %v4579, %v4579
      %v4588 = vpack.c.bf16 %v4580, %v4580
      %v4589 = vpack.c.bf16 %v4581, %v4581
      %v4590 = vpack.c.bf16 %v4582, %v4582
      %v4591 = vpack.c.bf16 %v4583, %v4583
      %4592 = vst.msk [vmem:[#allocation2 + $0x60] sm:$0xf] %vm610, %v4584
      %4593 = vst.msk [vmem:[#allocation2 + $0x64] sm:$0xf] %vm610, %v4585
      %4594 = vst.msk [vmem:[#allocation2 + $0x68] sm:$0xf] %vm610, %v4586
      %4595 = vst.msk [vmem:[#allocation2 + $0x6c] sm:$0xf] %vm610, %v4587
      %4596 = vst.msk [vmem:[#allocation2 + $0x70] sm:$0xf] %vm610, %v4588
      %4597 = vst.msk [vmem:[#allocation2 + $0x74] sm:$0xf] %vm610, %v4589
      %4598 = vst.msk [vmem:[#allocation2 + $0x78] sm:$0xf] %vm610, %v4590
      %4599 = vst.msk [vmem:[#allocation2 + $0x7c] sm:$0xf] %vm610, %v4591
      %v4600 = vld [vmem:[#allocation2] sm:$0xf]
      %v4601 = vld [vmem:[#allocation2 + $0x4] sm:$0xf]
      %v4602 = vld [vmem:[#allocation2 + $0x8] sm:$0xf]
      %v4603 = vld [vmem:[#allocation2 + $0xc] sm:$0xf]
      %v4604 = vld [vmem:[#allocation2 + $0x10] sm:$0xf]
      %v4605 = vld [vmem:[#allocation2 + $0x14] sm:$0xf]
      %v4606 = vld [vmem:[#allocation2 + $0x18] sm:$0xf]
      %v4607 = vld [vmem:[#allocation2 + $0x1c] sm:$0xf]
      %v4608 = vld [vmem:[#allocation2 + $0x20] sm:$0xf]
      %v4609 = vld [vmem:[#allocation2 + $0x24] sm:$0xf]
      %v4610 = vld [vmem:[#allocation2 + $0x28] sm:$0xf]
      %v4611 = vld [vmem:[#allocation2 + $0x2c] sm:$0xf]
      %v4612 = vld [vmem:[#allocation2 + $0x30] sm:$0xf]
      %v4613 = vld [vmem:[#allocation2 + $0x34] sm:$0xf]
      %v4614 = vld [vmem:[#allocation2 + $0x38] sm:$0xf]
      %v4615 = vld [vmem:[#allocation2 + $0x3c] sm:$0xf]
      %v4616 = vld [vmem:[#allocation2 + $0x40] sm:$0xf]
      %v4617 = vld [vmem:[#allocation2 + $0x44] sm:$0xf]
      %v4618 = vld [vmem:[#allocation2 + $0x48] sm:$0xf]
      %v4619 = vld [vmem:[#allocation2 + $0x4c] sm:$0xf]
      %v4620 = vld [vmem:[#allocation2 + $0x50] sm:$0xf]
      %v4621 = vld [vmem:[#allocation2 + $0x54] sm:$0xf]
      %v4622 = vld [vmem:[#allocation2 + $0x58] sm:$0xf]
      %v4623 = vld [vmem:[#allocation2 + $0x5c] sm:$0xf]
      %v4624 = vld [vmem:[#allocation2 + $0x60] sm:$0xf]
      %v4625 = vld [vmem:[#allocation2 + $0x64] sm:$0xf]
      %v4626 = vld [vmem:[#allocation2 + $0x68] sm:$0xf]
      %v4627 = vld [vmem:[#allocation2 + $0x6c] sm:$0xf]
      %v4628 = vld [vmem:[#allocation2 + $0x70] sm:$0xf]
      %v4629 = vld [vmem:[#allocation2 + $0x74] sm:$0xf]
      %v4630 = vld [vmem:[#allocation2 + $0x78] sm:$0xf]
      %v4631 = vld [vmem:[#allocation2 + $0x7c] sm:$0xf]
      %v4664 = vunpack.c.l.b16 %v4600
      %v4665 = vunpack.c.l.b16 %v4601
      %v4666 = vunpack.c.l.b16 %v4602
      %v4667 = vunpack.c.l.b16 %v4603
      %v4668 = vunpack.c.l.b16 %v4604
      %v4669 = vunpack.c.l.b16 %v4605
      %v4670 = vunpack.c.l.b16 %v4606
      %v4671 = vunpack.c.l.b16 %v4607
      %v4672 = vunpack.c.l.b16 %v4608
      %v4673 = vunpack.c.l.b16 %v4609
      %v4674 = vunpack.c.l.b16 %v4610
      %v4675 = vunpack.c.l.b16 %v4611
      %v4676 = vunpack.c.l.b16 %v4612
      %v4677 = vunpack.c.l.b16 %v4613
      %v4678 = vunpack.c.l.b16 %v4614
      %v4679 = vunpack.c.l.b16 %v4615
      %v4680 = vunpack.c.l.b16 %v4616
      %v4681 = vunpack.c.l.b16 %v4617
      %v4682 = vunpack.c.l.b16 %v4618
      %v4683 = vunpack.c.l.b16 %v4619
      %v4684 = vunpack.c.l.b16 %v4620
      %v4685 = vunpack.c.l.b16 %v4621
      %v4686 = vunpack.c.l.b16 %v4622
      %v4687 = vunpack.c.l.b16 %v4623
      %v4688 = vunpack.c.l.b16 %v4624
      %v4689 = vunpack.c.l.b16 %v4625
      %v4690 = vunpack.c.l.b16 %v4626
      %v4691 = vunpack.c.l.b16 %v4627
      %v4692 = vunpack.c.l.b16 %v4628
      %v4693 = vunpack.c.l.b16 %v4629
      %v4694 = vunpack.c.l.b16 %v4630
      %v4695 = vunpack.c.l.b16 %v4631
      %v4696 = vpack.c.b16 %v4665, %v4664
      %v4697 = vpack.c.b16 %v4667, %v4666
      %v4698 = vpack.c.b16 %v4669, %v4668
      %v4699 = vpack.c.b16 %v4671, %v4670
      %v4700 = vpack.c.b16 %v4673, %v4672
      %v4701 = vpack.c.b16 %v4675, %v4674
      %v4702 = vpack.c.b16 %v4677, %v4676
      %v4703 = vpack.c.b16 %v4679, %v4678
      %v4704 = vpack.c.b16 %v4681, %v4680
      %v4705 = vpack.c.b16 %v4683, %v4682
      %v4706 = vpack.c.b16 %v4685, %v4684
      %v4707 = vpack.c.b16 %v4687, %v4686
      %v4708 = vpack.c.b16 %v4689, %v4688
      %v4709 = vpack.c.b16 %v4691, %v4690
      %v4710 = vpack.c.b16 %v4693, %v4692
      %v4711 = vpack.c.b16 %v4695, %v4694
      %4712 = vrot.lane.b32.xlu0 %v1203, 48
      %v4713 = vpop.permute.xlu0 %4712
      %4714 = vrot.lane.b32.xlu0 %v1204, 48
      %v4715 = vpop.permute.xlu0 %4714
      %4716 = vrot.lane.b32.xlu0 %v1205, 48
      %v4717 = vpop.permute.xlu0 %4716
      %4718 = vrot.lane.b32.xlu0 %v1206, 48
      %v4719 = vpop.permute.xlu0 %4718
      %v4725 = vsel %vm1219, %v4696, 0
      %v4728 = vsel %vm1219, %v4697, 0
      %v4731 = vsel %vm1219, %v4698, 0
      %v4734 = vsel %vm1219, %v4699, 0
      %v4737 = vsel %vm1219, %v4700, 0
      %v4740 = vsel %vm1219, %v4701, 0
      %v4743 = vsel %vm1219, %v4702, 0
      %v4746 = vsel %vm1219, %v4703, 0
      %v4749 = vsel %vm1219, %v4704, 0
      %v4752 = vsel %vm1219, %v4705, 0
      %v4755 = vsel %vm1219, %v4706, 0
      %v4758 = vsel %vm1219, %v4707, 0
      %v4761 = vsel %vm1219, %v4708, 0
      %v4764 = vsel %vm1219, %v4709, 0
      %v4767 = vsel %vm1219, %v4710, 0
      %v4770 = vsel %vm1219, %v4711, 0
      %4772 = vmatpush.bf16.msra.mxu0 0
      %4773 = vmatpush.bf16.msra.mxu0 0
      %4774 = vmatpush.bf16.msra.mxu0 0
      %4775 = vmatpush.bf16.msra.mxu0 0
      %4776 = vmatpush.bf16.msra.mxu0 %v4719
      %4777 = vmatpush.bf16.msra.mxu0 %v4717
      %4778 = vmatpush.bf16.msra.mxu0 %v4715
      %4779 = vmatpush.bf16.msra.mxu0 %v4713
      %4780 = vmatmul.bf16.gmra.mxu0 %v4725
      %v4781 = vpop.f32.mrf.mxu0
      %v4782 = vadd.f32 0.0, %v4781
      %v4783 = vpop.f32.mrf.mxu0
      %v4784 = vadd.f32 0.0, %v4783
      %4785 = vmatmul.bf16.gmra.mxu0 %v4728
      %v4786 = vpop.f32.mrf.mxu0
      %v4787 = vadd.f32 0.0, %v4786
      %v4788 = vpop.f32.mrf.mxu0
      %v4789 = vadd.f32 0.0, %v4788
      %4790 = vmatmul.bf16.gmra.mxu0 %v4731
      %v4791 = vpop.f32.mrf.mxu0
      %v4792 = vadd.f32 0.0, %v4791
      %v4793 = vpop.f32.mrf.mxu0
      %v4794 = vadd.f32 0.0, %v4793
      %4795 = vmatmul.bf16.gmra.mxu0 %v4734
      %v4796 = vpop.f32.mrf.mxu0
      %v4797 = vadd.f32 0.0, %v4796
      %v4798 = vpop.f32.mrf.mxu0
      %v4799 = vadd.f32 0.0, %v4798
      %4800 = vmatmul.bf16.gmra.mxu0 %v4737
      %v4801 = vpop.f32.mrf.mxu0
      %v4802 = vadd.f32 0.0, %v4801
      %v4803 = vpop.f32.mrf.mxu0
      %v4804 = vadd.f32 0.0, %v4803
      %4805 = vmatmul.bf16.gmra.mxu0 %v4740
      %v4806 = vpop.f32.mrf.mxu0
      %v4807 = vadd.f32 0.0, %v4806
      %v4808 = vpop.f32.mrf.mxu0
      %v4809 = vadd.f32 0.0, %v4808
      %4810 = vmatmul.bf16.gmra.mxu0 %v4743
      %v4811 = vpop.f32.mrf.mxu0
      %v4812 = vadd.f32 0.0, %v4811
      %v4813 = vpop.f32.mrf.mxu0
      %v4814 = vadd.f32 0.0, %v4813
      %4815 = vmatmul.bf16.gmra.mxu0 %v4746
      %v4816 = vpop.f32.mrf.mxu0
      %v4817 = vadd.f32 0.0, %v4816
      %v4818 = vpop.f32.mrf.mxu0
      %v4819 = vadd.f32 0.0, %v4818
      %4820 = vmatmul.bf16.gmra.mxu0 %v4749
      %v4821 = vpop.f32.mrf.mxu0
      %v4822 = vadd.f32 0.0, %v4821
      %v4823 = vpop.f32.mrf.mxu0
      %v4824 = vadd.f32 0.0, %v4823
      %4825 = vmatmul.bf16.gmra.mxu0 %v4752
      %v4826 = vpop.f32.mrf.mxu0
      %v4827 = vadd.f32 0.0, %v4826
      %v4828 = vpop.f32.mrf.mxu0
      %v4829 = vadd.f32 0.0, %v4828
      %4830 = vmatmul.bf16.gmra.mxu0 %v4755
      %v4831 = vpop.f32.mrf.mxu0
      %v4832 = vadd.f32 0.0, %v4831
      %v4833 = vpop.f32.mrf.mxu0
      %v4834 = vadd.f32 0.0, %v4833
      %4835 = vmatmul.bf16.gmra.mxu0 %v4758
      %v4836 = vpop.f32.mrf.mxu0
      %v4837 = vadd.f32 0.0, %v4836
      %v4838 = vpop.f32.mrf.mxu0
      %v4839 = vadd.f32 0.0, %v4838
      %4840 = vmatmul.bf16.gmra.mxu0 %v4761
      %v4841 = vpop.f32.mrf.mxu0
      %v4842 = vadd.f32 0.0, %v4841
      %v4843 = vpop.f32.mrf.mxu0
      %v4844 = vadd.f32 0.0, %v4843
      %4845 = vmatmul.bf16.gmra.mxu0 %v4764
      %v4846 = vpop.f32.mrf.mxu0
      %v4847 = vadd.f32 0.0, %v4846
      %v4848 = vpop.f32.mrf.mxu0
      %v4849 = vadd.f32 0.0, %v4848
      %4850 = vmatmul.bf16.gmra.mxu0 %v4767
      %v4851 = vpop.f32.mrf.mxu0
      %v4852 = vadd.f32 0.0, %v4851
      %v4853 = vpop.f32.mrf.mxu0
      %v4854 = vadd.f32 0.0, %v4853
      %4855 = vmatmul.bf16.gmra.mxu0 %v4770
      %v4856 = vpop.f32.mrf.mxu0
      %v4857 = vadd.f32 0.0, %v4856
      %v4858 = vpop.f32.mrf.mxu0
      %v4859 = vadd.f32 0.0, %v4858
      %4860 = vdwg.mxu0
      %4893 = vrot.lane.b32.xlu0 %v4782, 24
      %v4894 = vpop.permute.xlu0 %4893
      %4895 = vrot.lane.b32.xlu0 %v4784, 24
      %v4896 = vpop.permute.xlu0 %4895
      %4897 = vrot.lane.b32.xlu0 %v4787, 24
      %v4898 = vpop.permute.xlu0 %4897
      %4899 = vrot.lane.b32.xlu0 %v4789, 24
      %v4900 = vpop.permute.xlu0 %4899
      %4901 = vrot.lane.b32.xlu0 %v4792, 24
      %v4902 = vpop.permute.xlu0 %4901
      %4903 = vrot.lane.b32.xlu0 %v4794, 24
      %v4904 = vpop.permute.xlu0 %4903
      %4905 = vrot.lane.b32.xlu0 %v4797, 24
      %v4906 = vpop.permute.xlu0 %4905
      %4907 = vrot.lane.b32.xlu0 %v4799, 24
      %v4908 = vpop.permute.xlu0 %4907
      %4909 = vrot.lane.b32.xlu0 %v4802, 24
      %v4910 = vpop.permute.xlu0 %4909
      %4911 = vrot.lane.b32.xlu0 %v4804, 24
      %v4912 = vpop.permute.xlu0 %4911
      %4913 = vrot.lane.b32.xlu0 %v4807, 24
      %v4914 = vpop.permute.xlu0 %4913
      %4915 = vrot.lane.b32.xlu0 %v4809, 24
      %v4916 = vpop.permute.xlu0 %4915
      %4917 = vrot.lane.b32.xlu0 %v4812, 24
      %v4918 = vpop.permute.xlu0 %4917
      %4919 = vrot.lane.b32.xlu0 %v4814, 24
      %v4920 = vpop.permute.xlu0 %4919
      %4921 = vrot.lane.b32.xlu0 %v4817, 24
      %v4922 = vpop.permute.xlu0 %4921
      %4923 = vrot.lane.b32.xlu0 %v4819, 24
      %v4924 = vpop.permute.xlu0 %4923
      %4925 = vrot.lane.b32.xlu0 %v4822, 24
      %v4926 = vpop.permute.xlu0 %4925
      %4927 = vrot.lane.b32.xlu0 %v4824, 24
      %v4928 = vpop.permute.xlu0 %4927
      %4929 = vrot.lane.b32.xlu0 %v4827, 24
      %v4930 = vpop.permute.xlu0 %4929
      %4931 = vrot.lane.b32.xlu0 %v4829, 24
      %v4932 = vpop.permute.xlu0 %4931
      %4933 = vrot.lane.b32.xlu0 %v4832, 24
      %v4934 = vpop.permute.xlu0 %4933
      %4935 = vrot.lane.b32.xlu0 %v4834, 24
      %v4936 = vpop.permute.xlu0 %4935
      %4937 = vrot.lane.b32.xlu0 %v4837, 24
      %v4938 = vpop.permute.xlu0 %4937
      %4939 = vrot.lane.b32.xlu0 %v4839, 24
      %v4940 = vpop.permute.xlu0 %4939
      %4941 = vrot.lane.b32.xlu0 %v4842, 24
      %v4942 = vpop.permute.xlu0 %4941
      %4943 = vrot.lane.b32.xlu0 %v4844, 24
      %v4944 = vpop.permute.xlu0 %4943
      %4945 = vrot.lane.b32.xlu0 %v4847, 24
      %v4946 = vpop.permute.xlu0 %4945
      %4947 = vrot.lane.b32.xlu0 %v4849, 24
      %v4948 = vpop.permute.xlu0 %4947
      %4949 = vrot.lane.b32.xlu0 %v4852, 24
      %v4950 = vpop.permute.xlu0 %4949
      %4951 = vrot.lane.b32.xlu0 %v4854, 24
      %v4952 = vpop.permute.xlu0 %4951
      %4953 = vrot.lane.b32.xlu0 %v4857, 24
      %v4954 = vpop.permute.xlu0 %4953
      %4955 = vrot.lane.b32.xlu0 %v4859, 24
      %v4956 = vpop.permute.xlu0 %4955
      %v4989 = vmul.f32 %v343, %v4894
      %v4990 = vmul.f32 %v345, %v4896
      %v4991 = vmul.f32 %v348, %v4898
      %v4992 = vmul.f32 %v350, %v4900
      %v4993 = vmul.f32 %v353, %v4902
      %v4994 = vmul.f32 %v355, %v4904
      %v4995 = vmul.f32 %v358, %v4906
      %v4996 = vmul.f32 %v360, %v4908
      %v4997 = vmul.f32 %v343, %v4910
      %v4998 = vmul.f32 %v345, %v4912
      %v4999 = vmul.f32 %v348, %v4914
      %v5000 = vmul.f32 %v350, %v4916
      %v5001 = vmul.f32 %v353, %v4918
      %v5002 = vmul.f32 %v355, %v4920
      %v5003 = vmul.f32 %v358, %v4922
      %v5004 = vmul.f32 %v360, %v4924
      %v5005 = vmul.f32 %v343, %v4926
      %v5006 = vmul.f32 %v345, %v4928
      %v5007 = vmul.f32 %v348, %v4930
      %v5008 = vmul.f32 %v350, %v4932
      %v5009 = vmul.f32 %v353, %v4934
      %v5010 = vmul.f32 %v355, %v4936
      %v5011 = vmul.f32 %v358, %v4938
      %v5012 = vmul.f32 %v360, %v4940
      %v5013 = vmul.f32 %v343, %v4942
      %v5014 = vmul.f32 %v345, %v4944
      %v5015 = vmul.f32 %v348, %v4946
      %v5016 = vmul.f32 %v350, %v4948
      %v5017 = vmul.f32 %v353, %v4950
      %v5018 = vmul.f32 %v355, %v4952
      %v5019 = vmul.f32 %v358, %v4954
      %v5020 = vmul.f32 %v360, %v4956
      %5053 = vrot.lane.b32.xlu0 %v4989, 104
      %v5054 = vpop.permute.xlu0 %5053
      %5055 = vrot.lane.b32.xlu0 %v4990, 104
      %v5056 = vpop.permute.xlu0 %5055
      %5057 = vrot.lane.b32.xlu0 %v4991, 104
      %v5058 = vpop.permute.xlu0 %5057
      %5059 = vrot.lane.b32.xlu0 %v4992, 104
      %v5060 = vpop.permute.xlu0 %5059
      %5061 = vrot.lane.b32.xlu0 %v4993, 104
      %v5062 = vpop.permute.xlu0 %5061
      %5063 = vrot.lane.b32.xlu0 %v4994, 104
      %v5064 = vpop.permute.xlu0 %5063
      %5065 = vrot.lane.b32.xlu0 %v4995, 104
      %v5066 = vpop.permute.xlu0 %5065
      %5067 = vrot.lane.b32.xlu0 %v4996, 104
      %v5068 = vpop.permute.xlu0 %5067
      %5069 = vrot.lane.b32.xlu0 %v4997, 104
      %v5070 = vpop.permute.xlu0 %5069
      %5071 = vrot.lane.b32.xlu0 %v4998, 104
      %v5072 = vpop.permute.xlu0 %5071
      %5073 = vrot.lane.b32.xlu0 %v4999, 104
      %v5074 = vpop.permute.xlu0 %5073
      %5075 = vrot.lane.b32.xlu0 %v5000, 104
      %v5076 = vpop.permute.xlu0 %5075
      %5077 = vrot.lane.b32.xlu0 %v5001, 104
      %v5078 = vpop.permute.xlu0 %5077
      %5079 = vrot.lane.b32.xlu0 %v5002, 104
      %v5080 = vpop.permute.xlu0 %5079
      %5081 = vrot.lane.b32.xlu0 %v5003, 104
      %v5082 = vpop.permute.xlu0 %5081
      %5083 = vrot.lane.b32.xlu0 %v5004, 104
      %v5084 = vpop.permute.xlu0 %5083
      %5085 = vrot.lane.b32.xlu0 %v5005, 104
      %v5086 = vpop.permute.xlu0 %5085
      %5087 = vrot.lane.b32.xlu0 %v5006, 104
      %v5088 = vpop.permute.xlu0 %5087
      %5089 = vrot.lane.b32.xlu0 %v5007, 104
      %v5090 = vpop.permute.xlu0 %5089
      %5091 = vrot.lane.b32.xlu0 %v5008, 104
      %v5092 = vpop.permute.xlu0 %5091
      %5093 = vrot.lane.b32.xlu0 %v5009, 104
      %v5094 = vpop.permute.xlu0 %5093
      %5095 = vrot.lane.b32.xlu0 %v5010, 104
      %v5096 = vpop.permute.xlu0 %5095
      %5097 = vrot.lane.b32.xlu0 %v5011, 104
      %v5098 = vpop.permute.xlu0 %5097
      %5099 = vrot.lane.b32.xlu0 %v5012, 104
      %v5100 = vpop.permute.xlu0 %5099
      %5101 = vrot.lane.b32.xlu0 %v5013, 104
      %v5102 = vpop.permute.xlu0 %5101
      %5103 = vrot.lane.b32.xlu0 %v5014, 104
      %v5104 = vpop.permute.xlu0 %5103
      %5105 = vrot.lane.b32.xlu0 %v5015, 104
      %v5106 = vpop.permute.xlu0 %5105
      %5107 = vrot.lane.b32.xlu0 %v5016, 104
      %v5108 = vpop.permute.xlu0 %5107
      %5109 = vrot.lane.b32.xlu0 %v5017, 104
      %v5110 = vpop.permute.xlu0 %5109
      %5111 = vrot.lane.b32.xlu0 %v5018, 104
      %v5112 = vpop.permute.xlu0 %5111
      %5113 = vrot.lane.b32.xlu0 %v5019, 104
      %v5114 = vpop.permute.xlu0 %5113
      %5115 = vrot.lane.b32.xlu0 %v5020, 104
      %v5116 = vpop.permute.xlu0 %5115
      %v5149 = vsel %vm1389, %v5054, 0.0
      %5150 = vadd.xlane.f32.xlu0 %v5149
      %v5151 = vpop.xlane.xlu0 %5150
      %v5152 = vsel %vm1389, %v5056, 0.0
      %5153 = vadd.xlane.f32.xlu0 %v5152
      %v5154 = vpop.xlane.xlu0 %5153
      %v5155 = vsel %vm1389, %v5058, 0.0
      %5156 = vadd.xlane.f32.xlu0 %v5155
      %v5157 = vpop.xlane.xlu0 %5156
      %v5158 = vsel %vm1389, %v5060, 0.0
      %5159 = vadd.xlane.f32.xlu0 %v5158
      %v5160 = vpop.xlane.xlu0 %5159
      %v5161 = vsel %vm1389, %v5062, 0.0
      %5162 = vadd.xlane.f32.xlu0 %v5161
      %v5163 = vpop.xlane.xlu0 %5162
      %v5164 = vsel %vm1389, %v5064, 0.0
      %5165 = vadd.xlane.f32.xlu0 %v5164
      %v5166 = vpop.xlane.xlu0 %5165
      %v5167 = vsel %vm1389, %v5066, 0.0
      %5168 = vadd.xlane.f32.xlu0 %v5167
      %v5169 = vpop.xlane.xlu0 %5168
      %v5170 = vsel %vm1389, %v5068, 0.0
      %5171 = vadd.xlane.f32.xlu0 %v5170
      %v5172 = vpop.xlane.xlu0 %5171
      %v5173 = vsel %vm1389, %v5070, 0.0
      %5174 = vadd.xlane.f32.xlu0 %v5173
      %v5175 = vpop.xlane.xlu0 %5174
      %v5176 = vsel %vm1389, %v5072, 0.0
      %5177 = vadd.xlane.f32.xlu0 %v5176
      %v5178 = vpop.xlane.xlu0 %5177
      %v5179 = vsel %vm1389, %v5074, 0.0
      %5180 = vadd.xlane.f32.xlu0 %v5179
      %v5181 = vpop.xlane.xlu0 %5180
      %v5182 = vsel %vm1389, %v5076, 0.0
      %5183 = vadd.xlane.f32.xlu0 %v5182
      %v5184 = vpop.xlane.xlu0 %5183
      %v5185 = vsel %vm1389, %v5078, 0.0
      %5186 = vadd.xlane.f32.xlu0 %v5185
      %v5187 = vpop.xlane.xlu0 %5186
      %v5188 = vsel %vm1389, %v5080, 0.0
      %5189 = vadd.xlane.f32.xlu0 %v5188
      %v5190 = vpop.xlane.xlu0 %5189
      %v5191 = vsel %vm1389, %v5082, 0.0
      %5192 = vadd.xlane.f32.xlu0 %v5191
      %v5193 = vpop.xlane.xlu0 %5192
      %v5194 = vsel %vm1389, %v5084, 0.0
      %5195 = vadd.xlane.f32.xlu0 %v5194
      %v5196 = vpop.xlane.xlu0 %5195
      %v5197 = vsel %vm1389, %v5086, 0.0
      %5198 = vadd.xlane.f32.xlu0 %v5197
      %v5199 = vpop.xlane.xlu0 %5198
      %v5200 = vsel %vm1389, %v5088, 0.0
      %5201 = vadd.xlane.f32.xlu0 %v5200
      %v5202 = vpop.xlane.xlu0 %5201
      %v5203 = vsel %vm1389, %v5090, 0.0
      %5204 = vadd.xlane.f32.xlu0 %v5203
      %v5205 = vpop.xlane.xlu0 %5204
      %v5206 = vsel %vm1389, %v5092, 0.0
      %5207 = vadd.xlane.f32.xlu0 %v5206
      %v5208 = vpop.xlane.xlu0 %5207
      %v5209 = vsel %vm1389, %v5094, 0.0
      %5210 = vadd.xlane.f32.xlu0 %v5209
      %v5211 = vpop.xlane.xlu0 %5210
      %v5212 = vsel %vm1389, %v5096, 0.0
      %5213 = vadd.xlane.f32.xlu0 %v5212
      %v5214 = vpop.xlane.xlu0 %5213
      %v5215 = vsel %vm1389, %v5098, 0.0
      %5216 = vadd.xlane.f32.xlu0 %v5215
      %v5217 = vpop.xlane.xlu0 %5216
      %v5218 = vsel %vm1389, %v5100, 0.0
      %5219 = vadd.xlane.f32.xlu0 %v5218
      %v5220 = vpop.xlane.xlu0 %5219
      %v5221 = vsel %vm1389, %v5102, 0.0
      %5222 = vadd.xlane.f32.xlu0 %v5221
      %v5223 = vpop.xlane.xlu0 %5222
      %v5224 = vsel %vm1389, %v5104, 0.0
      %5225 = vadd.xlane.f32.xlu0 %v5224
      %v5226 = vpop.xlane.xlu0 %5225
      %v5227 = vsel %vm1389, %v5106, 0.0
      %5228 = vadd.xlane.f32.xlu0 %v5227
      %v5229 = vpop.xlane.xlu0 %5228
      %v5230 = vsel %vm1389, %v5108, 0.0
      %5231 = vadd.xlane.f32.xlu0 %v5230
      %v5232 = vpop.xlane.xlu0 %5231
      %v5233 = vsel %vm1389, %v5110, 0.0
      %5234 = vadd.xlane.f32.xlu0 %v5233
      %v5235 = vpop.xlane.xlu0 %5234
      %v5236 = vsel %vm1389, %v5112, 0.0
      %5237 = vadd.xlane.f32.xlu0 %v5236
      %v5238 = vpop.xlane.xlu0 %5237
      %v5239 = vsel %vm1389, %v5114, 0.0
      %5240 = vadd.xlane.f32.xlu0 %v5239
      %v5241 = vpop.xlane.xlu0 %5240
      %v5242 = vsel %vm1389, %v5116, 0.0
      %5243 = vadd.xlane.f32.xlu0 %v5242
      %v5244 = vpop.xlane.xlu0 %5243
      %vm5245 = vcmask 7168
      %v5246 = vsel %vm5245, %v1392, %v2645
      %v5247 = vsel %vm5245, %v1395, %v2648
      %v5248 = vsel %vm5245, %v1398, %v2651
      %v5249 = vsel %vm5245, %v1401, %v2654
      %v5250 = vsel %vm5245, %v1404, %v2657
      %v5251 = vsel %vm5245, %v1407, %v2660
      %v5252 = vsel %vm5245, %v1410, %v2663
      %v5253 = vsel %vm5245, %v1413, %v2666
      %v5254 = vsel %vm5245, %v1416, %v2669
      %v5255 = vsel %vm5245, %v1419, %v2672
      %v5256 = vsel %vm5245, %v1422, %v2675
      %v5257 = vsel %vm5245, %v1425, %v2678
      %v5258 = vsel %vm5245, %v1428, %v2681
      %v5259 = vsel %vm5245, %v1431, %v2684
      %v5260 = vsel %vm5245, %v1434, %v2687
      %v5261 = vsel %vm5245, %v1437, %v2690
      %v5262 = vsel %vm5245, %v1440, %v2693
      %v5263 = vsel %vm5245, %v1443, %v2696
      %v5264 = vsel %vm5245, %v1446, %v2699
      %v5265 = vsel %vm5245, %v1449, %v2702
      %v5266 = vsel %vm5245, %v1452, %v2705
      %v5267 = vsel %vm5245, %v1455, %v2708
      %v5268 = vsel %vm5245, %v1458, %v2711
      %v5269 = vsel %vm5245, %v1461, %v2714
      %v5270 = vsel %vm5245, %v1464, %v2717
      %v5271 = vsel %vm5245, %v1467, %v2720
      %v5272 = vsel %vm5245, %v1470, %v2723
      %v5273 = vsel %vm5245, %v1473, %v2726
      %v5274 = vsel %vm5245, %v1476, %v2729
      %v5275 = vsel %vm5245, %v1479, %v2732
      %v5276 = vsel %vm5245, %v1482, %v2735
      %v5277 = vsel %vm5245, %v1485, %v2738
      %vm5278 = vcmask 15360
      %v5279 = vsel %vm5278, %v5246, %v3898
      %v5280 = vsel %vm5278, %v5247, %v3901
      %v5281 = vsel %vm5278, %v5248, %v3904
      %v5282 = vsel %vm5278, %v5249, %v3907
      %v5283 = vsel %vm5278, %v5250, %v3910
      %v5284 = vsel %vm5278, %v5251, %v3913
      %v5285 = vsel %vm5278, %v5252, %v3916
      %v5286 = vsel %vm5278, %v5253, %v3919
      %v5287 = vsel %vm5278, %v5254, %v3922
      %v5288 = vsel %vm5278, %v5255, %v3925
      %v5289 = vsel %vm5278, %v5256, %v3928
      %v5290 = vsel %vm5278, %v5257, %v3931
      %v5291 = vsel %vm5278, %v5258, %v3934
      %v5292 = vsel %vm5278, %v5259, %v3937
      %v5293 = vsel %vm5278, %v5260, %v3940
      %v5294 = vsel %vm5278, %v5261, %v3943
      %v5295 = vsel %vm5278, %v5262, %v3946
      %v5296 = vsel %vm5278, %v5263, %v3949
      %v5297 = vsel %vm5278, %v5264, %v3952
      %v5298 = vsel %vm5278, %v5265, %v3955
      %v5299 = vsel %vm5278, %v5266, %v3958
      %v5300 = vsel %vm5278, %v5267, %v3961
      %v5301 = vsel %vm5278, %v5268, %v3964
      %v5302 = vsel %vm5278, %v5269, %v3967
      %v5303 = vsel %vm5278, %v5270, %v3970
      %v5304 = vsel %vm5278, %v5271, %v3973
      %v5305 = vsel %vm5278, %v5272, %v3976
      %v5306 = vsel %vm5278, %v5273, %v3979
      %v5307 = vsel %vm5278, %v5274, %v3982
      %v5308 = vsel %vm5278, %v5275, %v3985
      %v5309 = vsel %vm5278, %v5276, %v3988
      %v5310 = vsel %vm5278, %v5277, %v3991
      %vm5311 = vcmask 23552
      %v5312 = vsel %vm5311, %v5279, %v5151
      %v5313 = vsel %vm5311, %v5280, %v5154
      %v5314 = vsel %vm5311, %v5281, %v5157
      %v5315 = vsel %vm5311, %v5282, %v5160
      %v5316 = vsel %vm5311, %v5283, %v5163
      %v5317 = vsel %vm5311, %v5284, %v5166
      %v5318 = vsel %vm5311, %v5285, %v5169
      %v5319 = vsel %vm5311, %v5286, %v5172
      %v5320 = vsel %vm5311, %v5287, %v5175
      %v5321 = vsel %vm5311, %v5288, %v5178
      %v5322 = vsel %vm5311, %v5289, %v5181
      %v5323 = vsel %vm5311, %v5290, %v5184
      %v5324 = vsel %vm5311, %v5291, %v5187
      %v5325 = vsel %vm5311, %v5292, %v5190
      %v5326 = vsel %vm5311, %v5293, %v5193
      %v5327 = vsel %vm5311, %v5294, %v5196
      %v5328 = vsel %vm5311, %v5295, %v5199
      %v5329 = vsel %vm5311, %v5296, %v5202
      %v5330 = vsel %vm5311, %v5297, %v5205
      %v5331 = vsel %vm5311, %v5298, %v5208
      %v5332 = vsel %vm5311, %v5299, %v5211
      %v5333 = vsel %vm5311, %v5300, %v5214
      %v5334 = vsel %vm5311, %v5301, %v5217
      %v5335 = vsel %vm5311, %v5302, %v5220
      %v5336 = vsel %vm5311, %v5303, %v5223
      %v5337 = vsel %vm5311, %v5304, %v5226
      %v5338 = vsel %vm5311, %v5305, %v5229
      %v5339 = vsel %vm5311, %v5306, %v5232
      %v5340 = vsel %vm5311, %v5307, %v5235
      %v5341 = vsel %vm5311, %v5308, %v5238
      %v5342 = vsel %vm5311, %v5309, %v5241
      %v5343 = vsel %vm5311, %v5310, %v5244
      %v5344 = vmax.f32 %v5312, %v5320
      %v5345 = vmax.f32 %v5313, %v5321
      %v5346 = vmax.f32 %v5314, %v5322
      %v5347 = vmax.f32 %v5315, %v5323
      %v5348 = vmax.f32 %v5316, %v5324
      %v5349 = vmax.f32 %v5317, %v5325
      %v5350 = vmax.f32 %v5318, %v5326
      %v5351 = vmax.f32 %v5319, %v5327
      %v5352 = vmax.f32 %v5344, %v5328
      %v5353 = vmax.f32 %v5345, %v5329
      %v5354 = vmax.f32 %v5346, %v5330
      %v5355 = vmax.f32 %v5347, %v5331
      %v5356 = vmax.f32 %v5348, %v5332
      %v5357 = vmax.f32 %v5349, %v5333
      %v5358 = vmax.f32 %v5350, %v5334
      %v5359 = vmax.f32 %v5351, %v5335
      %v5360 = vmax.f32 %v5352, %v5336
      %v5361 = vmax.f32 %v5353, %v5337
      %v5362 = vmax.f32 %v5354, %v5338
      %v5363 = vmax.f32 %v5355, %v5339
      %v5364 = vmax.f32 %v5356, %v5340
      %v5365 = vmax.f32 %v5357, %v5341
      %v5366 = vmax.f32 %v5358, %v5342
      %v5367 = vmax.f32 %v5359, %v5343
      %v5368 = vsub.f32 %v5312, %v5360
      %v5369 = vsub.f32 %v5313, %v5361
      %v5370 = vsub.f32 %v5314, %v5362
      %v5371 = vsub.f32 %v5315, %v5363
      %v5372 = vsub.f32 %v5316, %v5364
      %v5373 = vsub.f32 %v5317, %v5365
      %v5374 = vsub.f32 %v5318, %v5366
      %v5375 = vsub.f32 %v5319, %v5367
      %v5376 = vsub.f32 %v5320, %v5360
      %v5377 = vsub.f32 %v5321, %v5361
      %v5378 = vsub.f32 %v5322, %v5362
      %v5379 = vsub.f32 %v5323, %v5363
      %v5380 = vsub.f32 %v5324, %v5364
      %v5381 = vsub.f32 %v5325, %v5365
      %v5382 = vsub.f32 %v5326, %v5366
      %v5383 = vsub.f32 %v5327, %v5367
      %v5384 = vsub.f32 %v5328, %v5360
      %v5385 = vsub.f32 %v5329, %v5361
      %v5386 = vsub.f32 %v5330, %v5362
      %v5387 = vsub.f32 %v5331, %v5363
      %v5388 = vsub.f32 %v5332, %v5364
      %v5389 = vsub.f32 %v5333, %v5365
      %v5390 = vsub.f32 %v5334, %v5366
      %v5391 = vsub.f32 %v5335, %v5367
      %v5392 = vsub.f32 %v5336, %v5360
      %v5393 = vsub.f32 %v5337, %v5361
      %v5394 = vsub.f32 %v5338, %v5362
      %v5395 = vsub.f32 %v5339, %v5363
      %v5396 = vsub.f32 %v5340, %v5364
      %v5397 = vsub.f32 %v5341, %v5365
      %v5398 = vsub.f32 %v5342, %v5366
      %v5399 = vsub.f32 %v5343, %v5367
      %v5400 = vmul.f32 %v5368, 1.442695
      %v5401 = vpow.pop %v5400
      %v5402 = vmul.f32 %v5369, 1.442695
      %v5403 = vpow.pop %v5402
      %v5404 = vmul.f32 %v5370, 1.442695
      %v5405 = vpow.pop %v5404
      %v5406 = vmul.f32 %v5371, 1.442695
      %v5407 = vpow.pop %v5406
      %v5408 = vmul.f32 %v5372, 1.442695
      %v5409 = vpow.pop %v5408
      %v5410 = vmul.f32 %v5373, 1.442695
      %v5411 = vpow.pop %v5410
      %v5412 = vmul.f32 %v5374, 1.442695
      %v5413 = vpow.pop %v5412
      %v5414 = vmul.f32 %v5375, 1.442695
      %v5415 = vpow.pop %v5414
      %v5416 = vmul.f32 %v5376, 1.442695
      %v5417 = vpow.pop %v5416
      %v5418 = vmul.f32 %v5377, 1.442695
      %v5419 = vpow.pop %v5418
      %v5420 = vmul.f32 %v5378, 1.442695
      %v5421 = vpow.pop %v5420
      %v5422 = vmul.f32 %v5379, 1.442695
      %v5423 = vpow.pop %v5422
      %v5424 = vmul.f32 %v5380, 1.442695
      %v5425 = vpow.pop %v5424
      %v5426 = vmul.f32 %v5381, 1.442695
      %v5427 = vpow.pop %v5426
      %v5428 = vmul.f32 %v5382, 1.442695
      %v5429 = vpow.pop %v5428
      %v5430 = vmul.f32 %v5383, 1.442695
      %v5431 = vpow.pop %v5430
      %v5432 = vmul.f32 %v5384, 1.442695
      %v5433 = vpow.pop %v5432
      %v5434 = vmul.f32 %v5385, 1.442695
      %v5435 = vpow.pop %v5434
      %v5436 = vmul.f32 %v5386, 1.442695
      %v5437 = vpow.pop %v5436
      %v5438 = vmul.f32 %v5387, 1.442695
      %v5439 = vpow.pop %v5438
      %v5440 = vmul.f32 %v5388, 1.442695
      %v5441 = vpow.pop %v5440
      %v5442 = vmul.f32 %v5389, 1.442695
      %v5443 = vpow.pop %v5442
      %v5444 = vmul.f32 %v5390, 1.442695
      %v5445 = vpow.pop %v5444
      %v5446 = vmul.f32 %v5391, 1.442695
      %v5447 = vpow.pop %v5446
      %v5448 = vmul.f32 %v5392, 1.442695
      %v5449 = vpow.pop %v5448
      %v5450 = vmul.f32 %v5393, 1.442695
      %v5451 = vpow.pop %v5450
      %v5452 = vmul.f32 %v5394, 1.442695
      %v5453 = vpow.pop %v5452
      %v5454 = vmul.f32 %v5395, 1.442695
      %v5455 = vpow.pop %v5454
      %v5456 = vmul.f32 %v5396, 1.442695
      %v5457 = vpow.pop %v5456
      %v5458 = vmul.f32 %v5397, 1.442695
      %v5459 = vpow.pop %v5458
      %v5460 = vmul.f32 %v5398, 1.442695
      %v5461 = vpow.pop %v5460
      %v5462 = vmul.f32 %v5399, 1.442695
      %v5463 = vpow.pop %v5462
      %v5464 = vadd.f32 %v5401, %v5417
      %v5465 = vadd.f32 %v5403, %v5419
      %v5466 = vadd.f32 %v5405, %v5421
      %v5467 = vadd.f32 %v5407, %v5423
      %v5468 = vadd.f32 %v5409, %v5425
      %v5469 = vadd.f32 %v5411, %v5427
      %v5470 = vadd.f32 %v5413, %v5429
      %v5471 = vadd.f32 %v5415, %v5431
      %v5472 = vadd.f32 %v5464, %v5433
      %v5473 = vadd.f32 %v5465, %v5435
      %v5474 = vadd.f32 %v5466, %v5437
      %v5475 = vadd.f32 %v5467, %v5439
      %v5476 = vadd.f32 %v5468, %v5441
      %v5477 = vadd.f32 %v5469, %v5443
      %v5478 = vadd.f32 %v5470, %v5445
      %v5479 = vadd.f32 %v5471, %v5447
      %v5480 = vadd.f32 %v5472, %v5449
      %v5481 = vadd.f32 %v5473, %v5451
      %v5482 = vadd.f32 %v5474, %v5453
      %v5483 = vadd.f32 %v5475, %v5455
      %v5484 = vadd.f32 %v5476, %v5457
      %v5485 = vadd.f32 %v5477, %v5459
      %v5486 = vadd.f32 %v5478, %v5461
      %v5487 = vadd.f32 %v5479, %v5463
      %v5488 = vrcp.pop %v5480
      %v5489 = vrcp.pop %v5481
      %v5490 = vrcp.pop %v5482
      %v5491 = vrcp.pop %v5483
      %v5492 = vrcp.pop %v5484
      %v5493 = vrcp.pop %v5485
      %v5494 = vrcp.pop %v5486
      %v5495 = vrcp.pop %v5487
      %v5496 = vmul.f32 %v5401, %v5488
      %v5497 = vmul.f32 %v5403, %v5489
      %v5498 = vmul.f32 %v5405, %v5490
      %v5499 = vmul.f32 %v5407, %v5491
      %v5500 = vmul.f32 %v5409, %v5492
      %v5501 = vmul.f32 %v5411, %v5493
      %v5502 = vmul.f32 %v5413, %v5494
      %v5503 = vmul.f32 %v5415, %v5495
      %v5504 = vmul.f32 %v5417, %v5488
      %v5505 = vmul.f32 %v5419, %v5489
      %v5506 = vmul.f32 %v5421, %v5490
      %v5507 = vmul.f32 %v5423, %v5491
      %v5508 = vmul.f32 %v5425, %v5492
      %v5509 = vmul.f32 %v5427, %v5493
      %v5510 = vmul.f32 %v5429, %v5494
      %v5511 = vmul.f32 %v5431, %v5495
      %v5512 = vmul.f32 %v5433, %v5488
      %v5513 = vmul.f32 %v5435, %v5489
      %v5514 = vmul.f32 %v5437, %v5490
      %v5515 = vmul.f32 %v5439, %v5491
      %v5516 = vmul.f32 %v5441, %v5492
      %v5517 = vmul.f32 %v5443, %v5493
      %v5518 = vmul.f32 %v5445, %v5494
      %v5519 = vmul.f32 %v5447, %v5495
      %v5520 = vmul.f32 %v5449, %v5488
      %v5521 = vmul.f32 %v5451, %v5489
      %v5522 = vmul.f32 %v5453, %v5490
      %v5523 = vmul.f32 %v5455, %v5491
      %v5524 = vmul.f32 %v5457, %v5492
      %v5525 = vmul.f32 %v5459, %v5493
      %v5526 = vmul.f32 %v5461, %v5494
      %v5527 = vmul.f32 %v5463, %v5495
      %5529 = vset.pattern.permute.xlu0 0
      %5530 = vperm.xlu0 %5529, %v5496
      %v5531 = vpop.permute.xlu0 %5530
      %5534 = vset.pattern.permute.xlu0 0
      %5535 = vperm.xlu0 %5534, %v5497
      %v5536 = vpop.permute.xlu0 %5535
      %5539 = vset.pattern.permute.xlu0 0
      %5540 = vperm.xlu0 %5539, %v5498
      %v5541 = vpop.permute.xlu0 %5540
      %5544 = vset.pattern.permute.xlu0 0
      %5545 = vperm.xlu0 %5544, %v5499
      %v5546 = vpop.permute.xlu0 %5545
      %5549 = vset.pattern.permute.xlu0 0
      %5550 = vperm.xlu0 %5549, %v5500
      %v5551 = vpop.permute.xlu0 %5550
      %5554 = vset.pattern.permute.xlu0 0
      %5555 = vperm.xlu0 %5554, %v5501
      %v5556 = vpop.permute.xlu0 %5555
      %5559 = vset.pattern.permute.xlu0 0
      %5560 = vperm.xlu0 %5559, %v5502
      %v5561 = vpop.permute.xlu0 %5560
      %5564 = vset.pattern.permute.xlu0 0
      %5565 = vperm.xlu0 %5564, %v5503
      %v5566 = vpop.permute.xlu0 %5565
      %5569 = vset.pattern.permute.xlu0 0
      %5570 = vperm.xlu0 %5569, %v5504
      %v5571 = vpop.permute.xlu0 %5570
      %5574 = vset.pattern.permute.xlu0 0
      %5575 = vperm.xlu0 %5574, %v5505
      %v5576 = vpop.permute.xlu0 %5575
      %5579 = vset.pattern.permute.xlu0 0
      %5580 = vperm.xlu0 %5579, %v5506
      %v5581 = vpop.permute.xlu0 %5580
      %5584 = vset.pattern.permute.xlu0 0
      %5585 = vperm.xlu0 %5584, %v5507
      %v5586 = vpop.permute.xlu0 %5585
      %5589 = vset.pattern.permute.xlu0 0
      %5590 = vperm.xlu0 %5589, %v5508
      %v5591 = vpop.permute.xlu0 %5590
      %5594 = vset.pattern.permute.xlu0 0
      %5595 = vperm.xlu0 %5594, %v5509
      %v5596 = vpop.permute.xlu0 %5595
      %5599 = vset.pattern.permute.xlu0 0
      %5600 = vperm.xlu0 %5599, %v5510
      %v5601 = vpop.permute.xlu0 %5600
      %5604 = vset.pattern.permute.xlu0 0
      %5605 = vperm.xlu0 %5604, %v5511
      %v5606 = vpop.permute.xlu0 %5605
      %5609 = vset.pattern.permute.xlu0 0
      %5610 = vperm.xlu0 %5609, %v5512
      %v5611 = vpop.permute.xlu0 %5610
      %5614 = vset.pattern.permute.xlu0 0
      %5615 = vperm.xlu0 %5614, %v5513
      %v5616 = vpop.permute.xlu0 %5615
      %5619 = vset.pattern.permute.xlu0 0
      %5620 = vperm.xlu0 %5619, %v5514
      %v5621 = vpop.permute.xlu0 %5620
      %5624 = vset.pattern.permute.xlu0 0
      %5625 = vperm.xlu0 %5624, %v5515
      %v5626 = vpop.permute.xlu0 %5625
      %5629 = vset.pattern.permute.xlu0 0
      %5630 = vperm.xlu0 %5629, %v5516
      %v5631 = vpop.permute.xlu0 %5630
      %5634 = vset.pattern.permute.xlu0 0
      %5635 = vperm.xlu0 %5634, %v5517
      %v5636 = vpop.permute.xlu0 %5635
      %5639 = vset.pattern.permute.xlu0 0
      %5640 = vperm.xlu0 %5639, %v5518
      %v5641 = vpop.permute.xlu0 %5640
      %5644 = vset.pattern.permute.xlu0 0
      %5645 = vperm.xlu0 %5644, %v5519
      %v5646 = vpop.permute.xlu0 %5645
      %5649 = vset.pattern.permute.xlu0 0
      %5650 = vperm.xlu0 %5649, %v5520
      %v5651 = vpop.permute.xlu0 %5650
      %5654 = vset.pattern.permute.xlu0 0
      %5655 = vperm.xlu0 %5654, %v5521
      %v5656 = vpop.permute.xlu0 %5655
      %5659 = vset.pattern.permute.xlu0 0
      %5660 = vperm.xlu0 %5659, %v5522
      %v5661 = vpop.permute.xlu0 %5660
      %5664 = vset.pattern.permute.xlu0 0
      %5665 = vperm.xlu0 %5664, %v5523
      %v5666 = vpop.permute.xlu0 %5665
      %5669 = vset.pattern.permute.xlu0 0
      %5670 = vperm.xlu0 %5669, %v5524
      %v5671 = vpop.permute.xlu0 %5670
      %5674 = vset.pattern.permute.xlu0 0
      %5675 = vperm.xlu0 %5674, %v5525
      %v5676 = vpop.permute.xlu0 %5675
      %5679 = vset.pattern.permute.xlu0 0
      %5680 = vperm.xlu0 %5679, %v5526
      %v5681 = vpop.permute.xlu0 %5680
      %5684 = vset.pattern.permute.xlu0 0
      %5685 = vperm.xlu0 %5684, %v5527
      %v5686 = vpop.permute.xlu0 %5685
      %v5688 = vmul.f32 %v5531, %v1278
      %v5689 = vmul.f32 %v5536, %v1280
      %v5690 = vmul.f32 %v5541, %v1283
      %v5691 = vmul.f32 %v5546, %v1285
      %v5692 = vmul.f32 %v5551, %v1288
      %v5693 = vmul.f32 %v5556, %v1290
      %v5694 = vmul.f32 %v5561, %v1293
      %v5695 = vmul.f32 %v5566, %v1295
      %v5696 = vmul.f32 %v5571, %v1298
      %v5697 = vmul.f32 %v5576, %v1300
      %v5698 = vmul.f32 %v5581, %v1303
      %v5699 = vmul.f32 %v5586, %v1305
      %v5700 = vmul.f32 %v5591, %v1308
      %v5701 = vmul.f32 %v5596, %v1310
      %v5702 = vmul.f32 %v5601, %v1313
      %v5703 = vmul.f32 %v5606, %v1315
      %v5704 = vmul.f32 %v5611, %v1318
      %v5705 = vmul.f32 %v5616, %v1320
      %v5706 = vmul.f32 %v5621, %v1323
      %v5707 = vmul.f32 %v5626, %v1325
      %v5708 = vmul.f32 %v5631, %v1328
      %v5709 = vmul.f32 %v5636, %v1330
      %v5710 = vmul.f32 %v5641, %v1333
      %v5711 = vmul.f32 %v5646, %v1335
      %v5712 = vmul.f32 %v5651, %v1338
      %v5713 = vmul.f32 %v5656, %v1340
      %v5714 = vmul.f32 %v5661, %v1343
      %v5715 = vmul.f32 %v5666, %v1345
      %v5716 = vmul.f32 %v5671, %v1348
      %v5717 = vmul.f32 %v5676, %v1350
      %v5718 = vmul.f32 %v5681, %v1353
      %v5719 = vmul.f32 %v5686, %v1355
      %v5720 = vadd.f32 %v5688, %v5696
      %v5721 = vadd.f32 %v5689, %v5697
      %v5722 = vadd.f32 %v5690, %v5698
      %v5723 = vadd.f32 %v5691, %v5699
      %v5724 = vadd.f32 %v5692, %v5700
      %v5725 = vadd.f32 %v5693, %v5701
      %v5726 = vadd.f32 %v5694, %v5702
      %v5727 = vadd.f32 %v5695, %v5703
      %v5728 = vadd.f32 %v5720, %v5704
      %v5729 = vadd.f32 %v5721, %v5705
      %v5730 = vadd.f32 %v5722, %v5706
      %v5731 = vadd.f32 %v5723, %v5707
      %v5732 = vadd.f32 %v5724, %v5708
      %v5733 = vadd.f32 %v5725, %v5709
      %v5734 = vadd.f32 %v5726, %v5710
      %v5735 = vadd.f32 %v5727, %v5711
      %v5736 = vadd.f32 %v5728, %v5712
      %v5737 = vadd.f32 %v5729, %v5713
      %v5738 = vadd.f32 %v5730, %v5714
      %v5739 = vadd.f32 %v5731, %v5715
      %v5740 = vadd.f32 %v5732, %v5716
      %v5741 = vadd.f32 %v5733, %v5717
      %v5742 = vadd.f32 %v5734, %v5718
      %v5743 = vadd.f32 %v5735, %v5719
      %5752 = vrot.lane.b32.xlu0 %v5736, 120
      %v5753 = vpop.permute.xlu0 %5752
      %5754 = vrot.lane.b32.xlu0 %v5737, 120
      %v5755 = vpop.permute.xlu0 %5754
      %5756 = vrot.lane.b32.xlu0 %v5738, 120
      %v5757 = vpop.permute.xlu0 %5756
      %5758 = vrot.lane.b32.xlu0 %v5739, 120
      %v5759 = vpop.permute.xlu0 %5758
      %5760 = vrot.lane.b32.xlu0 %v5740, 120
      %v5761 = vpop.permute.xlu0 %5760
      %5762 = vrot.lane.b32.xlu0 %v5741, 120
      %v5763 = vpop.permute.xlu0 %5762
      %5764 = vrot.lane.b32.xlu0 %v5742, 120
      %v5765 = vpop.permute.xlu0 %5764
      %5766 = vrot.lane.b32.xlu0 %v5743, 120
      %v5767 = vpop.permute.xlu0 %5766
      %5776 = vst.msk [vmem:[#allocation3] sm:$0xff] %vm1389, %v5753
      %5777 = vst.msk [vmem:[#allocation3 + $0x8] sm:$0xff] %vm1389, %v5755
      %5778 = vst.msk [vmem:[#allocation3 + $0x10] sm:$0xff] %vm1389, %v5757
      %5779 = vst.msk [vmem:[#allocation3 + $0x18] sm:$0xff] %vm1389, %v5759
      %5780 = vst.msk [vmem:[#allocation3 + $0x20] sm:$0xff] %vm1389, %v5761
      %5781 = vst.msk [vmem:[#allocation3 + $0x28] sm:$0xff] %vm1389, %v5763
      %5782 = vst.msk [vmem:[#allocation3 + $0x30] sm:$0xff] %vm1389, %v5765
      %5783 = vst.msk [vmem:[#allocation3 + $0x38] sm:$0xff] %vm1389, %v5767
      %5784 = vset.pattern.permute.xlu0 1
      %5785 = vperm.xlu0 %5784, %v5496
      %v5786 = vpop.permute.xlu0 %5785
      %5788 = vset.pattern.permute.xlu0 1
      %5789 = vperm.xlu0 %5788, %v5497
      %v5790 = vpop.permute.xlu0 %5789
      %5792 = vset.pattern.permute.xlu0 1
      %5793 = vperm.xlu0 %5792, %v5498
      %v5794 = vpop.permute.xlu0 %5793
      %5796 = vset.pattern.permute.xlu0 1
      %5797 = vperm.xlu0 %5796, %v5499
      %v5798 = vpop.permute.xlu0 %5797
      %5800 = vset.pattern.permute.xlu0 1
      %5801 = vperm.xlu0 %5800, %v5500
      %v5802 = vpop.permute.xlu0 %5801
      %5804 = vset.pattern.permute.xlu0 1
      %5805 = vperm.xlu0 %5804, %v5501
      %v5806 = vpop.permute.xlu0 %5805
      %5808 = vset.pattern.permute.xlu0 1
      %5809 = vperm.xlu0 %5808, %v5502
      %v5810 = vpop.permute.xlu0 %5809
      %5812 = vset.pattern.permute.xlu0 1
      %5813 = vperm.xlu0 %5812, %v5503
      %v5814 = vpop.permute.xlu0 %5813
      %5816 = vset.pattern.permute.xlu0 1
      %5817 = vperm.xlu0 %5816, %v5504
      %v5818 = vpop.permute.xlu0 %5817
      %5820 = vset.pattern.permute.xlu0 1
      %5821 = vperm.xlu0 %5820, %v5505
      %v5822 = vpop.permute.xlu0 %5821
      %5824 = vset.pattern.permute.xlu0 1
      %5825 = vperm.xlu0 %5824, %v5506
      %v5826 = vpop.permute.xlu0 %5825
      %5828 = vset.pattern.permute.xlu0 1
      %5829 = vperm.xlu0 %5828, %v5507
      %v5830 = vpop.permute.xlu0 %5829
      %5832 = vset.pattern.permute.xlu0 1
      %5833 = vperm.xlu0 %5832, %v5508
      %v5834 = vpop.permute.xlu0 %5833
      %5836 = vset.pattern.permute.xlu0 1
      %5837 = vperm.xlu0 %5836, %v5509
      %v5838 = vpop.permute.xlu0 %5837
      %5840 = vset.pattern.permute.xlu0 1
      %5841 = vperm.xlu0 %5840, %v5510
      %v5842 = vpop.permute.xlu0 %5841
      %5844 = vset.pattern.permute.xlu0 1
      %5845 = vperm.xlu0 %5844, %v5511
      %v5846 = vpop.permute.xlu0 %5845
      %5848 = vset.pattern.permute.xlu0 1
      %5849 = vperm.xlu0 %5848, %v5512
      %v5850 = vpop.permute.xlu0 %5849
      %5852 = vset.pattern.permute.xlu0 1
      %5853 = vperm.xlu0 %5852, %v5513
      %v5854 = vpop.permute.xlu0 %5853
      %5856 = vset.pattern.permute.xlu0 1
      %5857 = vperm.xlu0 %5856, %v5514
      %v5858 = vpop.permute.xlu0 %5857
      %5860 = vset.pattern.permute.xlu0 1
      %5861 = vperm.xlu0 %5860, %v5515
      %v5862 = vpop.permute.xlu0 %5861
      %5864 = vset.pattern.permute.xlu0 1
      %5865 = vperm.xlu0 %5864, %v5516
      %v5866 = vpop.permute.xlu0 %5865
      %5868 = vset.pattern.permute.xlu0 1
      %5869 = vperm.xlu0 %5868, %v5517
      %v5870 = vpop.permute.xlu0 %5869
      %5872 = vset.pattern.permute.xlu0 1
      %5873 = vperm.xlu0 %5872, %v5518
      %v5874 = vpop.permute.xlu0 %5873
      %5876 = vset.pattern.permute.xlu0 1
      %5877 = vperm.xlu0 %5876, %v5519
      %v5878 = vpop.permute.xlu0 %5877
      %5880 = vset.pattern.permute.xlu0 1
      %5881 = vperm.xlu0 %5880, %v5520
      %v5882 = vpop.permute.xlu0 %5881
      %5884 = vset.pattern.permute.xlu0 1
      %5885 = vperm.xlu0 %5884, %v5521
      %v5886 = vpop.permute.xlu0 %5885
      %5888 = vset.pattern.permute.xlu0 1
      %5889 = vperm.xlu0 %5888, %v5522
      %v5890 = vpop.permute.xlu0 %5889
      %5892 = vset.pattern.permute.xlu0 1
      %5893 = vperm.xlu0 %5892, %v5523
      %v5894 = vpop.permute.xlu0 %5893
      %5896 = vset.pattern.permute.xlu0 1
      %5897 = vperm.xlu0 %5896, %v5524
      %v5898 = vpop.permute.xlu0 %5897
      %5900 = vset.pattern.permute.xlu0 1
      %5901 = vperm.xlu0 %5900, %v5525
      %v5902 = vpop.permute.xlu0 %5901
      %5904 = vset.pattern.permute.xlu0 1
      %5905 = vperm.xlu0 %5904, %v5526
      %v5906 = vpop.permute.xlu0 %5905
      %5908 = vset.pattern.permute.xlu0 1
      %5909 = vperm.xlu0 %5908, %v5527
      %v5910 = vpop.permute.xlu0 %5909
      %v5912 = vmul.f32 %v5786, %v2276
      %v5913 = vmul.f32 %v5790, %v2278
      %v5914 = vmul.f32 %v5794, %v2281
      %v5915 = vmul.f32 %v5798, %v2283
      %v5916 = vmul.f32 %v5802, %v2286
      %v5917 = vmul.f32 %v5806, %v2288
      %v5918 = vmul.f32 %v5810, %v2291
      %v5919 = vmul.f32 %v5814, %v2293
      %v5920 = vmul.f32 %v5818, %v2296
      %v5921 = vmul.f32 %v5822, %v2298
      %v5922 = vmul.f32 %v5826, %v2301
      %v5923 = vmul.f32 %v5830, %v2303
      %v5924 = vmul.f32 %v5834, %v2306
      %v5925 = vmul.f32 %v5838, %v2308
      %v5926 = vmul.f32 %v5842, %v2311
      %v5927 = vmul.f32 %v5846, %v2313
      %v5928 = vmul.f32 %v5850, %v2316
      %v5929 = vmul.f32 %v5854, %v2318
      %v5930 = vmul.f32 %v5858, %v2321
      %v5931 = vmul.f32 %v5862, %v2323
      %v5932 = vmul.f32 %v5866, %v2326
      %v5933 = vmul.f32 %v5870, %v2328
      %v5934 = vmul.f32 %v5874, %v2331
      %v5935 = vmul.f32 %v5878, %v2333
      %v5936 = vmul.f32 %v5882, %v2336
      %v5937 = vmul.f32 %v5886, %v2338
      %v5938 = vmul.f32 %v5890, %v2341
      %v5939 = vmul.f32 %v5894, %v2343
      %v5940 = vmul.f32 %v5898, %v2346
      %v5941 = vmul.f32 %v5902, %v2348
      %v5942 = vmul.f32 %v5906, %v2351
      %v5943 = vmul.f32 %v5910, %v2353
      %v5944 = vadd.f32 %v5912, %v5920
      %v5945 = vadd.f32 %v5913, %v5921
      %v5946 = vadd.f32 %v5914, %v5922
      %v5947 = vadd.f32 %v5915, %v5923
      %v5948 = vadd.f32 %v5916, %v5924
      %v5949 = vadd.f32 %v5917, %v5925
      %v5950 = vadd.f32 %v5918, %v5926
      %v5951 = vadd.f32 %v5919, %v5927
      %v5952 = vadd.f32 %v5944, %v5928
      %v5953 = vadd.f32 %v5945, %v5929
      %v5954 = vadd.f32 %v5946, %v5930
      %v5955 = vadd.f32 %v5947, %v5931
      %v5956 = vadd.f32 %v5948, %v5932
      %v5957 = vadd.f32 %v5949, %v5933
      %v5958 = vadd.f32 %v5950, %v5934
      %v5959 = vadd.f32 %v5951, %v5935
      %v5960 = vadd.f32 %v5952, %v5936
      %v5961 = vadd.f32 %v5953, %v5937
      %v5962 = vadd.f32 %v5954, %v5938
      %v5963 = vadd.f32 %v5955, %v5939
      %v5964 = vadd.f32 %v5956, %v5940
      %v5965 = vadd.f32 %v5957, %v5941
      %v5966 = vadd.f32 %v5958, %v5942
      %v5967 = vadd.f32 %v5959, %v5943
      %vm5968 = vcmask 130112
      %5969 = vst.msk [vmem:[#allocation3] sm:$0xff] %vm5968, %v5960
      %5970 = vst.msk [vmem:[#allocation3 + $0x8] sm:$0xff] %vm5968, %v5961
      %5971 = vst.msk [vmem:[#allocation3 + $0x10] sm:$0xff] %vm5968, %v5962
      %5972 = vst.msk [vmem:[#allocation3 + $0x18] sm:$0xff] %vm5968, %v5963
      %5973 = vst.msk [vmem:[#allocation3 + $0x20] sm:$0xff] %vm5968, %v5964
      %5974 = vst.msk [vmem:[#allocation3 + $0x28] sm:$0xff] %vm5968, %v5965
      %5975 = vst.msk [vmem:[#allocation3 + $0x30] sm:$0xff] %vm5968, %v5966
      %5976 = vst.msk [vmem:[#allocation3 + $0x38] sm:$0xff] %vm5968, %v5967
      %5977 = vset.pattern.permute.xlu0 2
      %5978 = vperm.xlu0 %5977, %v5496
      %v5979 = vpop.permute.xlu0 %5978
      %5981 = vset.pattern.permute.xlu0 2
      %5982 = vperm.xlu0 %5981, %v5497
      %v5983 = vpop.permute.xlu0 %5982
      %5985 = vset.pattern.permute.xlu0 2
      %5986 = vperm.xlu0 %5985, %v5498
      %v5987 = vpop.permute.xlu0 %5986
      %5989 = vset.pattern.permute.xlu0 2
      %5990 = vperm.xlu0 %5989, %v5499
      %v5991 = vpop.permute.xlu0 %5990
      %5993 = vset.pattern.permute.xlu0 2
      %5994 = vperm.xlu0 %5993, %v5500
      %v5995 = vpop.permute.xlu0 %5994
      %5997 = vset.pattern.permute.xlu0 2
      %5998 = vperm.xlu0 %5997, %v5501
      %v5999 = vpop.permute.xlu0 %5998
      %6001 = vset.pattern.permute.xlu0 2
      %6002 = vperm.xlu0 %6001, %v5502
      %v6003 = vpop.permute.xlu0 %6002
      %6005 = vset.pattern.permute.xlu0 2
      %6006 = vperm.xlu0 %6005, %v5503
      %v6007 = vpop.permute.xlu0 %6006
      %6009 = vset.pattern.permute.xlu0 2
      %6010 = vperm.xlu0 %6009, %v5504
      %v6011 = vpop.permute.xlu0 %6010
      %6013 = vset.pattern.permute.xlu0 2
      %6014 = vperm.xlu0 %6013, %v5505
      %v6015 = vpop.permute.xlu0 %6014
      %6017 = vset.pattern.permute.xlu0 2
      %6018 = vperm.xlu0 %6017, %v5506
      %v6019 = vpop.permute.xlu0 %6018
      %6021 = vset.pattern.permute.xlu0 2
      %6022 = vperm.xlu0 %6021, %v5507
      %v6023 = vpop.permute.xlu0 %6022
      %6025 = vset.pattern.permute.xlu0 2
      %6026 = vperm.xlu0 %6025, %v5508
      %v6027 = vpop.permute.xlu0 %6026
      %6029 = vset.pattern.permute.xlu0 2
      %6030 = vperm.xlu0 %6029, %v5509
      %v6031 = vpop.permute.xlu0 %6030
      %6033 = vset.pattern.permute.xlu0 2
      %6034 = vperm.xlu0 %6033, %v5510
      %v6035 = vpop.permute.xlu0 %6034
      %6037 = vset.pattern.permute.xlu0 2
      %6038 = vperm.xlu0 %6037, %v5511
      %v6039 = vpop.permute.xlu0 %6038
      %6041 = vset.pattern.permute.xlu0 2
      %6042 = vperm.xlu0 %6041, %v5512
      %v6043 = vpop.permute.xlu0 %6042
      %6045 = vset.pattern.permute.xlu0 2
      %6046 = vperm.xlu0 %6045, %v5513
      %v6047 = vpop.permute.xlu0 %6046
      %6049 = vset.pattern.permute.xlu0 2
      %6050 = vperm.xlu0 %6049, %v5514
      %v6051 = vpop.permute.xlu0 %6050
      %6053 = vset.pattern.permute.xlu0 2
      %6054 = vperm.xlu0 %6053, %v5515
      %v6055 = vpop.permute.xlu0 %6054
      %6057 = vset.pattern.permute.xlu0 2
      %6058 = vperm.xlu0 %6057, %v5516
      %v6059 = vpop.permute.xlu0 %6058
      %6061 = vset.pattern.permute.xlu0 2
      %6062 = vperm.xlu0 %6061, %v5517
      %v6063 = vpop.permute.xlu0 %6062
      %6065 = vset.pattern.permute.xlu0 2
      %6066 = vperm.xlu0 %6065, %v5518
      %v6067 = vpop.permute.xlu0 %6066
      %6069 = vset.pattern.permute.xlu0 2
      %6070 = vperm.xlu0 %6069, %v5519
      %v6071 = vpop.permute.xlu0 %6070
      %6073 = vset.pattern.permute.xlu0 2
      %6074 = vperm.xlu0 %6073, %v5520
      %v6075 = vpop.permute.xlu0 %6074
      %6077 = vset.pattern.permute.xlu0 2
      %6078 = vperm.xlu0 %6077, %v5521
      %v6079 = vpop.permute.xlu0 %6078
      %6081 = vset.pattern.permute.xlu0 2
      %6082 = vperm.xlu0 %6081, %v5522
      %v6083 = vpop.permute.xlu0 %6082
      %6085 = vset.pattern.permute.xlu0 2
      %6086 = vperm.xlu0 %6085, %v5523
      %v6087 = vpop.permute.xlu0 %6086
      %6089 = vset.pattern.permute.xlu0 2
      %6090 = vperm.xlu0 %6089, %v5524
      %v6091 = vpop.permute.xlu0 %6090
      %6093 = vset.pattern.permute.xlu0 2
      %6094 = vperm.xlu0 %6093, %v5525
      %v6095 = vpop.permute.xlu0 %6094
      %6097 = vset.pattern.permute.xlu0 2
      %6098 = vperm.xlu0 %6097, %v5526
      %v6099 = vpop.permute.xlu0 %6098
      %6101 = vset.pattern.permute.xlu0 2
      %6102 = vperm.xlu0 %6101, %v5527
      %v6103 = vpop.permute.xlu0 %6102
      %v6105 = vmul.f32 %v5979, %v3529
      %v6106 = vmul.f32 %v5983, %v3531
      %v6107 = vmul.f32 %v5987, %v3534
      %v6108 = vmul.f32 %v5991, %v3536
      %v6109 = vmul.f32 %v5995, %v3539
      %v6110 = vmul.f32 %v5999, %v3541
      %v6111 = vmul.f32 %v6003, %v3544
      %v6112 = vmul.f32 %v6007, %v3546
      %v6113 = vmul.f32 %v6011, %v3549
      %v6114 = vmul.f32 %v6015, %v3551
      %v6115 = vmul.f32 %v6019, %v3554
      %v6116 = vmul.f32 %v6023, %v3556
      %v6117 = vmul.f32 %v6027, %v3559
      %v6118 = vmul.f32 %v6031, %v3561
      %v6119 = vmul.f32 %v6035, %v3564
      %v6120 = vmul.f32 %v6039, %v3566
      %v6121 = vmul.f32 %v6043, %v3569
      %v6122 = vmul.f32 %v6047, %v3571
      %v6123 = vmul.f32 %v6051, %v3574
      %v6124 = vmul.f32 %v6055, %v3576
      %v6125 = vmul.f32 %v6059, %v3579
      %v6126 = vmul.f32 %v6063, %v3581
      %v6127 = vmul.f32 %v6067, %v3584
      %v6128 = vmul.f32 %v6071, %v3586
      %v6129 = vmul.f32 %v6075, %v3589
      %v6130 = vmul.f32 %v6079, %v3591
      %v6131 = vmul.f32 %v6083, %v3594
      %v6132 = vmul.f32 %v6087, %v3596
      %v6133 = vmul.f32 %v6091, %v3599
      %v6134 = vmul.f32 %v6095, %v3601
      %v6135 = vmul.f32 %v6099, %v3604
      %v6136 = vmul.f32 %v6103, %v3606
      %v6137 = vadd.f32 %v6105, %v6113
      %v6138 = vadd.f32 %v6106, %v6114
      %v6139 = vadd.f32 %v6107, %v6115
      %v6140 = vadd.f32 %v6108, %v6116
      %v6141 = vadd.f32 %v6109, %v6117
      %v6142 = vadd.f32 %v6110, %v6118
      %v6143 = vadd.f32 %v6111, %v6119
      %v6144 = vadd.f32 %v6112, %v6120
      %v6145 = vadd.f32 %v6137, %v6121
      %v6146 = vadd.f32 %v6138, %v6122
      %v6147 = vadd.f32 %v6139, %v6123
      %v6148 = vadd.f32 %v6140, %v6124
      %v6149 = vadd.f32 %v6141, %v6125
      %v6150 = vadd.f32 %v6142, %v6126
      %v6151 = vadd.f32 %v6143, %v6127
      %v6152 = vadd.f32 %v6144, %v6128
      %v6153 = vadd.f32 %v6145, %v6129
      %v6154 = vadd.f32 %v6146, %v6130
      %v6155 = vadd.f32 %v6147, %v6131
      %v6156 = vadd.f32 %v6148, %v6132
      %v6157 = vadd.f32 %v6149, %v6133
      %v6158 = vadd.f32 %v6150, %v6134
      %v6159 = vadd.f32 %v6151, %v6135
      %v6160 = vadd.f32 %v6152, %v6136
      %6169 = vrot.lane.b32.xlu0 %v6153, 8
      %v6170 = vpop.permute.xlu0 %6169
      %6171 = vrot.lane.b32.xlu0 %v6154, 8
      %v6172 = vpop.permute.xlu0 %6171
      %6173 = vrot.lane.b32.xlu0 %v6155, 8
      %v6174 = vpop.permute.xlu0 %6173
      %6175 = vrot.lane.b32.xlu0 %v6156, 8
      %v6176 = vpop.permute.xlu0 %6175
      %6177 = vrot.lane.b32.xlu0 %v6157, 8
      %v6178 = vpop.permute.xlu0 %6177
      %6179 = vrot.lane.b32.xlu0 %v6158, 8
      %v6180 = vpop.permute.xlu0 %6179
      %6181 = vrot.lane.b32.xlu0 %v6159, 8
      %v6182 = vpop.permute.xlu0 %6181
      %6183 = vrot.lane.b32.xlu0 %v6160, 8
      %v6184 = vpop.permute.xlu0 %6183
      %vm6193 = vcmask 195712
      %6194 = vst.msk [vmem:[#allocation3] sm:$0xff] %vm6193, %v6170
      %6195 = vst.msk [vmem:[#allocation3 + $0x8] sm:$0xff] %vm6193, %v6172
      %6196 = vst.msk [vmem:[#allocation3 + $0x10] sm:$0xff] %vm6193, %v6174
      %6197 = vst.msk [vmem:[#allocation3 + $0x18] sm:$0xff] %vm6193, %v6176
      %6198 = vst.msk [vmem:[#allocation3 + $0x20] sm:$0xff] %vm6193, %v6178
      %6199 = vst.msk [vmem:[#allocation3 + $0x28] sm:$0xff] %vm6193, %v6180
      %6200 = vst.msk [vmem:[#allocation3 + $0x30] sm:$0xff] %vm6193, %v6182
      %6201 = vst.msk [vmem:[#allocation3 + $0x38] sm:$0xff] %vm6193, %v6184
      %6202 = vset.pattern.permute.xlu0 3
      %6203 = vperm.xlu0 %6202, %v5496
      %v6204 = vpop.permute.xlu0 %6203
      %6206 = vset.pattern.permute.xlu0 3
      %6207 = vperm.xlu0 %6206, %v5497
      %v6208 = vpop.permute.xlu0 %6207
      %6210 = vset.pattern.permute.xlu0 3
      %6211 = vperm.xlu0 %6210, %v5498
      %v6212 = vpop.permute.xlu0 %6211
      %6214 = vset.pattern.permute.xlu0 3
      %6215 = vperm.xlu0 %6214, %v5499
      %v6216 = vpop.permute.xlu0 %6215
      %6218 = vset.pattern.permute.xlu0 3
      %6219 = vperm.xlu0 %6218, %v5500
      %v6220 = vpop.permute.xlu0 %6219
      %6222 = vset.pattern.permute.xlu0 3
      %6223 = vperm.xlu0 %6222, %v5501
      %v6224 = vpop.permute.xlu0 %6223
      %6226 = vset.pattern.permute.xlu0 3
      %6227 = vperm.xlu0 %6226, %v5502
      %v6228 = vpop.permute.xlu0 %6227
      %6230 = vset.pattern.permute.xlu0 3
      %6231 = vperm.xlu0 %6230, %v5503
      %v6232 = vpop.permute.xlu0 %6231
      %6234 = vset.pattern.permute.xlu0 3
      %6235 = vperm.xlu0 %6234, %v5504
      %v6236 = vpop.permute.xlu0 %6235
      %6238 = vset.pattern.permute.xlu0 3
      %6239 = vperm.xlu0 %6238, %v5505
      %v6240 = vpop.permute.xlu0 %6239
      %6242 = vset.pattern.permute.xlu0 3
      %6243 = vperm.xlu0 %6242, %v5506
      %v6244 = vpop.permute.xlu0 %6243
      %6246 = vset.pattern.permute.xlu0 3
      %6247 = vperm.xlu0 %6246, %v5507
      %v6248 = vpop.permute.xlu0 %6247
      %6250 = vset.pattern.permute.xlu0 3
      %6251 = vperm.xlu0 %6250, %v5508
      %v6252 = vpop.permute.xlu0 %6251
      %6254 = vset.pattern.permute.xlu0 3
      %6255 = vperm.xlu0 %6254, %v5509
      %v6256 = vpop.permute.xlu0 %6255
      %6258 = vset.pattern.permute.xlu0 3
      %6259 = vperm.xlu0 %6258, %v5510
      %v6260 = vpop.permute.xlu0 %6259
      %6262 = vset.pattern.permute.xlu0 3
      %6263 = vperm.xlu0 %6262, %v5511
      %v6264 = vpop.permute.xlu0 %6263
      %6266 = vset.pattern.permute.xlu0 3
      %6267 = vperm.xlu0 %6266, %v5512
      %v6268 = vpop.permute.xlu0 %6267
      %6270 = vset.pattern.permute.xlu0 3
      %6271 = vperm.xlu0 %6270, %v5513
      %v6272 = vpop.permute.xlu0 %6271
      %6274 = vset.pattern.permute.xlu0 3
      %6275 = vperm.xlu0 %6274, %v5514
      %v6276 = vpop.permute.xlu0 %6275
      %6278 = vset.pattern.permute.xlu0 3
      %6279 = vperm.xlu0 %6278, %v5515
      %v6280 = vpop.permute.xlu0 %6279
      %6282 = vset.pattern.permute.xlu0 3
      %6283 = vperm.xlu0 %6282, %v5516
      %v6284 = vpop.permute.xlu0 %6283
      %6286 = vset.pattern.permute.xlu0 3
      %6287 = vperm.xlu0 %6286, %v5517
      %v6288 = vpop.permute.xlu0 %6287
      %6290 = vset.pattern.permute.xlu0 3
      %6291 = vperm.xlu0 %6290, %v5518
      %v6292 = vpop.permute.xlu0 %6291
      %6294 = vset.pattern.permute.xlu0 3
      %6295 = vperm.xlu0 %6294, %v5519
      %v6296 = vpop.permute.xlu0 %6295
      %6298 = vset.pattern.permute.xlu0 3
      %6299 = vperm.xlu0 %6298, %v5520
      %v6300 = vpop.permute.xlu0 %6299
      %6302 = vset.pattern.permute.xlu0 3
      %6303 = vperm.xlu0 %6302, %v5521
      %v6304 = vpop.permute.xlu0 %6303
      %6306 = vset.pattern.permute.xlu0 3
      %6307 = vperm.xlu0 %6306, %v5522
      %v6308 = vpop.permute.xlu0 %6307
      %6310 = vset.pattern.permute.xlu0 3
      %6311 = vperm.xlu0 %6310, %v5523
      %v6312 = vpop.permute.xlu0 %6311
      %6314 = vset.pattern.permute.xlu0 3
      %6315 = vperm.xlu0 %6314, %v5524
      %v6316 = vpop.permute.xlu0 %6315
      %6318 = vset.pattern.permute.xlu0 3
      %6319 = vperm.xlu0 %6318, %v5525
      %v6320 = vpop.permute.xlu0 %6319
      %6322 = vset.pattern.permute.xlu0 3
      %6323 = vperm.xlu0 %6322, %v5526
      %v6324 = vpop.permute.xlu0 %6323
      %6326 = vset.pattern.permute.xlu0 3
      %6327 = vperm.xlu0 %6326, %v5527
      %v6328 = vpop.permute.xlu0 %6327
      %v6330 = vmul.f32 %v6204, %v4782
      %v6331 = vmul.f32 %v6208, %v4784
      %v6332 = vmul.f32 %v6212, %v4787
      %v6333 = vmul.f32 %v6216, %v4789
      %v6334 = vmul.f32 %v6220, %v4792
      %v6335 = vmul.f32 %v6224, %v4794
      %v6336 = vmul.f32 %v6228, %v4797
      %v6337 = vmul.f32 %v6232, %v4799
      %v6338 = vmul.f32 %v6236, %v4802
      %v6339 = vmul.f32 %v6240, %v4804
      %v6340 = vmul.f32 %v6244, %v4807
      %v6341 = vmul.f32 %v6248, %v4809
      %v6342 = vmul.f32 %v6252, %v4812
      %v6343 = vmul.f32 %v6256, %v4814
      %v6344 = vmul.f32 %v6260, %v4817
      %v6345 = vmul.f32 %v6264, %v4819
      %v6346 = vmul.f32 %v6268, %v4822
      %v6347 = vmul.f32 %v6272, %v4824
      %v6348 = vmul.f32 %v6276, %v4827
      %v6349 = vmul.f32 %v6280, %v4829
      %v6350 = vmul.f32 %v6284, %v4832
      %v6351 = vmul.f32 %v6288, %v4834
      %v6352 = vmul.f32 %v6292, %v4837
      %v6353 = vmul.f32 %v6296, %v4839
      %v6354 = vmul.f32 %v6300, %v4842
      %v6355 = vmul.f32 %v6304, %v4844
      %v6356 = vmul.f32 %v6308, %v4847
      %v6357 = vmul.f32 %v6312, %v4849
      %v6358 = vmul.f32 %v6316, %v4852
      %v6359 = vmul.f32 %v6320, %v4854
      %v6360 = vmul.f32 %v6324, %v4857
      %v6361 = vmul.f32 %v6328, %v4859
      %v6362 = vadd.f32 %v6330, %v6338
      %v6363 = vadd.f32 %v6331, %v6339
      %v6364 = vadd.f32 %v6332, %v6340
      %v6365 = vadd.f32 %v6333, %v6341
      %v6366 = vadd.f32 %v6334, %v6342
      %v6367 = vadd.f32 %v6335, %v6343
      %v6368 = vadd.f32 %v6336, %v6344
      %v6369 = vadd.f32 %v6337, %v6345
      %v6370 = vadd.f32 %v6362, %v6346
      %v6371 = vadd.f32 %v6363, %v6347
      %v6372 = vadd.f32 %v6364, %v6348
      %v6373 = vadd.f32 %v6365, %v6349
      %v6374 = vadd.f32 %v6366, %v6350
      %v6375 = vadd.f32 %v6367, %v6351
      %v6376 = vadd.f32 %v6368, %v6352
      %v6377 = vadd.f32 %v6369, %v6353
      %v6378 = vadd.f32 %v6370, %v6354
      %v6379 = vadd.f32 %v6371, %v6355
      %v6380 = vadd.f32 %v6372, %v6356
      %v6381 = vadd.f32 %v6373, %v6357
      %v6382 = vadd.f32 %v6374, %v6358
      %v6383 = vadd.f32 %v6375, %v6359
      %v6384 = vadd.f32 %v6376, %v6360
      %v6385 = vadd.f32 %v6377, %v6361
      %6394 = vrot.lane.b32.xlu0 %v6378, 16
      %v6395 = vpop.permute.xlu0 %6394
      %6396 = vrot.lane.b32.xlu0 %v6379, 16
      %v6397 = vpop.permute.xlu0 %6396
      %6398 = vrot.lane.b32.xlu0 %v6380, 16
      %v6399 = vpop.permute.xlu0 %6398
      %6400 = vrot.lane.b32.xlu0 %v6381, 16
      %v6401 = vpop.permute.xlu0 %6400
      %6402 = vrot.lane.b32.xlu0 %v6382, 16
      %v6403 = vpop.permute.xlu0 %6402
      %6404 = vrot.lane.b32.xlu0 %v6383, 16
      %v6405 = vpop.permute.xlu0 %6404
      %6406 = vrot.lane.b32.xlu0 %v6384, 16
      %v6407 = vpop.permute.xlu0 %6406
      %6408 = vrot.lane.b32.xlu0 %v6385, 16
      %v6409 = vpop.permute.xlu0 %6408
      %vm6418 = vcmask 261312
      %6419 = vst.msk [vmem:[#allocation3] sm:$0xff] %vm6418, %v6395
      %6420 = vst.msk [vmem:[#allocation3 + $0x8] sm:$0xff] %vm6418, %v6397
      %6421 = vst.msk [vmem:[#allocation3 + $0x10] sm:$0xff] %vm6418, %v6399
      %6422 = vst.msk [vmem:[#allocation3 + $0x18] sm:$0xff] %vm6418, %v6401
      %6423 = vst.msk [vmem:[#allocation3 + $0x20] sm:$0xff] %vm6418, %v6403
      %6424 = vst.msk [vmem:[#allocation3 + $0x28] sm:$0xff] %vm6418, %v6405
      %6425 = vst.msk [vmem:[#allocation3 + $0x30] sm:$0xff] %vm6418, %v6407
      %6426 = vst.msk [vmem:[#allocation3 + $0x38] sm:$0xff] %vm6418, %v6409
      %v6427 = vld [vmem:[#allocation3] sm:$0xff]
      %v6428 = vld [vmem:[#allocation3 + $0x8] sm:$0xff]
      %v6429 = vld [vmem:[#allocation3 + $0x10] sm:$0xff]
      %v6430 = vld [vmem:[#allocation3 + $0x18] sm:$0xff]
      %v6431 = vld [vmem:[#allocation3 + $0x20] sm:$0xff]
      %v6432 = vld [vmem:[#allocation3 + $0x28] sm:$0xff]
      %v6433 = vld [vmem:[#allocation3 + $0x30] sm:$0xff]
      %v6434 = vld [vmem:[#allocation3 + $0x38] sm:$0xff]
      %v6435 = vpack.c.bf16 %v6428, %v6427
      %v6436 = vpack.c.bf16 %v6430, %v6429
      %v6437 = vpack.c.bf16 %v6432, %v6431
      %v6438 = vpack.c.bf16 %v6434, %v6433
      %v6439 = vld [vmem:[%s5] sm:$0xf]
      %v6440 = vld [vmem:[%s5 + $0x4] sm:$0xf]
      %v6441 = vld [vmem:[%s5 + $0x8] sm:$0xf]
      %v6442 = vld [vmem:[%s5 + $0xc] sm:$0xf]
      %v6443 = vld [vmem:[%s6] sm:$0x1]
      %v6445 = vperm.slane %v6443, 0
      %v6451 = vunpack.c.l.b16 %v6439
      %v6452 = vunpack.c.l.b16 %v6440
      %v6453 = vunpack.c.l.b16 %v6441
      %v6454 = vunpack.c.l.b16 %v6442
      %v6455 = vpack.c.b16 %v6452, %v6451
      %v6456 = vpack.c.b16 %v6454, %v6453
      %vm6459 = vcmask 261120
      %v6461 = vsel %vm6459, %v6435, 0
      %v6464 = vsel %vm6459, %v6436, 0
      %v6467 = vsel %vm6459, %v6437, 0
      %v6470 = vsel %vm6459, %v6438, 0
      %6472 = vmatpush.bf16.msra.mxu0 0
      %6473 = vmatpush.bf16.msra.mxu0 0
      %6474 = vmatpush.bf16.msra.mxu0 0
      %6475 = vmatpush.bf16.msra.mxu0 0
      %6476 = vmatpush.bf16.msra.mxu0 0
      %6477 = vmatpush.bf16.msra.mxu0 0
      %6478 = vmatpush.bf16.msra.mxu0 %v6456
      %6479 = vmatpush.bf16.msra.mxu0 %v6455
      %6480 = vmatmul.bf16.gmra.mxu0 %v6461
      %v6481 = vpop.f32.mrf.mxu0
      %v6482 = vadd.f32 %v6445, %v6481
      %v6483 = vpop.f32.mrf.mxu0
      %v6484 = vadd.f32 %v6445, %v6483
      %6485 = vmatmul.bf16.gmra.mxu0 %v6464
      %v6486 = vpop.f32.mrf.mxu0
      %v6487 = vadd.f32 %v6445, %v6486
      %v6488 = vpop.f32.mrf.mxu0
      %v6489 = vadd.f32 %v6445, %v6488
      %6490 = vmatmul.bf16.gmra.mxu0 %v6467
      %v6491 = vpop.f32.mrf.mxu0
      %v6492 = vadd.f32 %v6445, %v6491
      %v6493 = vpop.f32.mrf.mxu0
      %v6494 = vadd.f32 %v6445, %v6493
      %6495 = vmatmul.bf16.gmra.mxu0 %v6470
      %v6496 = vpop.f32.mrf.mxu0
      %v6497 = vadd.f32 %v6445, %v6496
      %v6498 = vpop.f32.mrf.mxu0
      %v6499 = vadd.f32 %v6445, %v6498
      %6500 = vdwg.mxu0
      %6501 = vst.msk [vmem:[%s278] sm:$0xff] %vm6459, %v6482
      %6502 = vst.msk [vmem:[%s278 + $0x8] sm:$0xff] %vm6459, %v6484
      %6503 = vst.msk [vmem:[%s278 + $0x10] sm:$0xff] %vm6459, %v6487
      %6504 = vst.msk [vmem:[%s278 + $0x18] sm:$0xff] %vm6459, %v6489
      %6505 = vst.msk [vmem:[%s278 + $0x20] sm:$0xff] %vm6459, %v6492
      %6506 = vst.msk [vmem:[%s278 + $0x28] sm:$0xff] %vm6459, %v6494
      %6507 = vst.msk [vmem:[%s278 + $0x30] sm:$0xff] %vm6459, %v6497
      %6508 = vst.msk [vmem:[%s278 + $0x38] sm:$0xff] %vm6459, %v6499
      %p6509 = scmp.lt.s32.totalorder %s18, 1
      %s6510 = scalar_select %p6509, %s18, 1
      %s6511 = smul.addr %s6510, 8
      %s6512 = smul.addr %s6511, 8
      %s6513 = scalar_lea.vmem %s7, %s6512
      // Predicated region
      $region49: #{sample_attention_forward.1} parent=47 // pred_check
        %p6514 = pneg %p188
      $region50: #{sample_attention_forward.1} parent=47 // pred_check_branch
        %6516 = sbr.rel (%p6514) target = $region52
      $region51: #{sample_attention_forward.1} parent=47 // pred_region
        _
      $region52: #{sample_attention_forward.1} parent=47 // pred_fallthru
        _
    $region48: #{sample_attention_forward.1} parent=5 // pred_fallthru
      _
    %p6517 = scmp.le.s32.totalorder 2, %s13
    // Predicated region
    $region53: #{sample_attention_forward.1} parent=5 // pred_check
      %p6518 = pneg %p6517
    $region54: #{sample_attention_forward.1} parent=5 // pred_check_branch
      %6520 = sbr.rel (%p6518) target = $region56
    $region55: #{sample_attention_forward.1} parent=5 // pred_region
      %s6521 = ssub.s32 %s13, 2
      // Predicated region
      $region57: #{sample_attention_forward.1} parent=55 // pred_check
        %p6522 = pneg %p194
      $region58: #{sample_attention_forward.1} parent=55 // pred_check_branch
        %6524 = sbr.rel (%p6522) target = $region60
      $region59: #{sample_attention_forward.1} parent=55 // pred_region
        %p6525 = scmp.lt.s32.totalorder %s19, 1
        %s6526 = scalar_select %p6525, %s19, 1
        %s6527 = smul.addr %s6526, 8
        %s6528 = smul.addr %s6527, 8
        %s6529 = scalar_lea.vmem %s7, %s6528
      $region60: #{sample_attention_forward.1} parent=55 // pred_fallthru
        _
    $region56: #{sample_attention_forward.1} parent=5 // pred_fallthru
      _
  $region6: #{sample_attention_forward.1} parent=0 // loop_footer
    %s17 = sadd.s32 1, %s13
  $region7: #{sample_attention_forward.1} parent=0 // loop_footer_branch
    %12 = sbr.rel target = $region3
  $region8: #{sample_attention_forward.1} parent=0 // loop_exit
    _

</llo_original>
